<compile_context>
chip_gen: v7x
topology: tpu7x:2x2x1
jax: 0.10.0
libtpu: 0.0.40
codegen_flags: <defaults>
</compile_context>

<pallas_src>
from functools import partial

import jax
import jax.numpy as jnp
from jax.experimental import pallas as pl
from jax.experimental.pallas import tpu as pltpu

EPS = 1e-5  # PyTorch BatchNorm2d default eps


def _make_dense_block_kernel(num_convs, H, W, c_in_list, growth):
    """Build the fused DenseBlock kernel (unrolled over the conv blocks)."""
    c0 = c_in_list[0]

    def kernel(*refs):
        x_ref = refs[0]
        param_refs = refs[1:1 + 4 * num_convs]
        o_ref = refs[1 + 4 * num_convs]
        act_ref, bn_ref, patch_ref = refs[2 + 4 * num_convs:]

        # Zero the spatially padded scratches once per grid step so the conv halo
        # is a true zero pad (replaces wrapper-side jnp.pad + mask multiply).
        act_ref[...] = jnp.zeros_like(act_ref)
        bn_ref[...] = jnp.zeros_like(bn_ref)
        # Place the block input into the interior of the running activation.
        act_ref[:, 1:H + 1, 1:W + 1, :c0] = x_ref[...]

        for i in range(num_convs):
            c_in = c_in_list[i]
            scale_ref, shift_ref, w_ref, b_ref = param_refs[4 * i:4 * i + 4]

            # TODO(synk): nn.Dropout(0.1) is identity in eval mode; training-mode
            # stochastic dropout (pltpu.prng_*) is not implemented here.

            # Folded BatchNorm (scale/shift) + ReLU on the raw concatenated input.
            xi = act_ref[:, 1:H + 1, 1:W + 1, :c_in]
            a = jnp.maximum(xi * scale_ref[...] + shift_ref[...], 0.0)
            bn_ref[:, 1:H + 1, 1:W + 1, :c_in] = a   # interior only; halo stays 0

            # im2col-lite: pack the 9 shifted taps along the channel (lane) axis,
            # then ONE MXU matmul with K = 9*C_in (instead of nine K = C_in dots).
            for dy in range(3):
                for dx in range(3):
                    k = dy * 3 + dx
                    patch_ref[:, :, :, k * c_in:(k + 1) * c_in] = (
                        bn_ref[:, dy:dy + H, dx:dx + W, :c_in])

            patch = patch_ref[:, :, :, :9 * c_in].astype(jnp.bfloat16)
            y = jnp.dot(patch, w_ref[...], preferred_element_type=jnp.float32)
            y = y + b_ref[...]

            # Dense connectivity: write Y into the next channel slice in place.
            act_ref[:, 1:H + 1, 1:W + 1, c_in:c_in + growth] = y

        # Single lane-contiguous write of the fully concatenated activation.
        o_ref[...] = act_ref[:, 1:H + 1, 1:W + 1, :]

    return kernel


def dense_block_forward(x_nchw, params_list):
    """DenseBlock.forward fused into one pallas_call (NCHW in / NCHW out)."""
    x = jnp.transpose(x_nchw, (0, 2, 3, 1)).astype(jnp.float32)  # NCHW -> NHWC
    N, H, W, c0 = x.shape
    num_convs = len(params_list)
    growth = params_list[0]["w"].shape[-1]
    c_in_list = [c0 + i * growth for i in range(num_convs)]
    c_in_max = c_in_list[-1]
    c_total = c0 + num_convs * growth

    flat_inputs = [x]
    in_specs = [pl.BlockSpec((1, H, W, c0), lambda n: (n, 0, 0, 0))]
    for i, p in enumerate(params_list):
        c_in = c_in_list[i]
        # Fold BN into per-channel scale/shift (done once on host/XLA side).
        scale = p["gamma"] * jax.lax.rsqrt(p["var"] + EPS)
        shift = p["beta"] - p["mean"] * scale
        w = p["w"].reshape(9 * c_in, growth).astype(jnp.bfloat16)  # (dy,dx,ci)->K
        flat_inputs += [
            scale.reshape(1, 1, 1, c_in).astype(jnp.float32),
            shift.reshape(1, 1, 1, c_in).astype(jnp.float32),
            w,
            p["b"].reshape(1, 1, 1, growth).astype(jnp.float32),
        ]
        in_specs += [
            pl.BlockSpec((1, 1, 1, c_in), lambda n: (0, 0, 0, 0)),
            pl.BlockSpec((1, 1, 1, c_in), lambda n: (0, 0, 0, 0)),
            pl.BlockSpec((9 * c_in, growth), lambda n: (0, 0)),
            pl.BlockSpec((1, 1, 1, growth), lambda n: (0, 0, 0, 0)),
        ]

    kernel = _make_dense_block_kernel(num_convs, H, W, c_in_list, growth)

    out = pl.pallas_call(
        kernel,
        out_shape=jax.ShapeDtypeStruct((N, H, W, c_total), jnp.float32),
        grid=(N,),
        in_specs=in_specs,
        out_specs=pl.BlockSpec((1, H, W, c_total), lambda n: (n, 0, 0, 0)),
        scratch_shapes=[
            # Running concatenated activation, spatially zero-padded, f32.
            pltpu.VMEM((1, H + 2, W + 2, c_total), jnp.float32),
            # Post-BN/ReLU activation, spatially zero-padded (conv halo), f32.
            pltpu.VMEM((1, H + 2, W + 2, c_in_max), jnp.float32),
            # im2col patch buffer: 9 taps packed along channels.
            pltpu.VMEM((1, H, W, 9 * c_in_max), jnp.float32),
        ],
        compiler_params=pltpu.CompilerParams(
            dimension_semantics=("parallel",),
            vmem_limit_bytes=32 * 1024 * 1024,
        ),
    )(*flat_inputs)

    return jnp.transpose(out, (0, 3, 1, 2))  # NHWC -> NCHW


def init_dense_block_params(key, num_convs, input_channels, num_channels):
    """Deterministic init matching the shapes implied by DenseBlock.__init__."""
    params = []
    for i in range(num_convs):
        c_in = num_channels * i + input_channels
        key, kw, kb = jax.random.split(key, 3)
        fan_in = c_in * 3 * 3
        bound = 1.0 / (fan_in ** 0.5)
        w = jax.random.uniform(kw, (3, 3, c_in, num_channels), jnp.float32,
                               -bound, bound)          # HWIO
        b = jax.random.uniform(kb, (num_channels,), jnp.float32, -bound, bound)
        params.append(dict(
            gamma=jnp.ones((c_in,), jnp.float32),
            beta=jnp.zeros((c_in,), jnp.float32),
            mean=jnp.zeros((c_in,), jnp.float32),   # running_mean
            var=jnp.ones((c_in,), jnp.float32),     # running_var
            w=w, b=b))
    return params


def _reference_forward(x_nchw, params_list):
    """Pure-JAX reference (f32 lax.conv) for the correctness check."""
    x = x_nchw
    for p in params_list:
        inv = jax.lax.rsqrt(p["var"] + EPS)
        a = (x - p["mean"][None, :, None, None]) * (inv * p["gamma"])[None, :, None, None]
        a = a + p["beta"][None, :, None, None]
        a = jnp.maximum(a, 0.0)
        w_oihw = jnp.transpose(p["w"], (3, 2, 0, 1))  # HWIO -> OIHW
        y = jax.lax.conv_general_dilated(
            a, w_oihw, window_strides=(1, 1), padding="SAME",
            dimension_numbers=("NCHW", "OIHW", "NCHW"))
        y = y + p["b"][None, :, None, None]
        x = jnp.concatenate([x, y], axis=1)
    return x


if __name__ == "__main__":
    num_convs, input_channels, num_channels = 2, 4, 4
    N, H, W = 2, 16, 16

    key = jax.random.PRNGKey(0)
    key, kx = jax.random.split(key)
    x = jax.random.normal(kx, (N, input_channels, H, W), jnp.float32)  # NCHW
    params = init_dense_block_params(key, num_convs, input_channels, num_channels)

    out = dense_block_forward(x, params)
    out = jax.block_until_ready(out)

    expected_channels = input_channels + num_convs * num_channels
    assert out.shape == (N, expected_channels, H, W), out.shape

    ref = _reference_forward(x, params)
    assert jnp.allclose(out, ref, rtol=2e-2, atol=2e-2), \
        float(jnp.max(jnp.abs(out - ref)))

    print("KERNEL_OK")
</pallas_src>

<mosaic_0001>
module attributes {stable_mosaic.version = 11 : i64} {
  func.func @kernel(%arg0: i32, %arg1: memref<1x16x16x4xf32, #tpu.memory_space<vmem>>, %arg2: memref<1x1x1x4xf32, #tpu.memory_space<vmem>>, %arg3: memref<1x1x1x4xf32, #tpu.memory_space<vmem>>, %arg4: memref<36x4xbf16, #tpu.memory_space<vmem>>, %arg5: memref<1x1x1x4xf32, #tpu.memory_space<vmem>>, %arg6: memref<1x1x1x8xf32, #tpu.memory_space<vmem>>, %arg7: memref<1x1x1x8xf32, #tpu.memory_space<vmem>>, %arg8: memref<72x4xbf16, #tpu.memory_space<vmem>>, %arg9: memref<1x1x1x4xf32, #tpu.memory_space<vmem>>, %arg10: memref<1x16x16x12xf32, #tpu.memory_space<vmem>>, %arg11: memref<1x18x18x12xf32, #tpu.memory_space<vmem>>, %arg12: memref<1x18x18x8xf32, #tpu.memory_space<vmem>>, %arg13: memref<1x16x16x72xf32, #tpu.memory_space<vmem>>) attributes {dimension_semantics = [#tpu.dimension_semantics<parallel>], iteration_bounds = array<i64: 2>, scalar_prefetch = 0 : i64, scratch_operands = 3 : i64, tpu.core_type = #tpu.core_type<tc>, window_params = [{transform_indices = @transform_0, window_bounds = array<i64: 1, 16, 16, 4>}, {pipeline_mode = #tpu.pipeline_mode<synchronous>, transform_indices = @transform_1, window_bounds = array<i64: 1, 1, 1, 4>}, {pipeline_mode = #tpu.pipeline_mode<synchronous>, transform_indices = @transform_2, window_bounds = array<i64: 1, 1, 1, 4>}, {pipeline_mode = #tpu.pipeline_mode<synchronous>, transform_indices = @transform_3, window_bounds = array<i64: 36, 4>}, {pipeline_mode = #tpu.pipeline_mode<synchronous>, transform_indices = @transform_4, window_bounds = array<i64: 1, 1, 1, 4>}, {pipeline_mode = #tpu.pipeline_mode<synchronous>, transform_indices = @transform_5, window_bounds = array<i64: 1, 1, 1, 8>}, {pipeline_mode = #tpu.pipeline_mode<synchronous>, transform_indices = @transform_6, window_bounds = array<i64: 1, 1, 1, 8>}, {pipeline_mode = #tpu.pipeline_mode<synchronous>, transform_indices = @transform_7, window_bounds = array<i64: 72, 4>}, {pipeline_mode = #tpu.pipeline_mode<synchronous>, transform_indices = @transform_8, window_bounds = array<i64: 1, 1, 1, 4>}, {transform_indices = @transform_9, window_bounds = array<i64: 1, 16, 16, 12>}]} {
    %cst = arith.constant 0.000000e+00 : f32
    %0 = vector.broadcast %cst : f32 to vector<1x18x18x12xf32>
    %c0 = arith.constant 0 : index
    %c0_0 = arith.constant 0 : index
    %c0_1 = arith.constant 0 : index
    %c0_2 = arith.constant 0 : index
    %1 = vector.load %arg11[%c0, %c0_0, %c0_1, %c0_2] : memref<1x18x18x12xf32, #tpu.memory_space<vmem>>, vector<1x18x18x12xf32>
    tpu.vector_store %arg11[%c0, %c0_0, %c0_1, %c0_2], %0 {strides = array<i32>} : memref<1x18x18x12xf32, #tpu.memory_space<vmem>>, vector<1x18x18x12xf32>,
    %cst_3 = arith.constant 0.000000e+00 : f32
    %2 = vector.broadcast %cst_3 : f32 to vector<1x18x18x8xf32>
    %c0_4 = arith.constant 0 : index
    %c0_5 = arith.constant 0 : index
    %c0_6 = arith.constant 0 : index
    %c0_7 = arith.constant 0 : index
    %3 = vector.load %arg12[%c0_4, %c0_5, %c0_6, %c0_7] : memref<1x18x18x8xf32, #tpu.memory_space<vmem>>, vector<1x18x18x8xf32>
    tpu.vector_store %arg12[%c0_4, %c0_5, %c0_6, %c0_7], %2 {strides = array<i32>} : memref<1x18x18x8xf32, #tpu.memory_space<vmem>>, vector<1x18x18x8xf32>,
    %c0_8 = arith.constant 0 : index
    %c0_9 = arith.constant 0 : index
    %c0_10 = arith.constant 0 : index
    %c0_11 = arith.constant 0 : index
    %4 = vector.load %arg1[%c0_8, %c0_9, %c0_10, %c0_11] : memref<1x16x16x4xf32, #tpu.memory_space<vmem>>, vector<1x16x16x4xf32>
    %c0_12 = arith.constant 0 : index
    %c1 = arith.constant 1 : index
    %c1_13 = arith.constant 1 : index
    %c0_14 = arith.constant 0 : index
    %5 = vector.load %arg11[%c0_12, %c1, %c1_13, %c0_14] : memref<1x18x18x12xf32, #tpu.memory_space<vmem>>, vector<1x16x16x4xf32>
    tpu.vector_store %arg11[%c0_12, %c1, %c1_13, %c0_14], %4 {strides = array<i32>} : memref<1x18x18x12xf32, #tpu.memory_space<vmem>>, vector<1x16x16x4xf32>,
    %c0_15 = arith.constant 0 : index
    %c1_16 = arith.constant 1 : index
    %c1_17 = arith.constant 1 : index
    %c0_18 = arith.constant 0 : index
    %6 = vector.load %arg11[%c0_15, %c1_16, %c1_17, %c0_18] : memref<1x18x18x12xf32, #tpu.memory_space<vmem>>, vector<1x16x16x4xf32>
    %c0_19 = arith.constant 0 : index
    %c0_20 = arith.constant 0 : index
    %c0_21 = arith.constant 0 : index
    %c0_22 = arith.constant 0 : index
    %7 = vector.load %arg2[%c0_19, %c0_20, %c0_21, %c0_22] : memref<1x1x1x4xf32, #tpu.memory_space<vmem>>, vector<1x1x1x4xf32>
    %8 = vector.broadcast %7 : vector<1x1x1x4xf32> to vector<1x16x16x4xf32>
    %9 = arith.mulf %6, %8 : vector<1x16x16x4xf32>
    %c0_23 = arith.constant 0 : index
    %c0_24 = arith.constant 0 : index
    %c0_25 = arith.constant 0 : index
    %c0_26 = arith.constant 0 : index
    %10 = vector.load %arg3[%c0_23, %c0_24, %c0_25, %c0_26] : memref<1x1x1x4xf32, #tpu.memory_space<vmem>>, vector<1x1x1x4xf32>
    %11 = vector.broadcast %10 : vector<1x1x1x4xf32> to vector<1x16x16x4xf32>
    %12 = arith.addf %9, %11 : vector<1x16x16x4xf32>
    %cst_27 = arith.constant 0.000000e+00 : f32
    %13 = vector.broadcast %cst_27 : f32 to vector<1x16x16x4xf32>
    %14 = arith.maximumf %12, %13 : vector<1x16x16x4xf32>
    %c0_28 = arith.constant 0 : index
    %c1_29 = arith.constant 1 : index
    %c1_30 = arith.constant 1 : index
    %c0_31 = arith.constant 0 : index
    %15 = vector.load %arg12[%c0_28, %c1_29, %c1_30, %c0_31] : memref<1x18x18x8xf32, #tpu.memory_space<vmem>>, vector<1x16x16x4xf32>
    tpu.vector_store %arg12[%c0_28, %c1_29, %c1_30, %c0_31], %14 {strides = array<i32>} : memref<1x18x18x8xf32, #tpu.memory_space<vmem>>, vector<1x16x16x4xf32>,
    %c0_32 = arith.constant 0 : index
    %c0_33 = arith.constant 0 : index
    %c0_34 = arith.constant 0 : index
    %c0_35 = arith.constant 0 : index
    %16 = vector.load %arg12[%c0_32, %c0_33, %c0_34, %c0_35] : memref<1x18x18x8xf32, #tpu.memory_space<vmem>>, vector<1x16x16x4xf32>
    %c0_36 = arith.constant 0 : index
    %c0_37 = arith.constant 0 : index
    %c0_38 = arith.constant 0 : index
    %c0_39 = arith.constant 0 : index
    %17 = vector.load %arg13[%c0_36, %c0_37, %c0_38, %c0_39] : memref<1x16x16x72xf32, #tpu.memory_space<vmem>>, vector<1x16x16x4xf32>
    tpu.vector_store %arg13[%c0_36, %c0_37, %c0_38, %c0_39], %16 {strides = array<i32>} : memref<1x16x16x72xf32, #tpu.memory_space<vmem>>, vector<1x16x16x4xf32>,
    %c0_40 = arith.constant 0 : index
    %c0_41 = arith.constant 0 : index
    %c1_42 = arith.constant 1 : index
    %c0_43 = arith.constant 0 : index
    %18 = vector.load %arg12[%c0_40, %c0_41, %c1_42, %c0_43] : memref<1x18x18x8xf32, #tpu.memory_space<vmem>>, vector<1x16x16x4xf32>
    %c0_44 = arith.constant 0 : index
    %c0_45 = arith.constant 0 : index
    %c0_46 = arith.constant 0 : index
    %c4 = arith.constant 4 : index
    %19 = vector.load %arg13[%c0_44, %c0_45, %c0_46, %c4] : memref<1x16x16x72xf32, #tpu.memory_space<vmem>>, vector<1x16x16x4xf32>
    tpu.vector_store %arg13[%c0_44, %c0_45, %c0_46, %c4], %18 {strides = array<i32>} : memref<1x16x16x72xf32, #tpu.memory_space<vmem>>, vector<1x16x16x4xf32>,
    %c0_47 = arith.constant 0 : index
    %c0_48 = arith.constant 0 : index
    %c2 = arith.constant 2 : index
    %c0_49 = arith.constant 0 : index
    %20 = vector.load %arg12[%c0_47, %c0_48, %c2, %c0_49] : memref<1x18x18x8xf32, #tpu.memory_space<vmem>>, vector<1x16x16x4xf32>
    %c0_50 = arith.constant 0 : index
    %c0_51 = arith.constant 0 : index
    %c0_52 = arith.constant 0 : index
    %c8 = arith.constant 8 : index
    %21 = vector.load %arg13[%c0_50, %c0_51, %c0_52, %c8] : memref<1x16x16x72xf32, #tpu.memory_space<vmem>>, vector<1x16x16x4xf32>
    tpu.vector_store %arg13[%c0_50, %c0_51, %c0_52, %c8], %20 {strides = array<i32>} : memref<1x16x16x72xf32, #tpu.memory_space<vmem>>, vector<1x16x16x4xf32>,
    %c0_53 = arith.constant 0 : index
    %c1_54 = arith.constant 1 : index
    %c0_55 = arith.constant 0 : index
    %c0_56 = arith.constant 0 : index
    %22 = vector.load %arg12[%c0_53, %c1_54, %c0_55, %c0_56] : memref<1x18x18x8xf32, #tpu.memory_space<vmem>>, vector<1x16x16x4xf32>
    %c0_57 = arith.constant 0 : index
    %c0_58 = arith.constant 0 : index
    %c0_59 = arith.constant 0 : index
    %c12 = arith.constant 12 : index
    %23 = vector.load %arg13[%c0_57, %c0_58, %c0_59, %c12] : memref<1x16x16x72xf32, #tpu.memory_space<vmem>>, vector<1x16x16x4xf32>
    tpu.vector_store %arg13[%c0_57, %c0_58, %c0_59, %c12], %22 {strides = array<i32>} : memref<1x16x16x72xf32, #tpu.memory_space<vmem>>, vector<1x16x16x4xf32>,
    %c0_60 = arith.constant 0 : index
    %c1_61 = arith.constant 1 : index
    %c1_62 = arith.constant 1 : index
    %c0_63 = arith.constant 0 : index
    %24 = vector.load %arg12[%c0_60, %c1_61, %c1_62, %c0_63] : memref<1x18x18x8xf32, #tpu.memory_space<vmem>>, vector<1x16x16x4xf32>
    %c0_64 = arith.constant 0 : index
    %c0_65 = arith.constant 0 : index
    %c0_66 = arith.constant 0 : index
    %c16 = arith.constant 16 : index
    %25 = vector.load %arg13[%c0_64, %c0_65, %c0_66, %c16] : memref<1x16x16x72xf32, #tpu.memory_space<vmem>>, vector<1x16x16x4xf32>
    tpu.vector_store %arg13[%c0_64, %c0_65, %c0_66, %c16], %24 {strides = array<i32>} : memref<1x16x16x72xf32, #tpu.memory_space<vmem>>, vector<1x16x16x4xf32>,
    %c0_67 = arith.constant 0 : index
    %c1_68 = arith.constant 1 : index
    %c2_69 = arith.constant 2 : index
    %c0_70 = arith.constant 0 : index
    %26 = vector.load %arg12[%c0_67, %c1_68, %c2_69, %c0_70] : memref<1x18x18x8xf32, #tpu.memory_space<vmem>>, vector<1x16x16x4xf32>
    %c0_71 = arith.constant 0 : index
    %c0_72 = arith.constant 0 : index
    %c0_73 = arith.constant 0 : index
    %c20 = arith.constant 20 : index
    %27 = vector.load %arg13[%c0_71, %c0_72, %c0_73, %c20] : memref<1x16x16x72xf32, #tpu.memory_space<vmem>>, vector<1x16x16x4xf32>
    tpu.vector_store %arg13[%c0_71, %c0_72, %c0_73, %c20], %26 {strides = array<i32>} : memref<1x16x16x72xf32, #tpu.memory_space<vmem>>, vector<1x16x16x4xf32>,
    %c0_74 = arith.constant 0 : index
    %c2_75 = arith.constant 2 : index
    %c0_76 = arith.constant 0 : index
    %c0_77 = arith.constant 0 : index
    %28 = vector.load %arg12[%c0_74, %c2_75, %c0_76, %c0_77] : memref<1x18x18x8xf32, #tpu.memory_space<vmem>>, vector<1x16x16x4xf32>
    %c0_78 = arith.constant 0 : index
    %c0_79 = arith.constant 0 : index
    %c0_80 = arith.constant 0 : index
    %c24 = arith.constant 24 : index
    %29 = vector.load %arg13[%c0_78, %c0_79, %c0_80, %c24] : memref<1x16x16x72xf32, #tpu.memory_space<vmem>>, vector<1x16x16x4xf32>
    tpu.vector_store %arg13[%c0_78, %c0_79, %c0_80, %c24], %28 {strides = array<i32>} : memref<1x16x16x72xf32, #tpu.memory_space<vmem>>, vector<1x16x16x4xf32>,
    %c0_81 = arith.constant 0 : index
    %c2_82 = arith.constant 2 : index
    %c1_83 = arith.constant 1 : index
    %c0_84 = arith.constant 0 : index
    %30 = vector.load %arg12[%c0_81, %c2_82, %c1_83, %c0_84] : memref<1x18x18x8xf32, #tpu.memory_space<vmem>>, vector<1x16x16x4xf32>
    %c0_85 = arith.constant 0 : index
    %c0_86 = arith.constant 0 : index
    %c0_87 = arith.constant 0 : index
    %c28 = arith.constant 28 : index
    %31 = vector.load %arg13[%c0_85, %c0_86, %c0_87, %c28] : memref<1x16x16x72xf32, #tpu.memory_space<vmem>>, vector<1x16x16x4xf32>
    tpu.vector_store %arg13[%c0_85, %c0_86, %c0_87, %c28], %30 {strides = array<i32>} : memref<1x16x16x72xf32, #tpu.memory_space<vmem>>, vector<1x16x16x4xf32>,
    %c0_88 = arith.constant 0 : index
    %c2_89 = arith.constant 2 : index
    %c2_90 = arith.constant 2 : index
    %c0_91 = arith.constant 0 : index
    %32 = vector.load %arg12[%c0_88, %c2_89, %c2_90, %c0_91] : memref<1x18x18x8xf32, #tpu.memory_space<vmem>>, vector<1x16x16x4xf32>
    %c0_92 = arith.constant 0 : index
    %c0_93 = arith.constant 0 : index
    %c0_94 = arith.constant 0 : index
    %c32 = arith.constant 32 : index
    %33 = vector.load %arg13[%c0_92, %c0_93, %c0_94, %c32] : memref<1x16x16x72xf32, #tpu.memory_space<vmem>>, vector<1x16x16x4xf32>
    tpu.vector_store %arg13[%c0_92, %c0_93, %c0_94, %c32], %32 {strides = array<i32>} : memref<1x16x16x72xf32, #tpu.memory_space<vmem>>, vector<1x16x16x4xf32>,
    %c0_95 = arith.constant 0 : index
    %c0_96 = arith.constant 0 : index
    %c0_97 = arith.constant 0 : index
    %c0_98 = arith.constant 0 : index
    %34 = vector.load %arg13[%c0_95, %c0_96, %c0_97, %c0_98] : memref<1x16x16x72xf32, #tpu.memory_space<vmem>>, vector<1x16x16x36xf32>
    %35 = arith.truncf %34 : vector<1x16x16x36xf32> to vector<1x16x16x36xbf16>
    %c0_99 = arith.constant 0 : index
    %c0_100 = arith.constant 0 : index
    %36 = vector.load %arg4[%c0_99, %c0_100] : memref<36x4xbf16, #tpu.memory_space<vmem>>, vector<36x4xbf16>
    %cst_101 = arith.constant dense<0.000000e+00> : vector<1x16x16x4xf32>
    %37 = tpu.matmul %35, %36, %cst_101 {dimension_numbers = #tpu.dot_dimension_numbers<[3], [0], [0, 1, 2], [1], [0, 0, 0, 1, 0, 2, 1, 1], [], []>} : vector<1x16x16x36xbf16>, vector<36x4xbf16>, vector<1x16x16x4xf32> -> vector<1x16x16x4xf32>
    %c0_102 = arith.constant 0 : index
    %c0_103 = arith.constant 0 : index
    %c0_104 = arith.constant 0 : index
    %c0_105 = arith.constant 0 : index
    %38 = vector.load %arg5[%c0_102, %c0_103, %c0_104, %c0_105] : memref<1x1x1x4xf32, #tpu.memory_space<vmem>>, vector<1x1x1x4xf32>
    %39 = vector.broadcast %38 : vector<1x1x1x4xf32> to vector<1x16x16x4xf32>
    %40 = arith.addf %37, %39 : vector<1x16x16x4xf32>
    %c0_106 = arith.constant 0 : index
    %c1_107 = arith.constant 1 : index
    %c1_108 = arith.constant 1 : index
    %c4_109 = arith.constant 4 : index
    %41 = vector.load %arg11[%c0_106, %c1_107, %c1_108, %c4_109] : memref<1x18x18x12xf32, #tpu.memory_space<vmem>>, vector<1x16x16x4xf32>
    tpu.vector_store %arg11[%c0_106, %c1_107, %c1_108, %c4_109], %40 {strides = array<i32>} : memref<1x18x18x12xf32, #tpu.memory_space<vmem>>, vector<1x16x16x4xf32>,
    %c0_110 = arith.constant 0 : index
    %c1_111 = arith.constant 1 : index
    %c1_112 = arith.constant 1 : index
    %c0_113 = arith.constant 0 : index
    %42 = vector.load %arg11[%c0_110, %c1_111, %c1_112, %c0_113] : memref<1x18x18x12xf32, #tpu.memory_space<vmem>>, vector<1x16x16x8xf32>
    %c0_114 = arith.constant 0 : index
    %c0_115 = arith.constant 0 : index
    %c0_116 = arith.constant 0 : index
    %c0_117 = arith.constant 0 : index
    %43 = vector.load %arg6[%c0_114, %c0_115, %c0_116, %c0_117] : memref<1x1x1x8xf32, #tpu.memory_space<vmem>>, vector<1x1x1x8xf32>
    %44 = vector.broadcast %43 : vector<1x1x1x8xf32> to vector<1x16x16x8xf32>
    %45 = arith.mulf %42, %44 : vector<1x16x16x8xf32>
    %c0_118 = arith.constant 0 : index
    %c0_119 = arith.constant 0 : index
    %c0_120 = arith.constant 0 : index
    %c0_121 = arith.constant 0 : index
    %46 = vector.load %arg7[%c0_118, %c0_119, %c0_120, %c0_121] : memref<1x1x1x8xf32, #tpu.memory_space<vmem>>, vector<1x1x1x8xf32>
    %47 = vector.broadcast %46 : vector<1x1x1x8xf32> to vector<1x16x16x8xf32>
    %48 = arith.addf %45, %47 : vector<1x16x16x8xf32>
    %cst_122 = arith.constant 0.000000e+00 : f32
    %49 = vector.broadcast %cst_122 : f32 to vector<1x16x16x8xf32>
    %50 = arith.maximumf %48, %49 : vector<1x16x16x8xf32>
    %c0_123 = arith.constant 0 : index
    %c1_124 = arith.constant 1 : index
    %c1_125 = arith.constant 1 : index
    %c0_126 = arith.constant 0 : index
    %51 = vector.load %arg12[%c0_123, %c1_124, %c1_125, %c0_126] : memref<1x18x18x8xf32, #tpu.memory_space<vmem>>, vector<1x16x16x8xf32>
    tpu.vector_store %arg12[%c0_123, %c1_124, %c1_125, %c0_126], %50 {strides = array<i32>} : memref<1x18x18x8xf32, #tpu.memory_space<vmem>>, vector<1x16x16x8xf32>,
    %c0_127 = arith.constant 0 : index
    %c0_128 = arith.constant 0 : index
    %c0_129 = arith.constant 0 : index
    %c0_130 = arith.constant 0 : index
    %52 = vector.load %arg12[%c0_127, %c0_128, %c0_129, %c0_130] : memref<1x18x18x8xf32, #tpu.memory_space<vmem>>, vector<1x16x16x8xf32>
    %c0_131 = arith.constant 0 : index
    %c0_132 = arith.constant 0 : index
    %c0_133 = arith.constant 0 : index
    %c0_134 = arith.constant 0 : index
    %53 = vector.load %arg13[%c0_131, %c0_132, %c0_133, %c0_134] : memref<1x16x16x72xf32, #tpu.memory_space<vmem>>, vector<1x16x16x8xf32>
    tpu.vector_store %arg13[%c0_131, %c0_132, %c0_133, %c0_134], %52 {strides = array<i32>} : memref<1x16x16x72xf32, #tpu.memory_space<vmem>>, vector<1x16x16x8xf32>,
    %c0_135 = arith.constant 0 : index
    %c0_136 = arith.constant 0 : index
    %c1_137 = arith.constant 1 : index
    %c0_138 = arith.constant 0 : index
    %54 = vector.load %arg12[%c0_135, %c0_136, %c1_137, %c0_138] : memref<1x18x18x8xf32, #tpu.memory_space<vmem>>, vector<1x16x16x8xf32>
    %c0_139 = arith.constant 0 : index
    %c0_140 = arith.constant 0 : index
    %c0_141 = arith.constant 0 : index
    %c8_142 = arith.constant 8 : index
    %55 = vector.load %arg13[%c0_139, %c0_140, %c0_141, %c8_142] : memref<1x16x16x72xf32, #tpu.memory_space<vmem>>, vector<1x16x16x8xf32>
    tpu.vector_store %arg13[%c0_139, %c0_140, %c0_141, %c8_142], %54 {strides = array<i32>} : memref<1x16x16x72xf32, #tpu.memory_space<vmem>>, vector<1x16x16x8xf32>,
    %c0_143 = arith.constant 0 : index
    %c0_144 = arith.constant 0 : index
    %c2_145 = arith.constant 2 : index
    %c0_146 = arith.constant 0 : index
    %56 = vector.load %arg12[%c0_143, %c0_144, %c2_145, %c0_146] : memref<1x18x18x8xf32, #tpu.memory_space<vmem>>, vector<1x16x16x8xf32>
    %c0_147 = arith.constant 0 : index
    %c0_148 = arith.constant 0 : index
    %c0_149 = arith.constant 0 : index
    %c16_150 = arith.constant 16 : index
    %57 = vector.load %arg13[%c0_147, %c0_148, %c0_149, %c16_150] : memref<1x16x16x72xf32, #tpu.memory_space<vmem>>, vector<1x16x16x8xf32>
    tpu.vector_store %arg13[%c0_147, %c0_148, %c0_149, %c16_150], %56 {strides = array<i32>} : memref<1x16x16x72xf32, #tpu.memory_space<vmem>>, vector<1x16x16x8xf32>,
    %c0_151 = arith.constant 0 : index
    %c1_152 = arith.constant 1 : index
    %c0_153 = arith.constant 0 : index
    %c0_154 = arith.constant 0 : index
    %58 = vector.load %arg12[%c0_151, %c1_152, %c0_153, %c0_154] : memref<1x18x18x8xf32, #tpu.memory_space<vmem>>, vector<1x16x16x8xf32>
    %c0_155 = arith.constant 0 : index
    %c0_156 = arith.constant 0 : index
    %c0_157 = arith.constant 0 : index
    %c24_158 = arith.constant 24 : index
    %59 = vector.load %arg13[%c0_155, %c0_156, %c0_157, %c24_158] : memref<1x16x16x72xf32, #tpu.memory_space<vmem>>, vector<1x16x16x8xf32>
    tpu.vector_store %arg13[%c0_155, %c0_156, %c0_157, %c24_158], %58 {strides = array<i32>} : memref<1x16x16x72xf32, #tpu.memory_space<vmem>>, vector<1x16x16x8xf32>,
    %c0_159 = arith.constant 0 : index
    %c1_160 = arith.constant 1 : index
    %c1_161 = arith.constant 1 : index
    %c0_162 = arith.constant 0 : index
    %60 = vector.load %arg12[%c0_159, %c1_160, %c1_161, %c0_162] : memref<1x18x18x8xf32, #tpu.memory_space<vmem>>, vector<1x16x16x8xf32>
    %c0_163 = arith.constant 0 : index
    %c0_164 = arith.constant 0 : index
    %c0_165 = arith.constant 0 : index
    %c32_166 = arith.constant 32 : index
    %61 = vector.load %arg13[%c0_163, %c0_164, %c0_165, %c32_166] : memref<1x16x16x72xf32, #tpu.memory_space<vmem>>, vector<1x16x16x8xf32>
    tpu.vector_store %arg13[%c0_163, %c0_164, %c0_165, %c32_166], %60 {strides = array<i32>} : memref<1x16x16x72xf32, #tpu.memory_space<vmem>>, vector<1x16x16x8xf32>,
    %c0_167 = arith.constant 0 : index
    %c1_168 = arith.constant 1 : index
    %c2_169 = arith.constant 2 : index
    %c0_170 = arith.constant 0 : index
    %62 = vector.load %arg12[%c0_167, %c1_168, %c2_169, %c0_170] : memref<1x18x18x8xf32, #tpu.memory_space<vmem>>, vector<1x16x16x8xf32>
    %c0_171 = arith.constant 0 : index
    %c0_172 = arith.constant 0 : index
    %c0_173 = arith.constant 0 : index
    %c40 = arith.constant 40 : index
    %63 = vector.load %arg13[%c0_171, %c0_172, %c0_173, %c40] : memref<1x16x16x72xf32, #tpu.memory_space<vmem>>, vector<1x16x16x8xf32>
    tpu.vector_store %arg13[%c0_171, %c0_172, %c0_173, %c40], %62 {strides = array<i32>} : memref<1x16x16x72xf32, #tpu.memory_space<vmem>>, vector<1x16x16x8xf32>,
    %c0_174 = arith.constant 0 : index
    %c2_175 = arith.constant 2 : index
    %c0_176 = arith.constant 0 : index
    %c0_177 = arith.constant 0 : index
    %64 = vector.load %arg12[%c0_174, %c2_175, %c0_176, %c0_177] : memref<1x18x18x8xf32, #tpu.memory_space<vmem>>, vector<1x16x16x8xf32>
    %c0_178 = arith.constant 0 : index
    %c0_179 = arith.constant 0 : index
    %c0_180 = arith.constant 0 : index
    %c48 = arith.constant 48 : index
    %65 = vector.load %arg13[%c0_178, %c0_179, %c0_180, %c48] : memref<1x16x16x72xf32, #tpu.memory_space<vmem>>, vector<1x16x16x8xf32>
    tpu.vector_store %arg13[%c0_178, %c0_179, %c0_180, %c48], %64 {strides = array<i32>} : memref<1x16x16x72xf32, #tpu.memory_space<vmem>>, vector<1x16x16x8xf32>,
    %c0_181 = arith.constant 0 : index
    %c2_182 = arith.constant 2 : index
    %c1_183 = arith.constant 1 : index
    %c0_184 = arith.constant 0 : index
    %66 = vector.load %arg12[%c0_181, %c2_182, %c1_183, %c0_184] : memref<1x18x18x8xf32, #tpu.memory_space<vmem>>, vector<1x16x16x8xf32>
    %c0_185 = arith.constant 0 : index
    %c0_186 = arith.constant 0 : index
    %c0_187 = arith.constant 0 : index
    %c56 = arith.constant 56 : index
    %67 = vector.load %arg13[%c0_185, %c0_186, %c0_187, %c56] : memref<1x16x16x72xf32, #tpu.memory_space<vmem>>, vector<1x16x16x8xf32>
    tpu.vector_store %arg13[%c0_185, %c0_186, %c0_187, %c56], %66 {strides = array<i32>} : memref<1x16x16x72xf32, #tpu.memory_space<vmem>>, vector<1x16x16x8xf32>,
    %c0_188 = arith.constant 0 : index
    %c2_189 = arith.constant 2 : index
    %c2_190 = arith.constant 2 : index
    %c0_191 = arith.constant 0 : index
    %68 = vector.load %arg12[%c0_188, %c2_189, %c2_190, %c0_191] : memref<1x18x18x8xf32, #tpu.memory_space<vmem>>, vector<1x16x16x8xf32>
    %c0_192 = arith.constant 0 : index
    %c0_193 = arith.constant 0 : index
    %c0_194 = arith.constant 0 : index
    %c64 = arith.constant 64 : index
    %69 = vector.load %arg13[%c0_192, %c0_193, %c0_194, %c64] : memref<1x16x16x72xf32, #tpu.memory_space<vmem>>, vector<1x16x16x8xf32>
    tpu.vector_store %arg13[%c0_192, %c0_193, %c0_194, %c64], %68 {strides = array<i32>} : memref<1x16x16x72xf32, #tpu.memory_space<vmem>>, vector<1x16x16x8xf32>,
    %c0_195 = arith.constant 0 : index
    %c0_196 = arith.constant 0 : index
    %c0_197 = arith.constant 0 : index
    %c0_198 = arith.constant 0 : index
    %70 = vector.load %arg13[%c0_195, %c0_196, %c0_197, %c0_198] : memref<1x16x16x72xf32, #tpu.memory_space<vmem>>, vector<1x16x16x72xf32>
    %71 = arith.truncf %70 : vector<1x16x16x72xf32> to vector<1x16x16x72xbf16>
    %c0_199 = arith.constant 0 : index
    %c0_200 = arith.constant 0 : index
    %72 = vector.load %arg8[%c0_199, %c0_200] : memref<72x4xbf16, #tpu.memory_space<vmem>>, vector<72x4xbf16>
    %cst_201 = arith.constant dense<0.000000e+00> : vector<1x16x16x4xf32>
    %73 = tpu.matmul %71, %72, %cst_201 {dimension_numbers = #tpu.dot_dimension_numbers<[3], [0], [0, 1, 2], [1], [0, 0, 0, 1, 0, 2, 1, 1], [], []>} : vector<1x16x16x72xbf16>, vector<72x4xbf16>, vector<1x16x16x4xf32> -> vector<1x16x16x4xf32>
    %c0_202 = arith.constant 0 : index
    %c0_203 = arith.constant 0 : index
    %c0_204 = arith.constant 0 : index
    %c0_205 = arith.constant 0 : index
    %74 = vector.load %arg9[%c0_202, %c0_203, %c0_204, %c0_205] : memref<1x1x1x4xf32, #tpu.memory_space<vmem>>, vector<1x1x1x4xf32>
    %75 = vector.broadcast %74 : vector<1x1x1x4xf32> to vector<1x16x16x4xf32>
    %76 = arith.addf %73, %75 : vector<1x16x16x4xf32>
    %c0_206 = arith.constant 0 : index
    %c1_207 = arith.constant 1 : index
    %c1_208 = arith.constant 1 : index
    %c8_209 = arith.constant 8 : index
    %77 = vector.load %arg11[%c0_206, %c1_207, %c1_208, %c8_209] : memref<1x18x18x12xf32, #tpu.memory_space<vmem>>, vector<1x16x16x4xf32>
    tpu.vector_store %arg11[%c0_206, %c1_207, %c1_208, %c8_209], %76 {strides = array<i32>} : memref<1x18x18x12xf32, #tpu.memory_space<vmem>>, vector<1x16x16x4xf32>,
    %c0_210 = arith.constant 0 : index
    %c1_211 = arith.constant 1 : index
    %c1_212 = arith.constant 1 : index
    %c0_213 = arith.constant 0 : index
    %78 = vector.load %arg11[%c0_210, %c1_211, %c1_212, %c0_213] : memref<1x18x18x12xf32, #tpu.memory_space<vmem>>, vector<1x16x16x12xf32>
    %c0_214 = arith.constant 0 : index
    %c0_215 = arith.constant 0 : index
    %c0_216 = arith.constant 0 : index
    %c0_217 = arith.constant 0 : index
    %79 = vector.load %arg10[%c0_214, %c0_215, %c0_216, %c0_217] : memref<1x16x16x12xf32, #tpu.memory_space<vmem>>, vector<1x16x16x12xf32>
    tpu.vector_store %arg10[%c0_214, %c0_215, %c0_216, %c0_217], %78 {strides = array<i32>} : memref<1x16x16x12xf32, #tpu.memory_space<vmem>>, vector<1x16x16x12xf32>,
    return
  }
  func.func @transform_0(%arg0: i32) -> (i32, i32, i32, i32) {
    %c0_i32 = arith.constant 0 : i32
    %c0_i32_0 = arith.constant 0 : i32
    %c0_i32_1 = arith.constant 0 : i32
    %c0_i32_2 = arith.constant 0 : i32
    return %arg0, %c0_i32, %c0_i32_0, %c0_i32_1 : i32, i32, i32, i32
  }
  func.func @transform_1(%arg0: i32) -> (i32, i32, i32, i32) {
    %c0_i32 = arith.constant 0 : i32
    %c0_i32_0 = arith.constant 0 : i32
    %c0_i32_1 = arith.constant 0 : i32
    %c0_i32_2 = arith.constant 0 : i32
    %c0_i32_3 = arith.constant 0 : i32
    return %c0_i32, %c0_i32_0, %c0_i32_1, %c0_i32_2 : i32, i32, i32, i32
  }
  func.func @transform_2(%arg0: i32) -> (i32, i32, i32, i32) {
    %c0_i32 = arith.constant 0 : i32
    %c0_i32_0 = arith.constant 0 : i32
    %c0_i32_1 = arith.constant 0 : i32
    %c0_i32_2 = arith.constant 0 : i32
    %c0_i32_3 = arith.constant 0 : i32
    return %c0_i32, %c0_i32_0, %c0_i32_1, %c0_i32_2 : i32, i32, i32, i32
  }
  func.func @transform_3(%arg0: i32) -> (i32, i32) {
    %c0_i32 = arith.constant 0 : i32
    %c0_i32_0 = arith.constant 0 : i32
    %c0_i32_1 = arith.constant 0 : i32
    return %c0_i32, %c0_i32_0 : i32, i32
  }
  func.func @transform_4(%arg0: i32) -> (i32, i32, i32, i32) {
    %c0_i32 = arith.constant 0 : i32
    %c0_i32_0 = arith.constant 0 : i32
    %c0_i32_1 = arith.constant 0 : i32
    %c0_i32_2 = arith.constant 0 : i32
    %c0_i32_3 = arith.constant 0 : i32
    return %c0_i32, %c0_i32_0, %c0_i32_1, %c0_i32_2 : i32, i32, i32, i32
  }
  func.func @transform_5(%arg0: i32) -> (i32, i32, i32, i32) {
    %c0_i32 = arith.constant 0 : i32
    %c0_i32_0 = arith.constant 0 : i32
    %c0_i32_1 = arith.constant 0 : i32
    %c0_i32_2 = arith.constant 0 : i32
    %c0_i32_3 = arith.constant 0 : i32
    return %c0_i32, %c0_i32_0, %c0_i32_1, %c0_i32_2 : i32, i32, i32, i32
  }
  func.func @transform_6(%arg0: i32) -> (i32, i32, i32, i32) {
    %c0_i32 = arith.constant 0 : i32
    %c0_i32_0 = arith.constant 0 : i32
    %c0_i32_1 = arith.constant 0 : i32
    %c0_i32_2 = arith.constant 0 : i32
    %c0_i32_3 = arith.constant 0 : i32
    return %c0_i32, %c0_i32_0, %c0_i32_1, %c0_i32_2 : i32, i32, i32, i32
  }
  func.func @transform_7(%arg0: i32) -> (i32, i32) {
    %c0_i32 = arith.constant 0 : i32
    %c0_i32_0 = arith.constant 0 : i32
    %c0_i32_1 = arith.constant 0 : i32
    return %c0_i32, %c0_i32_0 : i32, i32
  }
  func.func @transform_8(%arg0: i32) -> (i32, i32, i32, i32) {
    %c0_i32 = arith.constant 0 : i32
    %c0_i32_0 = arith.constant 0 : i32
    %c0_i32_1 = arith.constant 0 : i32
    %c0_i32_2 = arith.constant 0 : i32
    %c0_i32_3 = arith.constant 0 : i32
    return %c0_i32, %c0_i32_0, %c0_i32_1, %c0_i32_2 : i32, i32, i32, i32
  }
  func.func @transform_9(%arg0: i32) -> (i32, i32, i32, i32) {
    %c0_i32 = arith.constant 0 : i32
    %c0_i32_0 = arith.constant 0 : i32
    %c0_i32_1 = arith.constant 0 : i32
    %c0_i32_2 = arith.constant 0 : i32
    return %arg0, %c0_i32, %c0_i32_0, %c0_i32_1 : i32, i32, i32, i32
  }
}

</mosaic_0001>

<llo_original>
// kernel: tpu_custom_call.1
$region0: #{tpu_custom_call.1}
  #allocation0 [shape = 'u32[]', space=smem, size = 0x4, offset = 0x4, fixed_abs, tag = 'smem constant byte address 0x4 - core index']
  #allocation1 [shape = 'u32[144,128]{1,0:T(1,128)}', space=vmem, size = 0x12000, scoped, tag = 'internal scratch']
  #allocation2 [shape = 'f32[1,18,18,12]{3,2,1,0:T(8,128)}', space=vmem, size = 0x36000, scoped, tag = 'scratch operand']
  #allocation3 [shape = 'f32[1,18,18,8]{3,2,1,0:T(8,128)}', space=vmem, size = 0x36000, scoped, tag = 'scratch operand']
  #allocation4 [shape = 'f32[1,16,16,72]{3,2,1,0:T(8,128)}', space=vmem, size = 0x20000, scoped, tag = 'scratch operand']
  %s0 = inlined_call_operand.vmem [shape: f32[2,16,16,4], index: 0, kind: input, shape index: {}]
  %s1 = inlined_call_operand.vmem [shape: f32[1,1,1,4], index: 1, kind: input, shape index: {}]
  %s2 = inlined_call_operand.vmem [shape: f32[1,1,1,4], index: 2, kind: input, shape index: {}]
  %s3 = inlined_call_operand.vmem [shape: bf16[36,4], index: 3, kind: input, shape index: {}]
  %s4 = inlined_call_operand.vmem [shape: f32[1,1,1,4], index: 4, kind: input, shape index: {}]
  %s5 = inlined_call_operand.vmem [shape: f32[1,1,1,8], index: 5, kind: input, shape index: {}]
  %s6 = inlined_call_operand.vmem [shape: f32[1,1,1,8], index: 6, kind: input, shape index: {}]
  %s7 = inlined_call_operand.vmem [shape: bf16[72,4], index: 7, kind: input, shape index: {}]
  %s8 = inlined_call_operand.vmem [shape: f32[1,1,1,4], index: 8, kind: input, shape index: {}]
  %s9 = inlined_call_operand.vmem [shape: f32[2,16,16,12], index: 9, kind: output, shape index: {}]
  %s10 = sld [smem:[#allocation0]]
  $region69: #{tpu_custom_call.1} parent=0
    _
  %s12 = ssub.s32 1, %s10
  %s13 = scalar_select 0, %s12, %s10
  loop: start=0, step=1, limit=4
  $region2: #{tpu_custom_call.1} parent=0 // loop_pre_header
    _
  $region3: #{tpu_custom_call.1} parent=0 // loop_header
    %s15 = sphi 0, %s19
    %p16 = scmp.ge.s32.totalorder %s15, 4
    %s25 = sphi 0, %s27
    %s28 = sphi 0, %s25
    %s29 = sphi 0, %s28
    %s45 = sphi 0, %s29
    %s49 = sphi 0, %s49
    %s51 = sphi 0, %s49
    %s52 = sphi 0, %s51
    %s66 = sphi 0, %s52
    %s70 = sphi 0, %s70
    %s72 = sphi 0, %s70
    %s73 = sphi 0, %s72
    %s87 = sphi 0, %s73
    %s91 = sphi 0, %s91
    %s93 = sphi 0, %s91
    %s94 = sphi 0, %s93
    %s108 = sphi 0, %s94
    %s112 = sphi 0, %s112
    %s114 = sphi 0, %s112
    %s115 = sphi 0, %s114
    %s129 = sphi 0, %s115
    %s133 = sphi 0, %s133
    %s135 = sphi 0, %s133
    %s136 = sphi 0, %s135
    %s150 = sphi 0, %s136
    %s154 = sphi 0, %s154
    %s156 = sphi 0, %s154
    %s157 = sphi 0, %s156
    %s171 = sphi 0, %s157
    %s175 = sphi 0, %s175
    %s177 = sphi 0, %s175
    %s178 = sphi 0, %s177
    %s192 = sphi 0, %s178
    %s196 = sphi 0, %s196
    %s198 = sphi 0, %s196
    %s199 = sphi 0, %s198
    %s213 = sphi 0, %s199
    %s219 = sphi 0, %s221
    %s222 = sphi 0, %s219
    %s223 = sphi 0, %s222
    %s239 = sphi 0, %s223
  $region4: #{tpu_custom_call.1} parent=0 // loop_header_branch
    %18 = sbr.rel (%p16) target = $region8
  $region5: #{tpu_custom_call.1} parent=0 // loop_body
    %s20 = ssub.s32 %s15, 1
    %s21 = ssub.s32 %s15, 2
    %s22 = sadd.s32 %s15, 1
    %s23 = ssub.s32 %s15, %s22
    %p24 = scmp.eq.s32.totalorder %s23, 0
    %s26 = sadd.s32 %s25, 1
    %s27 = scalar_select %p24, %s25, %s26
    %p30 = pneg %p24
    %p31 = scmp.eq.s32.totalorder %s15, 1
    %p32 = por %p30, %p31
    %p33 = scmp.ne.s32.totalorder %s25, %s28
    %p34 = scmp.eq.s32.totalorder %s15, 0
    %p35 = por %p33, %p34
    %p36 = scmp.ne.s32.totalorder %s25, %s28
    %p37 = scmp.eq.s32.totalorder %s20, 1
    %p38 = por %p36, %p37
    %p39 = scmp.ne.s32.totalorder %s28, %s29
    %p40 = scmp.eq.s32.totalorder %s20, 0
    %p41 = por %p39, %p40
    %p42 = scmp.ne.s32.totalorder %s28, %s29
    %p43 = scmp.eq.s32.totalorder %s21, 1
    %p44 = por %p42, %p43
    %p46 = scmp.ne.s32.totalorder %s29, %s45
    %p47 = scmp.eq.s32.totalorder %s21, 0
    %p48 = por %p46, %p47
    %s50 = sadd.s32 %s49, 1
    %p53 = scmp.eq.s32.totalorder %s15, 1
    %p54 = scmp.ne.s32.totalorder %s49, %s51
    %p55 = scmp.eq.s32.totalorder %s15, 0
    %p56 = por %p54, %p55
    %p57 = scmp.ne.s32.totalorder %s49, %s51
    %p58 = scmp.eq.s32.totalorder %s20, 1
    %p59 = por %p57, %p58
    %p60 = scmp.ne.s32.totalorder %s51, %s52
    %p61 = scmp.eq.s32.totalorder %s20, 0
    %p62 = por %p60, %p61
    %p63 = scmp.ne.s32.totalorder %s51, %s52
    %p64 = scmp.eq.s32.totalorder %s21, 1
    %p65 = por %p63, %p64
    %p67 = scmp.ne.s32.totalorder %s52, %s66
    %p68 = scmp.eq.s32.totalorder %s21, 0
    %p69 = por %p67, %p68
    %s71 = sadd.s32 %s70, 1
    %p74 = scmp.eq.s32.totalorder %s15, 1
    %p75 = scmp.ne.s32.totalorder %s70, %s72
    %p76 = scmp.eq.s32.totalorder %s15, 0
    %p77 = por %p75, %p76
    %p78 = scmp.ne.s32.totalorder %s70, %s72
    %p79 = scmp.eq.s32.totalorder %s20, 1
    %p80 = por %p78, %p79
    %p81 = scmp.ne.s32.totalorder %s72, %s73
    %p82 = scmp.eq.s32.totalorder %s20, 0
    %p83 = por %p81, %p82
    %p84 = scmp.ne.s32.totalorder %s72, %s73
    %p85 = scmp.eq.s32.totalorder %s21, 1
    %p86 = por %p84, %p85
    %p88 = scmp.ne.s32.totalorder %s73, %s87
    %p89 = scmp.eq.s32.totalorder %s21, 0
    %p90 = por %p88, %p89
    %s92 = sadd.s32 %s91, 1
    %p95 = scmp.eq.s32.totalorder %s15, 1
    %p96 = scmp.ne.s32.totalorder %s91, %s93
    %p97 = scmp.eq.s32.totalorder %s15, 0
    %p98 = por %p96, %p97
    %p99 = scmp.ne.s32.totalorder %s91, %s93
    %p100 = scmp.eq.s32.totalorder %s20, 1
    %p101 = por %p99, %p100
    %p102 = scmp.ne.s32.totalorder %s93, %s94
    %p103 = scmp.eq.s32.totalorder %s20, 0
    %p104 = por %p102, %p103
    %p105 = scmp.ne.s32.totalorder %s93, %s94
    %p106 = scmp.eq.s32.totalorder %s21, 1
    %p107 = por %p105, %p106
    %p109 = scmp.ne.s32.totalorder %s94, %s108
    %p110 = scmp.eq.s32.totalorder %s21, 0
    %p111 = por %p109, %p110
    %s113 = sadd.s32 %s112, 1
    %p116 = scmp.eq.s32.totalorder %s15, 1
    %p117 = scmp.ne.s32.totalorder %s112, %s114
    %p118 = scmp.eq.s32.totalorder %s15, 0
    %p119 = por %p117, %p118
    %p120 = scmp.ne.s32.totalorder %s112, %s114
    %p121 = scmp.eq.s32.totalorder %s20, 1
    %p122 = por %p120, %p121
    %p123 = scmp.ne.s32.totalorder %s114, %s115
    %p124 = scmp.eq.s32.totalorder %s20, 0
    %p125 = por %p123, %p124
    %p126 = scmp.ne.s32.totalorder %s114, %s115
    %p127 = scmp.eq.s32.totalorder %s21, 1
    %p128 = por %p126, %p127
    %p130 = scmp.ne.s32.totalorder %s115, %s129
    %p131 = scmp.eq.s32.totalorder %s21, 0
    %p132 = por %p130, %p131
    %s134 = sadd.s32 %s133, 1
    %p137 = scmp.eq.s32.totalorder %s15, 1
    %p138 = scmp.ne.s32.totalorder %s133, %s135
    %p139 = scmp.eq.s32.totalorder %s15, 0
    %p140 = por %p138, %p139
    %p141 = scmp.ne.s32.totalorder %s133, %s135
    %p142 = scmp.eq.s32.totalorder %s20, 1
    %p143 = por %p141, %p142
    %p144 = scmp.ne.s32.totalorder %s135, %s136
    %p145 = scmp.eq.s32.totalorder %s20, 0
    %p146 = por %p144, %p145
    %p147 = scmp.ne.s32.totalorder %s135, %s136
    %p148 = scmp.eq.s32.totalorder %s21, 1
    %p149 = por %p147, %p148
    %p151 = scmp.ne.s32.totalorder %s136, %s150
    %p152 = scmp.eq.s32.totalorder %s21, 0
    %p153 = por %p151, %p152
    %s155 = sadd.s32 %s154, 1
    %p158 = scmp.eq.s32.totalorder %s15, 1
    %p159 = scmp.ne.s32.totalorder %s154, %s156
    %p160 = scmp.eq.s32.totalorder %s15, 0
    %p161 = por %p159, %p160
    %p162 = scmp.ne.s32.totalorder %s154, %s156
    %p163 = scmp.eq.s32.totalorder %s20, 1
    %p164 = por %p162, %p163
    %p165 = scmp.ne.s32.totalorder %s156, %s157
    %p166 = scmp.eq.s32.totalorder %s20, 0
    %p167 = por %p165, %p166
    %p168 = scmp.ne.s32.totalorder %s156, %s157
    %p169 = scmp.eq.s32.totalorder %s21, 1
    %p170 = por %p168, %p169
    %p172 = scmp.ne.s32.totalorder %s157, %s171
    %p173 = scmp.eq.s32.totalorder %s21, 0
    %p174 = por %p172, %p173
    %s176 = sadd.s32 %s175, 1
    %p179 = scmp.eq.s32.totalorder %s15, 1
    %p180 = scmp.ne.s32.totalorder %s175, %s177
    %p181 = scmp.eq.s32.totalorder %s15, 0
    %p182 = por %p180, %p181
    %p183 = scmp.ne.s32.totalorder %s175, %s177
    %p184 = scmp.eq.s32.totalorder %s20, 1
    %p185 = por %p183, %p184
    %p186 = scmp.ne.s32.totalorder %s177, %s178
    %p187 = scmp.eq.s32.totalorder %s20, 0
    %p188 = por %p186, %p187
    %p189 = scmp.ne.s32.totalorder %s177, %s178
    %p190 = scmp.eq.s32.totalorder %s21, 1
    %p191 = por %p189, %p190
    %p193 = scmp.ne.s32.totalorder %s178, %s192
    %p194 = scmp.eq.s32.totalorder %s21, 0
    %p195 = por %p193, %p194
    %s197 = sadd.s32 %s196, 1
    %p200 = scmp.eq.s32.totalorder %s15, 1
    %p201 = scmp.ne.s32.totalorder %s196, %s198
    %p202 = scmp.eq.s32.totalorder %s15, 0
    %p203 = por %p201, %p202
    %p204 = scmp.ne.s32.totalorder %s196, %s198
    %p205 = scmp.eq.s32.totalorder %s20, 1
    %p206 = por %p204, %p205
    %p207 = scmp.ne.s32.totalorder %s198, %s199
    %p208 = scmp.eq.s32.totalorder %s20, 0
    %p209 = por %p207, %p208
    %p210 = scmp.ne.s32.totalorder %s198, %s199
    %p211 = scmp.eq.s32.totalorder %s21, 1
    %p212 = por %p210, %p211
    %p214 = scmp.ne.s32.totalorder %s199, %s213
    %p215 = scmp.eq.s32.totalorder %s21, 0
    %p216 = por %p214, %p215
    %s217 = ssub.s32 %s15, %s22
    %p218 = scmp.eq.s32.totalorder %s217, 0
    %s220 = sadd.s32 %s219, 1
    %s221 = scalar_select %p218, %s219, %s220
    %p224 = pneg %p218
    %p225 = scmp.eq.s32.totalorder %s15, 1
    %p226 = por %p224, %p225
    %p227 = scmp.ne.s32.totalorder %s219, %s222
    %p228 = scmp.eq.s32.totalorder %s15, 0
    %p229 = por %p227, %p228
    %p230 = scmp.ne.s32.totalorder %s219, %s222
    %p231 = scmp.eq.s32.totalorder %s20, 1
    %p232 = por %p230, %p231
    %p233 = scmp.ne.s32.totalorder %s222, %s223
    %p234 = scmp.eq.s32.totalorder %s20, 0
    %p235 = por %p233, %p234
    %p236 = scmp.ne.s32.totalorder %s222, %s223
    %p237 = scmp.eq.s32.totalorder %s21, 1
    %p238 = por %p236, %p237
    %p240 = scmp.ne.s32.totalorder %s223, %s239
    %p241 = scmp.eq.s32.totalorder %s21, 0
    %p242 = por %p240, %p241
    %p243 = scmp.le.s32.totalorder 1, %s15
    %p244 = scmp.lt.s32.totalorder %s15, 3
    %p245 = pnand %p243, %p244
    %p246 = pneg %p245
    // Predicated region
    $region9: #{tpu_custom_call.1} parent=5 // pred_check
      _
    $region10: #{tpu_custom_call.1} parent=5 // pred_check_branch
      %248 = sbr.rel (%p245) target = $region12
    $region11: #{tpu_custom_call.1} parent=5 // pred_region
      %s249 = ssub.s32 %s15, 1
      // Predicated region
      $region13: #{tpu_custom_call.1} parent=11 // pred_check
        %p250 = pneg %p62
      $region14: #{tpu_custom_call.1} parent=11 // pred_check_branch
        %252 = sbr.rel (%p250) target = $region16
      $region15: #{tpu_custom_call.1} parent=11 // pred_region
        _
      $region16: #{tpu_custom_call.1} parent=11 // pred_fallthru
        _
      // Predicated region
      $region17: #{tpu_custom_call.1} parent=11 // pred_check
        %p253 = pneg %p83
      $region18: #{tpu_custom_call.1} parent=11 // pred_check_branch
        %255 = sbr.rel (%p253) target = $region20
      $region19: #{tpu_custom_call.1} parent=11 // pred_region
        _
      $region20: #{tpu_custom_call.1} parent=11 // pred_fallthru
        _
      // Predicated region
      $region21: #{tpu_custom_call.1} parent=11 // pred_check
        %p256 = pneg %p104
      $region22: #{tpu_custom_call.1} parent=11 // pred_check_branch
        %258 = sbr.rel (%p256) target = $region24
      $region23: #{tpu_custom_call.1} parent=11 // pred_region
        _
      $region24: #{tpu_custom_call.1} parent=11 // pred_fallthru
        _
      // Predicated region
      $region25: #{tpu_custom_call.1} parent=11 // pred_check
        %p259 = pneg %p125
      $region26: #{tpu_custom_call.1} parent=11 // pred_check_branch
        %261 = sbr.rel (%p259) target = $region28
      $region27: #{tpu_custom_call.1} parent=11 // pred_region
        _
      $region28: #{tpu_custom_call.1} parent=11 // pred_fallthru
        _
      // Predicated region
      $region29: #{tpu_custom_call.1} parent=11 // pred_check
        %p262 = pneg %p146
      $region30: #{tpu_custom_call.1} parent=11 // pred_check_branch
        %264 = sbr.rel (%p262) target = $region32
      $region31: #{tpu_custom_call.1} parent=11 // pred_region
        _
      $region32: #{tpu_custom_call.1} parent=11 // pred_fallthru
        _
      // Predicated region
      $region33: #{tpu_custom_call.1} parent=11 // pred_check
        %p265 = pneg %p167
      $region34: #{tpu_custom_call.1} parent=11 // pred_check_branch
        %267 = sbr.rel (%p265) target = $region36
      $region35: #{tpu_custom_call.1} parent=11 // pred_region
        _
      $region36: #{tpu_custom_call.1} parent=11 // pred_fallthru
        _
      // Predicated region
      $region37: #{tpu_custom_call.1} parent=11 // pred_check
        %p268 = pneg %p188
      $region38: #{tpu_custom_call.1} parent=11 // pred_check_branch
        %270 = sbr.rel (%p268) target = $region40
      $region39: #{tpu_custom_call.1} parent=11 // pred_region
        _
      $region40: #{tpu_custom_call.1} parent=11 // pred_fallthru
        _
      // Predicated region
      $region41: #{tpu_custom_call.1} parent=11 // pred_check
        %p271 = pneg %p209
      $region42: #{tpu_custom_call.1} parent=11 // pred_check_branch
        %273 = sbr.rel (%p271) target = $region44
      $region43: #{tpu_custom_call.1} parent=11 // pred_region
        _
      $region44: #{tpu_custom_call.1} parent=11 // pred_fallthru
        _
    $region12: #{tpu_custom_call.1} parent=5 // pred_fallthru
      _
    %p274 = scmp.lt.s32.totalorder %s15, 2
    // Predicated region
    $region45: #{tpu_custom_call.1} parent=5 // pred_check
      %p275 = pneg %p274
    $region46: #{tpu_custom_call.1} parent=5 // pred_check_branch
      %277 = sbr.rel (%p275) target = $region48
    $region47: #{tpu_custom_call.1} parent=5 // pred_region
      // Predicated region
      $region49: #{tpu_custom_call.1} parent=47 // pred_check
        %p278 = pneg %p35
      $region50: #{tpu_custom_call.1} parent=47 // pred_check_branch
        %280 = sbr.rel (%p278) target = $region52
      $region51: #{tpu_custom_call.1} parent=47 // pred_region
        %p281 = scmp.lt.s32.totalorder %s15, 1
        %s282 = scalar_select %p281, %s15, 1
        %s283 = smul.addr %s282, 32
        %s284 = smul.addr %s283, 8
        %s285 = scalar_lea.vmem %s0, %s284
      $region52: #{tpu_custom_call.1} parent=47 // pred_fallthru
        _
    $region48: #{tpu_custom_call.1} parent=5 // pred_fallthru
      _
    %p286 = scmp.le.s32.totalorder 1, %s15
    %p287 = scmp.lt.s32.totalorder %s15, 3
    %p288 = pnand %p286, %p287
    %p289 = pneg %p288
    // Predicated region
    $region53: #{tpu_custom_call.1} parent=5 // pred_check
      _
    $region54: #{tpu_custom_call.1} parent=5 // pred_check_branch
      %291 = sbr.rel (%p288) target = $region56
    $region55: #{tpu_custom_call.1} parent=5 // pred_region
      %s292 = ssub.s32 %s15, 1
      %p293 = scmp.lt.s32.totalorder %s20, 1
      %s294 = scalar_select %p293, %s20, 1
      %s295 = smul.addr %s294, 32
      %s296 = smul.addr %s295, 8
      %s297 = scalar_lea.vmem %s0, %s296
      %p298 = pneg %p41
      %p299 = pneg %p38
      %p300 = pneg %p62
      %p301 = pneg %p59
      %p302 = pneg %p83
      %p303 = pneg %p80
      %p304 = pneg %p104
      %p305 = pneg %p101
      %p306 = pneg %p125
      %p307 = pneg %p122
      %p308 = pneg %p146
      %p309 = pneg %p143
      %p310 = pneg %p167
      %p311 = pneg %p164
      %p312 = pneg %p188
      %p313 = pneg %p185
      %p314 = pneg %p209
      %p315 = pneg %p206
      %p316 = pneg %p235
      %p317 = pneg %p232
      %p318 = scmp.lt.s32.totalorder %s20, 1
      %s319 = scalar_select %p318, %s20, 1
      %s320 = smul.addr %s319, 32
      %s321 = smul.addr %s320, 8
      %s322 = scalar_lea.vmem %s9, %s321
      %p323 = scmp.lt.s32.totalorder %s20, 1
      %s324 = scalar_select %p323, %s20, 1
      %s325 = smul.addr %s324, 32
      %s326 = smul.addr %s325, 8
      %s327 = scalar_lea.vmem %s0, %s326
      %p328 = scmp.lt.s32.totalorder %s20, 1
      %s329 = scalar_select %p328, %s20, 1
      %s330 = smul.addr %s329, 32
      %s331 = smul.addr %s330, 8
      %s332 = scalar_lea.vmem %s9, %s331
      %vm334 = vcmask 97280
      %335 = vst.msk [vmem:[#allocation2] sm:$0xff] %vm334, 0.0
      %336 = vst.msk [vmem:[#allocation2 + $0x8] sm:$0xff] %vm334, 0.0
      %vm337 = vcmask 91136
      %338 = vst.msk [vmem:[#allocation2 + $0x10] sm:$0x3] %vm337, 0.0
      %339 = vst.msk [vmem:[#allocation2 + $0x18] sm:$0xff] %vm334, 0.0
      %340 = vst.msk [vmem:[#allocation2 + $0x20] sm:$0xff] %vm334, 0.0
      %341 = vst.msk [vmem:[#allocation2 + $0x28] sm:$0x3] %vm337, 0.0
      %342 = vst.msk [vmem:[#allocation2 + $0x30] sm:$0xff] %vm334, 0.0
      %343 = vst.msk [vmem:[#allocation2 + $0x38] sm:$0xff] %vm334, 0.0
      %344 = vst.msk [vmem:[#allocation2 + $0x40] sm:$0x3] %vm337, 0.0
      %345 = vst.msk [vmem:[#allocation2 + $0x48] sm:$0xff] %vm334, 0.0
      %346 = vst.msk [vmem:[#allocation2 + $0x50] sm:$0xff] %vm334, 0.0
      %347 = vst.msk [vmem:[#allocation2 + $0x58] sm:$0x3] %vm337, 0.0
      %348 = vst.msk [vmem:[#allocation2 + $0x60] sm:$0xff] %vm334, 0.0
      %349 = vst.msk [vmem:[#allocation2 + $0x68] sm:$0xff] %vm334, 0.0
      %350 = vst.msk [vmem:[#allocation2 + $0x70] sm:$0x3] %vm337, 0.0
      %351 = vst.msk [vmem:[#allocation2 + $0x78] sm:$0xff] %vm334, 0.0
      %352 = vst.msk [vmem:[#allocation2 + $0x80] sm:$0xff] %vm334, 0.0
      %353 = vst.msk [vmem:[#allocation2 + $0x88] sm:$0x3] %vm337, 0.0
      %354 = vst.msk [vmem:[#allocation2 + $0x90] sm:$0xff] %vm334, 0.0
      %355 = vst.msk [vmem:[#allocation2 + $0x98] sm:$0xff] %vm334, 0.0
      %356 = vst.msk [vmem:[#allocation2 + $0xa0] sm:$0x3] %vm337, 0.0
      %357 = vst.msk [vmem:[#allocation2 + $0xa8] sm:$0xff] %vm334, 0.0
      %358 = vst.msk [vmem:[#allocation2 + $0xb0] sm:$0xff] %vm334, 0.0
      %359 = vst.msk [vmem:[#allocation2 + $0xb8] sm:$0x3] %vm337, 0.0
      %360 = vst.msk [vmem:[#allocation2 + $0xc0] sm:$0xff] %vm334, 0.0
      %361 = vst.msk [vmem:[#allocation2 + $0xc8] sm:$0xff] %vm334, 0.0
      %362 = vst.msk [vmem:[#allocation2 + $0xd0] sm:$0x3] %vm337, 0.0
      %363 = vst.msk [vmem:[#allocation2 + $0xd8] sm:$0xff] %vm334, 0.0
      %364 = vst.msk [vmem:[#allocation2 + $0xe0] sm:$0xff] %vm334, 0.0
      %365 = vst.msk [vmem:[#allocation2 + $0xe8] sm:$0x3] %vm337, 0.0
      %366 = vst.msk [vmem:[#allocation2 + $0xf0] sm:$0xff] %vm334, 0.0
      %367 = vst.msk [vmem:[#allocation2 + $0xf8] sm:$0xff] %vm334, 0.0
      %368 = vst.msk [vmem:[#allocation2 + $0x100] sm:$0x3] %vm337, 0.0
      %369 = vst.msk [vmem:[#allocation2 + $0x108] sm:$0xff] %vm334, 0.0
      %370 = vst.msk [vmem:[#allocation2 + $0x110] sm:$0xff] %vm334, 0.0
      %371 = vst.msk [vmem:[#allocation2 + $0x118] sm:$0x3] %vm337, 0.0
      %372 = vst.msk [vmem:[#allocation2 + $0x120] sm:$0xff] %vm334, 0.0
      %373 = vst.msk [vmem:[#allocation2 + $0x128] sm:$0xff] %vm334, 0.0
      %374 = vst.msk [vmem:[#allocation2 + $0x130] sm:$0x3] %vm337, 0.0
      %375 = vst.msk [vmem:[#allocation2 + $0x138] sm:$0xff] %vm334, 0.0
      %376 = vst.msk [vmem:[#allocation2 + $0x140] sm:$0xff] %vm334, 0.0
      %377 = vst.msk [vmem:[#allocation2 + $0x148] sm:$0x3] %vm337, 0.0
      %378 = vst.msk [vmem:[#allocation2 + $0x150] sm:$0xff] %vm334, 0.0
      %379 = vst.msk [vmem:[#allocation2 + $0x158] sm:$0xff] %vm334, 0.0
      %380 = vst.msk [vmem:[#allocation2 + $0x160] sm:$0x3] %vm337, 0.0
      %381 = vst.msk [vmem:[#allocation2 + $0x168] sm:$0xff] %vm334, 0.0
      %382 = vst.msk [vmem:[#allocation2 + $0x170] sm:$0xff] %vm334, 0.0
      %383 = vst.msk [vmem:[#allocation2 + $0x178] sm:$0x3] %vm337, 0.0
      %384 = vst.msk [vmem:[#allocation2 + $0x180] sm:$0xff] %vm334, 0.0
      %385 = vst.msk [vmem:[#allocation2 + $0x188] sm:$0xff] %vm334, 0.0
      %386 = vst.msk [vmem:[#allocation2 + $0x190] sm:$0x3] %vm337, 0.0
      %387 = vst.msk [vmem:[#allocation2 + $0x198] sm:$0xff] %vm334, 0.0
      %388 = vst.msk [vmem:[#allocation2 + $0x1a0] sm:$0xff] %vm334, 0.0
      %389 = vst.msk [vmem:[#allocation2 + $0x1a8] sm:$0x3] %vm337, 0.0
      %vm390 = vcmask 64512
      %391 = vst.msk [vmem:[#allocation3] sm:$0xff] %vm390, 0.0
      %392 = vst.msk [vmem:[#allocation3 + $0x8] sm:$0xff] %vm390, 0.0
      %vm393 = vcmask 58368
      %394 = vst.msk [vmem:[#allocation3 + $0x10] sm:$0x3] %vm393, 0.0
      %395 = vst.msk [vmem:[#allocation3 + $0x18] sm:$0xff] %vm390, 0.0
      %396 = vst.msk [vmem:[#allocation3 + $0x20] sm:$0xff] %vm390, 0.0
      %397 = vst.msk [vmem:[#allocation3 + $0x28] sm:$0x3] %vm393, 0.0
      %398 = vst.msk [vmem:[#allocation3 + $0x30] sm:$0xff] %vm390, 0.0
      %399 = vst.msk [vmem:[#allocation3 + $0x38] sm:$0xff] %vm390, 0.0
      %400 = vst.msk [vmem:[#allocation3 + $0x40] sm:$0x3] %vm393, 0.0
      %401 = vst.msk [vmem:[#allocation3 + $0x48] sm:$0xff] %vm390, 0.0
      %402 = vst.msk [vmem:[#allocation3 + $0x50] sm:$0xff] %vm390, 0.0
      %403 = vst.msk [vmem:[#allocation3 + $0x58] sm:$0x3] %vm393, 0.0
      %404 = vst.msk [vmem:[#allocation3 + $0x60] sm:$0xff] %vm390, 0.0
      %405 = vst.msk [vmem:[#allocation3 + $0x68] sm:$0xff] %vm390, 0.0
      %406 = vst.msk [vmem:[#allocation3 + $0x70] sm:$0x3] %vm393, 0.0
      %407 = vst.msk [vmem:[#allocation3 + $0x78] sm:$0xff] %vm390, 0.0
      %408 = vst.msk [vmem:[#allocation3 + $0x80] sm:$0xff] %vm390, 0.0
      %409 = vst.msk [vmem:[#allocation3 + $0x88] sm:$0x3] %vm393, 0.0
      %410 = vst.msk [vmem:[#allocation3 + $0x90] sm:$0xff] %vm390, 0.0
      %411 = vst.msk [vmem:[#allocation3 + $0x98] sm:$0xff] %vm390, 0.0
      %412 = vst.msk [vmem:[#allocation3 + $0xa0] sm:$0x3] %vm393, 0.0
      %413 = vst.msk [vmem:[#allocation3 + $0xa8] sm:$0xff] %vm390, 0.0
      %414 = vst.msk [vmem:[#allocation3 + $0xb0] sm:$0xff] %vm390, 0.0
      %415 = vst.msk [vmem:[#allocation3 + $0xb8] sm:$0x3] %vm393, 0.0
      %416 = vst.msk [vmem:[#allocation3 + $0xc0] sm:$0xff] %vm390, 0.0
      %417 = vst.msk [vmem:[#allocation3 + $0xc8] sm:$0xff] %vm390, 0.0
      %418 = vst.msk [vmem:[#allocation3 + $0xd0] sm:$0x3] %vm393, 0.0
      %419 = vst.msk [vmem:[#allocation3 + $0xd8] sm:$0xff] %vm390, 0.0
      %420 = vst.msk [vmem:[#allocation3 + $0xe0] sm:$0xff] %vm390, 0.0
      %421 = vst.msk [vmem:[#allocation3 + $0xe8] sm:$0x3] %vm393, 0.0
      %422 = vst.msk [vmem:[#allocation3 + $0xf0] sm:$0xff] %vm390, 0.0
      %423 = vst.msk [vmem:[#allocation3 + $0xf8] sm:$0xff] %vm390, 0.0
      %424 = vst.msk [vmem:[#allocation3 + $0x100] sm:$0x3] %vm393, 0.0
      %425 = vst.msk [vmem:[#allocation3 + $0x108] sm:$0xff] %vm390, 0.0
      %426 = vst.msk [vmem:[#allocation3 + $0x110] sm:$0xff] %vm390, 0.0
      %427 = vst.msk [vmem:[#allocation3 + $0x118] sm:$0x3] %vm393, 0.0
      %428 = vst.msk [vmem:[#allocation3 + $0x120] sm:$0xff] %vm390, 0.0
      %429 = vst.msk [vmem:[#allocation3 + $0x128] sm:$0xff] %vm390, 0.0
      %430 = vst.msk [vmem:[#allocation3 + $0x130] sm:$0x3] %vm393, 0.0
      %431 = vst.msk [vmem:[#allocation3 + $0x138] sm:$0xff] %vm390, 0.0
      %432 = vst.msk [vmem:[#allocation3 + $0x140] sm:$0xff] %vm390, 0.0
      %433 = vst.msk [vmem:[#allocation3 + $0x148] sm:$0x3] %vm393, 0.0
      %434 = vst.msk [vmem:[#allocation3 + $0x150] sm:$0xff] %vm390, 0.0
      %435 = vst.msk [vmem:[#allocation3 + $0x158] sm:$0xff] %vm390, 0.0
      %436 = vst.msk [vmem:[#allocation3 + $0x160] sm:$0x3] %vm393, 0.0
      %437 = vst.msk [vmem:[#allocation3 + $0x168] sm:$0xff] %vm390, 0.0
      %438 = vst.msk [vmem:[#allocation3 + $0x170] sm:$0xff] %vm390, 0.0
      %439 = vst.msk [vmem:[#allocation3 + $0x178] sm:$0x3] %vm393, 0.0
      %440 = vst.msk [vmem:[#allocation3 + $0x180] sm:$0xff] %vm390, 0.0
      %441 = vst.msk [vmem:[#allocation3 + $0x188] sm:$0xff] %vm390, 0.0
      %442 = vst.msk [vmem:[#allocation3 + $0x190] sm:$0x3] %vm393, 0.0
      %443 = vst.msk [vmem:[#allocation3 + $0x198] sm:$0xff] %vm390, 0.0
      %444 = vst.msk [vmem:[#allocation3 + $0x1a0] sm:$0xff] %vm390, 0.0
      %445 = vst.msk [vmem:[#allocation3 + $0x1a8] sm:$0x3] %vm393, 0.0
      %v446 = vld [vmem:[%s327] sm:$0xff]
      %v447 = vld [vmem:[%s327 + $0x8] sm:$0xff]
      %v448 = vld [vmem:[%s327 + $0x10] sm:$0xff]
      %v449 = vld [vmem:[%s327 + $0x18] sm:$0xff]
      %v450 = vld [vmem:[%s327 + $0x20] sm:$0xff]
      %v451 = vld [vmem:[%s327 + $0x28] sm:$0xff]
      %v452 = vld [vmem:[%s327 + $0x30] sm:$0xff]
      %v453 = vld [vmem:[%s327 + $0x38] sm:$0xff]
      %v454 = vld [vmem:[%s327 + $0x40] sm:$0xff]
      %v455 = vld [vmem:[%s327 + $0x48] sm:$0xff]
      %v456 = vld [vmem:[%s327 + $0x50] sm:$0xff]
      %v457 = vld [vmem:[%s327 + $0x58] sm:$0xff]
      %v458 = vld [vmem:[%s327 + $0x60] sm:$0xff]
      %v459 = vld [vmem:[%s327 + $0x68] sm:$0xff]
      %v460 = vld [vmem:[%s327 + $0x70] sm:$0xff]
      %v461 = vld [vmem:[%s327 + $0x78] sm:$0xff]
      %v462 = vld [vmem:[%s327 + $0x80] sm:$0xff]
      %v463 = vld [vmem:[%s327 + $0x88] sm:$0xff]
      %v464 = vld [vmem:[%s327 + $0x90] sm:$0xff]
      %v465 = vld [vmem:[%s327 + $0x98] sm:$0xff]
      %v466 = vld [vmem:[%s327 + $0xa0] sm:$0xff]
      %v467 = vld [vmem:[%s327 + $0xa8] sm:$0xff]
      %v468 = vld [vmem:[%s327 + $0xb0] sm:$0xff]
      %v469 = vld [vmem:[%s327 + $0xb8] sm:$0xff]
      %v470 = vld [vmem:[%s327 + $0xc0] sm:$0xff]
      %v471 = vld [vmem:[%s327 + $0xc8] sm:$0xff]
      %v472 = vld [vmem:[%s327 + $0xd0] sm:$0xff]
      %v473 = vld [vmem:[%s327 + $0xd8] sm:$0xff]
      %v474 = vld [vmem:[%s327 + $0xe0] sm:$0xff]
      %v475 = vld [vmem:[%s327 + $0xe8] sm:$0xff]
      %v476 = vld [vmem:[%s327 + $0xf0] sm:$0xff]
      %v477 = vld [vmem:[%s327 + $0xf8] sm:$0xff]
      %s478 = scalar_lea.vmem [#allocation2], 24
      %vm479 = vcmask 31744
      %480 = vst.msk [vmem:[%s478 + $0x1] sm:$0xff] %vm479, %v446
      %481 = vst.msk [vmem:[%s478 + $0x9] sm:$0xff] %vm479, %v447
      %482 = vst.msk [vmem:[%s478 + $0x19] sm:$0xff] %vm479, %v448
      %483 = vst.msk [vmem:[%s478 + $0x21] sm:$0xff] %vm479, %v449
      %484 = vst.msk [vmem:[%s478 + $0x31] sm:$0xff] %vm479, %v450
      %485 = vst.msk [vmem:[%s478 + $0x39] sm:$0xff] %vm479, %v451
      %486 = vst.msk [vmem:[%s478 + $0x49] sm:$0xff] %vm479, %v452
      %487 = vst.msk [vmem:[%s478 + $0x51] sm:$0xff] %vm479, %v453
      %488 = vst.msk [vmem:[%s478 + $0x61] sm:$0xff] %vm479, %v454
      %489 = vst.msk [vmem:[%s478 + $0x69] sm:$0xff] %vm479, %v455
      %490 = vst.msk [vmem:[%s478 + $0x79] sm:$0xff] %vm479, %v456
      %491 = vst.msk [vmem:[%s478 + $0x81] sm:$0xff] %vm479, %v457
      %492 = vst.msk [vmem:[%s478 + $0x91] sm:$0xff] %vm479, %v458
      %493 = vst.msk [vmem:[%s478 + $0x99] sm:$0xff] %vm479, %v459
      %494 = vst.msk [vmem:[%s478 + $0xa9] sm:$0xff] %vm479, %v460
      %495 = vst.msk [vmem:[%s478 + $0xb1] sm:$0xff] %vm479, %v461
      %496 = vst.msk [vmem:[%s478 + $0xc1] sm:$0xff] %vm479, %v462
      %497 = vst.msk [vmem:[%s478 + $0xc9] sm:$0xff] %vm479, %v463
      %498 = vst.msk [vmem:[%s478 + $0xd9] sm:$0xff] %vm479, %v464
      %499 = vst.msk [vmem:[%s478 + $0xe1] sm:$0xff] %vm479, %v465
      %500 = vst.msk [vmem:[%s478 + $0xf1] sm:$0xff] %vm479, %v466
      %501 = vst.msk [vmem:[%s478 + $0xf9] sm:$0xff] %vm479, %v467
      %502 = vst.msk [vmem:[%s478 + $0x109] sm:$0xff] %vm479, %v468
      %503 = vst.msk [vmem:[%s478 + $0x111] sm:$0xff] %vm479, %v469
      %504 = vst.msk [vmem:[%s478 + $0x121] sm:$0xff] %vm479, %v470
      %505 = vst.msk [vmem:[%s478 + $0x129] sm:$0xff] %vm479, %v471
      %506 = vst.msk [vmem:[%s478 + $0x139] sm:$0xff] %vm479, %v472
      %507 = vst.msk [vmem:[%s478 + $0x141] sm:$0xff] %vm479, %v473
      %508 = vst.msk [vmem:[%s478 + $0x151] sm:$0xff] %vm479, %v474
      %509 = vst.msk [vmem:[%s478 + $0x159] sm:$0xff] %vm479, %v475
      %510 = vst.msk [vmem:[%s478 + $0x169] sm:$0xff] %vm479, %v476
      %511 = vst.msk [vmem:[%s478 + $0x171] sm:$0xff] %vm479, %v477
      %v512 = vld [vmem:[%s478 + $0x1] sm:$0xff]
      %v513 = vld [vmem:[%s478 + $0x9] sm:$0xff]
      %v514 = vld [vmem:[%s478 + $0x19] sm:$0xff]
      %v515 = vld [vmem:[%s478 + $0x21] sm:$0xff]
      %v516 = vld [vmem:[%s478 + $0x31] sm:$0xff]
      %v517 = vld [vmem:[%s478 + $0x39] sm:$0xff]
      %v518 = vld [vmem:[%s478 + $0x49] sm:$0xff]
      %v519 = vld [vmem:[%s478 + $0x51] sm:$0xff]
      %v520 = vld [vmem:[%s478 + $0x61] sm:$0xff]
      %v521 = vld [vmem:[%s478 + $0x69] sm:$0xff]
      %v522 = vld [vmem:[%s478 + $0x79] sm:$0xff]
      %v523 = vld [vmem:[%s478 + $0x81] sm:$0xff]
      %v524 = vld [vmem:[%s478 + $0x91] sm:$0xff]
      %v525 = vld [vmem:[%s478 + $0x99] sm:$0xff]
      %v526 = vld [vmem:[%s478 + $0xa9] sm:$0xff]
      %v527 = vld [vmem:[%s478 + $0xb1] sm:$0xff]
      %v528 = vld [vmem:[%s478 + $0xc1] sm:$0xff]
      %v529 = vld [vmem:[%s478 + $0xc9] sm:$0xff]
      %v530 = vld [vmem:[%s478 + $0xd9] sm:$0xff]
      %v531 = vld [vmem:[%s478 + $0xe1] sm:$0xff]
      %v532 = vld [vmem:[%s478 + $0xf1] sm:$0xff]
      %v533 = vld [vmem:[%s478 + $0xf9] sm:$0xff]
      %v534 = vld [vmem:[%s478 + $0x109] sm:$0xff]
      %v535 = vld [vmem:[%s478 + $0x111] sm:$0xff]
      %v536 = vld [vmem:[%s478 + $0x121] sm:$0xff]
      %v537 = vld [vmem:[%s478 + $0x129] sm:$0xff]
      %v538 = vld [vmem:[%s478 + $0x139] sm:$0xff]
      %v539 = vld [vmem:[%s478 + $0x141] sm:$0xff]
      %v540 = vld [vmem:[%s478 + $0x151] sm:$0xff]
      %v541 = vld [vmem:[%s478 + $0x159] sm:$0xff]
      %v542 = vld [vmem:[%s478 + $0x169] sm:$0xff]
      %v543 = vld [vmem:[%s478 + $0x171] sm:$0xff]
      %v544 = vld [vmem:[%s1] sm:$0x1]
      %v546 = vlaneseq
      %v547 = vshrl.u32 %v546, 7
      %v548 = vsub.s32 0, %v547
      %v549 = vrot.slane %v544, %v548
      %v551 = vmul.f32 %v512, %v549
      %v552 = vmul.f32 %v513, %v549
      %v553 = vmul.f32 %v514, %v549
      %v554 = vmul.f32 %v515, %v549
      %v555 = vmul.f32 %v516, %v549
      %v556 = vmul.f32 %v517, %v549
      %v557 = vmul.f32 %v518, %v549
      %v558 = vmul.f32 %v519, %v549
      %v559 = vmul.f32 %v520, %v549
      %v560 = vmul.f32 %v521, %v549
      %v561 = vmul.f32 %v522, %v549
      %v562 = vmul.f32 %v523, %v549
      %v563 = vmul.f32 %v524, %v549
      %v564 = vmul.f32 %v525, %v549
      %v565 = vmul.f32 %v526, %v549
      %v566 = vmul.f32 %v527, %v549
      %v567 = vmul.f32 %v528, %v549
      %v568 = vmul.f32 %v529, %v549
      %v569 = vmul.f32 %v530, %v549
      %v570 = vmul.f32 %v531, %v549
      %v571 = vmul.f32 %v532, %v549
      %v572 = vmul.f32 %v533, %v549
      %v573 = vmul.f32 %v534, %v549
      %v574 = vmul.f32 %v535, %v549
      %v575 = vmul.f32 %v536, %v549
      %v576 = vmul.f32 %v537, %v549
      %v577 = vmul.f32 %v538, %v549
      %v578 = vmul.f32 %v539, %v549
      %v579 = vmul.f32 %v540, %v549
      %v580 = vmul.f32 %v541, %v549
      %v581 = vmul.f32 %v542, %v549
      %v582 = vmul.f32 %v543, %v549
      %v583 = vld [vmem:[%s2] sm:$0x1]
      %v585 = vlaneseq
      %v586 = vshrl.u32 %v585, 7
      %v587 = vsub.s32 0, %v586
      %v588 = vrot.slane %v583, %v587
      %v590 = vadd.f32 %v551, %v588
      %v591 = vadd.f32 %v552, %v588
      %v592 = vadd.f32 %v553, %v588
      %v593 = vadd.f32 %v554, %v588
      %v594 = vadd.f32 %v555, %v588
      %v595 = vadd.f32 %v556, %v588
      %v596 = vadd.f32 %v557, %v588
      %v597 = vadd.f32 %v558, %v588
      %v598 = vadd.f32 %v559, %v588
      %v599 = vadd.f32 %v560, %v588
      %v600 = vadd.f32 %v561, %v588
      %v601 = vadd.f32 %v562, %v588
      %v602 = vadd.f32 %v563, %v588
      %v603 = vadd.f32 %v564, %v588
      %v604 = vadd.f32 %v565, %v588
      %v605 = vadd.f32 %v566, %v588
      %v606 = vadd.f32 %v567, %v588
      %v607 = vadd.f32 %v568, %v588
      %v608 = vadd.f32 %v569, %v588
      %v609 = vadd.f32 %v570, %v588
      %v610 = vadd.f32 %v571, %v588
      %v611 = vadd.f32 %v572, %v588
      %v612 = vadd.f32 %v573, %v588
      %v613 = vadd.f32 %v574, %v588
      %v614 = vadd.f32 %v575, %v588
      %v615 = vadd.f32 %v576, %v588
      %v616 = vadd.f32 %v577, %v588
      %v617 = vadd.f32 %v578, %v588
      %v618 = vadd.f32 %v579, %v588
      %v619 = vadd.f32 %v580, %v588
      %v620 = vadd.f32 %v581, %v588
      %v621 = vadd.f32 %v582, %v588
      %v622 = vmax.f32 %v590, 0.0
      %v623 = vmax.f32 %v591, 0.0
      %v624 = vmax.f32 %v592, 0.0
      %v625 = vmax.f32 %v593, 0.0
      %v626 = vmax.f32 %v594, 0.0
      %v627 = vmax.f32 %v595, 0.0
      %v628 = vmax.f32 %v596, 0.0
      %v629 = vmax.f32 %v597, 0.0
      %v630 = vmax.f32 %v598, 0.0
      %v631 = vmax.f32 %v599, 0.0
      %v632 = vmax.f32 %v600, 0.0
      %v633 = vmax.f32 %v601, 0.0
      %v634 = vmax.f32 %v602, 0.0
      %v635 = vmax.f32 %v603, 0.0
      %v636 = vmax.f32 %v604, 0.0
      %v637 = vmax.f32 %v605, 0.0
      %v638 = vmax.f32 %v606, 0.0
      %v639 = vmax.f32 %v607, 0.0
      %v640 = vmax.f32 %v608, 0.0
      %v641 = vmax.f32 %v609, 0.0
      %v642 = vmax.f32 %v610, 0.0
      %v643 = vmax.f32 %v611, 0.0
      %v644 = vmax.f32 %v612, 0.0
      %v645 = vmax.f32 %v613, 0.0
      %v646 = vmax.f32 %v614, 0.0
      %v647 = vmax.f32 %v615, 0.0
      %v648 = vmax.f32 %v616, 0.0
      %v649 = vmax.f32 %v617, 0.0
      %v650 = vmax.f32 %v618, 0.0
      %v651 = vmax.f32 %v619, 0.0
      %v652 = vmax.f32 %v620, 0.0
      %v653 = vmax.f32 %v621, 0.0
      %s654 = scalar_lea.vmem [#allocation3], 24
      %655 = vst.msk [vmem:[%s654 + $0x1] sm:$0xff] %vm479, %v622
      %656 = vst.msk [vmem:[%s654 + $0x9] sm:$0xff] %vm479, %v623
      %657 = vst.msk [vmem:[%s654 + $0x19] sm:$0xff] %vm479, %v624
      %658 = vst.msk [vmem:[%s654 + $0x21] sm:$0xff] %vm479, %v625
      %659 = vst.msk [vmem:[%s654 + $0x31] sm:$0xff] %vm479, %v626
      %660 = vst.msk [vmem:[%s654 + $0x39] sm:$0xff] %vm479, %v627
      %661 = vst.msk [vmem:[%s654 + $0x49] sm:$0xff] %vm479, %v628
      %662 = vst.msk [vmem:[%s654 + $0x51] sm:$0xff] %vm479, %v629
      %663 = vst.msk [vmem:[%s654 + $0x61] sm:$0xff] %vm479, %v630
      %664 = vst.msk [vmem:[%s654 + $0x69] sm:$0xff] %vm479, %v631
      %665 = vst.msk [vmem:[%s654 + $0x79] sm:$0xff] %vm479, %v632
      %666 = vst.msk [vmem:[%s654 + $0x81] sm:$0xff] %vm479, %v633
      %667 = vst.msk [vmem:[%s654 + $0x91] sm:$0xff] %vm479, %v634
      %668 = vst.msk [vmem:[%s654 + $0x99] sm:$0xff] %vm479, %v635
      %669 = vst.msk [vmem:[%s654 + $0xa9] sm:$0xff] %vm479, %v636
      %670 = vst.msk [vmem:[%s654 + $0xb1] sm:$0xff] %vm479, %v637
      %671 = vst.msk [vmem:[%s654 + $0xc1] sm:$0xff] %vm479, %v638
      %672 = vst.msk [vmem:[%s654 + $0xc9] sm:$0xff] %vm479, %v639
      %673 = vst.msk [vmem:[%s654 + $0xd9] sm:$0xff] %vm479, %v640
      %674 = vst.msk [vmem:[%s654 + $0xe1] sm:$0xff] %vm479, %v641
      %675 = vst.msk [vmem:[%s654 + $0xf1] sm:$0xff] %vm479, %v642
      %676 = vst.msk [vmem:[%s654 + $0xf9] sm:$0xff] %vm479, %v643
      %677 = vst.msk [vmem:[%s654 + $0x109] sm:$0xff] %vm479, %v644
      %678 = vst.msk [vmem:[%s654 + $0x111] sm:$0xff] %vm479, %v645
      %679 = vst.msk [vmem:[%s654 + $0x121] sm:$0xff] %vm479, %v646
      %680 = vst.msk [vmem:[%s654 + $0x129] sm:$0xff] %vm479, %v647
      %681 = vst.msk [vmem:[%s654 + $0x139] sm:$0xff] %vm479, %v648
      %682 = vst.msk [vmem:[%s654 + $0x141] sm:$0xff] %vm479, %v649
      %683 = vst.msk [vmem:[%s654 + $0x151] sm:$0xff] %vm479, %v650
      %684 = vst.msk [vmem:[%s654 + $0x159] sm:$0xff] %vm479, %v651
      %685 = vst.msk [vmem:[%s654 + $0x169] sm:$0xff] %vm479, %v652
      %686 = vst.msk [vmem:[%s654 + $0x171] sm:$0xff] %vm479, %v653
      %v687 = vld [vmem:[#allocation3] sm:$0xff]
      %v688 = vld [vmem:[#allocation3 + $0x8] sm:$0xff]
      %v689 = vld [vmem:[#allocation3 + $0x18] sm:$0xff]
      %v690 = vld [vmem:[#allocation3 + $0x20] sm:$0xff]
      %v691 = vld [vmem:[#allocation3 + $0x30] sm:$0xff]
      %v692 = vld [vmem:[#allocation3 + $0x38] sm:$0xff]
      %v693 = vld [vmem:[#allocation3 + $0x48] sm:$0xff]
      %v694 = vld [vmem:[#allocation3 + $0x50] sm:$0xff]
      %v695 = vld [vmem:[#allocation3 + $0x60] sm:$0xff]
      %v696 = vld [vmem:[#allocation3 + $0x68] sm:$0xff]
      %v697 = vld [vmem:[#allocation3 + $0x78] sm:$0xff]
      %v698 = vld [vmem:[#allocation3 + $0x80] sm:$0xff]
      %v699 = vld [vmem:[#allocation3 + $0x90] sm:$0xff]
      %v700 = vld [vmem:[#allocation3 + $0x98] sm:$0xff]
      %v701 = vld [vmem:[#allocation3 + $0xa8] sm:$0xff]
      %v702 = vld [vmem:[#allocation3 + $0xb0] sm:$0xff]
      %v703 = vld [vmem:[#allocation3 + $0xc0] sm:$0xff]
      %v704 = vld [vmem:[#allocation3 + $0xc8] sm:$0xff]
      %v705 = vld [vmem:[#allocation3 + $0xd8] sm:$0xff]
      %v706 = vld [vmem:[#allocation3 + $0xe0] sm:$0xff]
      %v707 = vld [vmem:[#allocation3 + $0xf0] sm:$0xff]
      %v708 = vld [vmem:[#allocation3 + $0xf8] sm:$0xff]
      %v709 = vld [vmem:[#allocation3 + $0x108] sm:$0xff]
      %v710 = vld [vmem:[#allocation3 + $0x110] sm:$0xff]
      %v711 = vld [vmem:[#allocation3 + $0x120] sm:$0xff]
      %v712 = vld [vmem:[#allocation3 + $0x128] sm:$0xff]
      %v713 = vld [vmem:[#allocation3 + $0x138] sm:$0xff]
      %v714 = vld [vmem:[#allocation3 + $0x140] sm:$0xff]
      %v715 = vld [vmem:[#allocation3 + $0x150] sm:$0xff]
      %v716 = vld [vmem:[#allocation3 + $0x158] sm:$0xff]
      %v717 = vld [vmem:[#allocation3 + $0x168] sm:$0xff]
      %v718 = vld [vmem:[#allocation3 + $0x170] sm:$0xff]
      %719 = vst.msk [vmem:[#allocation4] sm:$0xff] %vm479, %v687
      %720 = vst.msk [vmem:[#allocation4 + $0x8] sm:$0xff] %vm479, %v688
      %721 = vst.msk [vmem:[#allocation4 + $0x10] sm:$0xff] %vm479, %v689
      %722 = vst.msk [vmem:[#allocation4 + $0x18] sm:$0xff] %vm479, %v690
      %723 = vst.msk [vmem:[#allocation4 + $0x20] sm:$0xff] %vm479, %v691
      %724 = vst.msk [vmem:[#allocation4 + $0x28] sm:$0xff] %vm479, %v692
      %725 = vst.msk [vmem:[#allocation4 + $0x30] sm:$0xff] %vm479, %v693
      %726 = vst.msk [vmem:[#allocation4 + $0x38] sm:$0xff] %vm479, %v694
      %727 = vst.msk [vmem:[#allocation4 + $0x40] sm:$0xff] %vm479, %v695
      %728 = vst.msk [vmem:[#allocation4 + $0x48] sm:$0xff] %vm479, %v696
      %729 = vst.msk [vmem:[#allocation4 + $0x50] sm:$0xff] %vm479, %v697
      %730 = vst.msk [vmem:[#allocation4 + $0x58] sm:$0xff] %vm479, %v698
      %731 = vst.msk [vmem:[#allocation4 + $0x60] sm:$0xff] %vm479, %v699
      %732 = vst.msk [vmem:[#allocation4 + $0x68] sm:$0xff] %vm479, %v700
      %733 = vst.msk [vmem:[#allocation4 + $0x70] sm:$0xff] %vm479, %v701
      %734 = vst.msk [vmem:[#allocation4 + $0x78] sm:$0xff] %vm479, %v702
      %735 = vst.msk [vmem:[#allocation4 + $0x80] sm:$0xff] %vm479, %v703
      %736 = vst.msk [vmem:[#allocation4 + $0x88] sm:$0xff] %vm479, %v704
      %737 = vst.msk [vmem:[#allocation4 + $0x90] sm:$0xff] %vm479, %v705
      %738 = vst.msk [vmem:[#allocation4 + $0x98] sm:$0xff] %vm479, %v706
      %739 = vst.msk [vmem:[#allocation4 + $0xa0] sm:$0xff] %vm479, %v707
      %740 = vst.msk [vmem:[#allocation4 + $0xa8] sm:$0xff] %vm479, %v708
      %741 = vst.msk [vmem:[#allocation4 + $0xb0] sm:$0xff] %vm479, %v709
      %742 = vst.msk [vmem:[#allocation4 + $0xb8] sm:$0xff] %vm479, %v710
      %743 = vst.msk [vmem:[#allocation4 + $0xc0] sm:$0xff] %vm479, %v711
      %744 = vst.msk [vmem:[#allocation4 + $0xc8] sm:$0xff] %vm479, %v712
      %745 = vst.msk [vmem:[#allocation4 + $0xd0] sm:$0xff] %vm479, %v713
      %746 = vst.msk [vmem:[#allocation4 + $0xd8] sm:$0xff] %vm479, %v714
      %747 = vst.msk [vmem:[#allocation4 + $0xe0] sm:$0xff] %vm479, %v715
      %748 = vst.msk [vmem:[#allocation4 + $0xe8] sm:$0xff] %vm479, %v716
      %749 = vst.msk [vmem:[#allocation4 + $0xf0] sm:$0xff] %vm479, %v717
      %750 = vst.msk [vmem:[#allocation4 + $0xf8] sm:$0xff] %vm479, %v718
      %v751 = vld [vmem:[#allocation3 + $0x1] sm:$0xff]
      %v752 = vld [vmem:[#allocation3 + $0x9] sm:$0xff]
      %v753 = vld [vmem:[#allocation3 + $0x19] sm:$0xff]
      %v754 = vld [vmem:[#allocation3 + $0x21] sm:$0xff]
      %v755 = vld [vmem:[#allocation3 + $0x31] sm:$0xff]
      %v756 = vld [vmem:[#allocation3 + $0x39] sm:$0xff]
      %v757 = vld [vmem:[#allocation3 + $0x49] sm:$0xff]
      %v758 = vld [vmem:[#allocation3 + $0x51] sm:$0xff]
      %v759 = vld [vmem:[#allocation3 + $0x61] sm:$0xff]
      %v760 = vld [vmem:[#allocation3 + $0x69] sm:$0xff]
      %v761 = vld [vmem:[#allocation3 + $0x79] sm:$0xff]
      %v762 = vld [vmem:[#allocation3 + $0x81] sm:$0xff]
      %v763 = vld [vmem:[#allocation3 + $0x91] sm:$0xff]
      %v764 = vld [vmem:[#allocation3 + $0x99] sm:$0xff]
      %v765 = vld [vmem:[#allocation3 + $0xa9] sm:$0xff]
      %v766 = vld [vmem:[#allocation3 + $0xb1] sm:$0xff]
      %v767 = vld [vmem:[#allocation3 + $0xc1] sm:$0xff]
      %v768 = vld [vmem:[#allocation3 + $0xc9] sm:$0xff]
      %v769 = vld [vmem:[#allocation3 + $0xd9] sm:$0xff]
      %v770 = vld [vmem:[#allocation3 + $0xe1] sm:$0xff]
      %v771 = vld [vmem:[#allocation3 + $0xf1] sm:$0xff]
      %v772 = vld [vmem:[#allocation3 + $0xf9] sm:$0xff]
      %v773 = vld [vmem:[#allocation3 + $0x109] sm:$0xff]
      %v774 = vld [vmem:[#allocation3 + $0x111] sm:$0xff]
      %v775 = vld [vmem:[#allocation3 + $0x121] sm:$0xff]
      %v776 = vld [vmem:[#allocation3 + $0x129] sm:$0xff]
      %v777 = vld [vmem:[#allocation3 + $0x139] sm:$0xff]
      %v778 = vld [vmem:[#allocation3 + $0x141] sm:$0xff]
      %v779 = vld [vmem:[#allocation3 + $0x151] sm:$0xff]
      %v780 = vld [vmem:[#allocation3 + $0x159] sm:$0xff]
      %v781 = vld [vmem:[#allocation3 + $0x169] sm:$0xff]
      %v782 = vld [vmem:[#allocation3 + $0x171] sm:$0xff]
      %815 = vrot.lane.b32.xlu0 %v751, 4
      %v816 = vpop.permute.xlu0 %815
      %817 = vrot.lane.b32.xlu0 %v752, 4
      %v818 = vpop.permute.xlu0 %817
      %819 = vrot.lane.b32.xlu0 %v753, 4
      %v820 = vpop.permute.xlu0 %819
      %821 = vrot.lane.b32.xlu0 %v754, 4
      %v822 = vpop.permute.xlu0 %821
      %823 = vrot.lane.b32.xlu0 %v755, 4
      %v824 = vpop.permute.xlu0 %823
      %825 = vrot.lane.b32.xlu0 %v756, 4
      %v826 = vpop.permute.xlu0 %825
      %827 = vrot.lane.b32.xlu0 %v757, 4
      %v828 = vpop.permute.xlu0 %827
      %829 = vrot.lane.b32.xlu0 %v758, 4
      %v830 = vpop.permute.xlu0 %829
      %831 = vrot.lane.b32.xlu0 %v759, 4
      %v832 = vpop.permute.xlu0 %831
      %833 = vrot.lane.b32.xlu0 %v760, 4
      %v834 = vpop.permute.xlu0 %833
      %835 = vrot.lane.b32.xlu0 %v761, 4
      %v836 = vpop.permute.xlu0 %835
      %837 = vrot.lane.b32.xlu0 %v762, 4
      %v838 = vpop.permute.xlu0 %837
      %839 = vrot.lane.b32.xlu0 %v763, 4
      %v840 = vpop.permute.xlu0 %839
      %841 = vrot.lane.b32.xlu0 %v764, 4
      %v842 = vpop.permute.xlu0 %841
      %843 = vrot.lane.b32.xlu0 %v765, 4
      %v844 = vpop.permute.xlu0 %843
      %845 = vrot.lane.b32.xlu0 %v766, 4
      %v846 = vpop.permute.xlu0 %845
      %847 = vrot.lane.b32.xlu0 %v767, 4
      %v848 = vpop.permute.xlu0 %847
      %849 = vrot.lane.b32.xlu0 %v768, 4
      %v850 = vpop.permute.xlu0 %849
      %851 = vrot.lane.b32.xlu0 %v769, 4
      %v852 = vpop.permute.xlu0 %851
      %853 = vrot.lane.b32.xlu0 %v770, 4
      %v854 = vpop.permute.xlu0 %853
      %855 = vrot.lane.b32.xlu0 %v771, 4
      %v856 = vpop.permute.xlu0 %855
      %857 = vrot.lane.b32.xlu0 %v772, 4
      %v858 = vpop.permute.xlu0 %857
      %859 = vrot.lane.b32.xlu0 %v773, 4
      %v860 = vpop.permute.xlu0 %859
      %861 = vrot.lane.b32.xlu0 %v774, 4
      %v862 = vpop.permute.xlu0 %861
      %863 = vrot.lane.b32.xlu0 %v775, 4
      %v864 = vpop.permute.xlu0 %863
      %865 = vrot.lane.b32.xlu0 %v776, 4
      %v866 = vpop.permute.xlu0 %865
      %867 = vrot.lane.b32.xlu0 %v777, 4
      %v868 = vpop.permute.xlu0 %867
      %869 = vrot.lane.b32.xlu0 %v778, 4
      %v870 = vpop.permute.xlu0 %869
      %871 = vrot.lane.b32.xlu0 %v779, 4
      %v872 = vpop.permute.xlu0 %871
      %873 = vrot.lane.b32.xlu0 %v780, 4
      %v874 = vpop.permute.xlu0 %873
      %875 = vrot.lane.b32.xlu0 %v781, 4
      %v876 = vpop.permute.xlu0 %875
      %877 = vrot.lane.b32.xlu0 %v782, 4
      %v878 = vpop.permute.xlu0 %877
      %vm911 = vcmask 64544
      %912 = vst.msk [vmem:[#allocation4] sm:$0xff] %vm911, %v816
      %913 = vst.msk [vmem:[#allocation4 + $0x8] sm:$0xff] %vm911, %v818
      %914 = vst.msk [vmem:[#allocation4 + $0x10] sm:$0xff] %vm911, %v820
      %915 = vst.msk [vmem:[#allocation4 + $0x18] sm:$0xff] %vm911, %v822
      %916 = vst.msk [vmem:[#allocation4 + $0x20] sm:$0xff] %vm911, %v824
      %917 = vst.msk [vmem:[#allocation4 + $0x28] sm:$0xff] %vm911, %v826
      %918 = vst.msk [vmem:[#allocation4 + $0x30] sm:$0xff] %vm911, %v828
      %919 = vst.msk [vmem:[#allocation4 + $0x38] sm:$0xff] %vm911, %v830
      %920 = vst.msk [vmem:[#allocation4 + $0x40] sm:$0xff] %vm911, %v832
      %921 = vst.msk [vmem:[#allocation4 + $0x48] sm:$0xff] %vm911, %v834
      %922 = vst.msk [vmem:[#allocation4 + $0x50] sm:$0xff] %vm911, %v836
      %923 = vst.msk [vmem:[#allocation4 + $0x58] sm:$0xff] %vm911, %v838
      %924 = vst.msk [vmem:[#allocation4 + $0x60] sm:$0xff] %vm911, %v840
      %925 = vst.msk [vmem:[#allocation4 + $0x68] sm:$0xff] %vm911, %v842
      %926 = vst.msk [vmem:[#allocation4 + $0x70] sm:$0xff] %vm911, %v844
      %927 = vst.msk [vmem:[#allocation4 + $0x78] sm:$0xff] %vm911, %v846
      %928 = vst.msk [vmem:[#allocation4 + $0x80] sm:$0xff] %vm911, %v848
      %929 = vst.msk [vmem:[#allocation4 + $0x88] sm:$0xff] %vm911, %v850
      %930 = vst.msk [vmem:[#allocation4 + $0x90] sm:$0xff] %vm911, %v852
      %931 = vst.msk [vmem:[#allocation4 + $0x98] sm:$0xff] %vm911, %v854
      %932 = vst.msk [vmem:[#allocation4 + $0xa0] sm:$0xff] %vm911, %v856
      %933 = vst.msk [vmem:[#allocation4 + $0xa8] sm:$0xff] %vm911, %v858
      %934 = vst.msk [vmem:[#allocation4 + $0xb0] sm:$0xff] %vm911, %v860
      %935 = vst.msk [vmem:[#allocation4 + $0xb8] sm:$0xff] %vm911, %v862
      %936 = vst.msk [vmem:[#allocation4 + $0xc0] sm:$0xff] %vm911, %v864
      %937 = vst.msk [vmem:[#allocation4 + $0xc8] sm:$0xff] %vm911, %v866
      %938 = vst.msk [vmem:[#allocation4 + $0xd0] sm:$0xff] %vm911, %v868
      %939 = vst.msk [vmem:[#allocation4 + $0xd8] sm:$0xff] %vm911, %v870
      %940 = vst.msk [vmem:[#allocation4 + $0xe0] sm:$0xff] %vm911, %v872
      %941 = vst.msk [vmem:[#allocation4 + $0xe8] sm:$0xff] %vm911, %v874
      %942 = vst.msk [vmem:[#allocation4 + $0xf0] sm:$0xff] %vm911, %v876
      %943 = vst.msk [vmem:[#allocation4 + $0xf8] sm:$0xff] %vm911, %v878
      %v944 = vld [vmem:[#allocation3 + $0x2] sm:$0xff]
      %v945 = vld [vmem:[#allocation3 + $0xa] sm:$0xff]
      %v946 = vld [vmem:[#allocation3 + $0x1a] sm:$0xff]
      %v947 = vld [vmem:[#allocation3 + $0x22] sm:$0xff]
      %v948 = vld [vmem:[#allocation3 + $0x32] sm:$0xff]
      %v949 = vld [vmem:[#allocation3 + $0x3a] sm:$0xff]
      %v950 = vld [vmem:[#allocation3 + $0x4a] sm:$0xff]
      %v951 = vld [vmem:[#allocation3 + $0x52] sm:$0xff]
      %v952 = vld [vmem:[#allocation3 + $0x62] sm:$0xff]
      %v953 = vld [vmem:[#allocation3 + $0x6a] sm:$0xff]
      %v954 = vld [vmem:[#allocation3 + $0x7a] sm:$0xff]
      %v955 = vld [vmem:[#allocation3 + $0x82] sm:$0xff]
      %v956 = vld [vmem:[#allocation3 + $0x92] sm:$0xff]
      %v957 = vld [vmem:[#allocation3 + $0x9a] sm:$0xff]
      %v958 = vld [vmem:[#allocation3 + $0xaa] sm:$0xff]
      %v959 = vld [vmem:[#allocation3 + $0xb2] sm:$0xff]
      %v960 = vld [vmem:[#allocation3 + $0xc2] sm:$0xff]
      %v961 = vld [vmem:[#allocation3 + $0xca] sm:$0xff]
      %v962 = vld [vmem:[#allocation3 + $0xda] sm:$0xff]
      %v963 = vld [vmem:[#allocation3 + $0xe2] sm:$0xff]
      %v964 = vld [vmem:[#allocation3 + $0xf2] sm:$0xff]
      %v965 = vld [vmem:[#allocation3 + $0xfa] sm:$0xff]
      %v966 = vld [vmem:[#allocation3 + $0x10a] sm:$0xff]
      %v967 = vld [vmem:[#allocation3 + $0x112] sm:$0xff]
      %v968 = vld [vmem:[#allocation3 + $0x122] sm:$0xff]
      %v969 = vld [vmem:[#allocation3 + $0x12a] sm:$0xff]
      %v970 = vld [vmem:[#allocation3 + $0x13a] sm:$0xff]
      %v971 = vld [vmem:[#allocation3 + $0x142] sm:$0xff]
      %v972 = vld [vmem:[#allocation3 + $0x152] sm:$0xff]
      %v973 = vld [vmem:[#allocation3 + $0x15a] sm:$0xff]
      %v974 = vld [vmem:[#allocation3 + $0x16a] sm:$0xff]
      %v975 = vld [vmem:[#allocation3 + $0x172] sm:$0xff]
      %1008 = vrot.lane.b32.xlu0 %v944, 8
      %v1009 = vpop.permute.xlu0 %1008
      %1010 = vrot.lane.b32.xlu0 %v945, 8
      %v1011 = vpop.permute.xlu0 %1010
      %1012 = vrot.lane.b32.xlu0 %v946, 8
      %v1013 = vpop.permute.xlu0 %1012
      %1014 = vrot.lane.b32.xlu0 %v947, 8
      %v1015 = vpop.permute.xlu0 %1014
      %1016 = vrot.lane.b32.xlu0 %v948, 8
      %v1017 = vpop.permute.xlu0 %1016
      %1018 = vrot.lane.b32.xlu0 %v949, 8
      %v1019 = vpop.permute.xlu0 %1018
      %1020 = vrot.lane.b32.xlu0 %v950, 8
      %v1021 = vpop.permute.xlu0 %1020
      %1022 = vrot.lane.b32.xlu0 %v951, 8
      %v1023 = vpop.permute.xlu0 %1022
      %1024 = vrot.lane.b32.xlu0 %v952, 8
      %v1025 = vpop.permute.xlu0 %1024
      %1026 = vrot.lane.b32.xlu0 %v953, 8
      %v1027 = vpop.permute.xlu0 %1026
      %1028 = vrot.lane.b32.xlu0 %v954, 8
      %v1029 = vpop.permute.xlu0 %1028
      %1030 = vrot.lane.b32.xlu0 %v955, 8
      %v1031 = vpop.permute.xlu0 %1030
      %1032 = vrot.lane.b32.xlu0 %v956, 8
      %v1033 = vpop.permute.xlu0 %1032
      %1034 = vrot.lane.b32.xlu0 %v957, 8
      %v1035 = vpop.permute.xlu0 %1034
      %1036 = vrot.lane.b32.xlu0 %v958, 8
      %v1037 = vpop.permute.xlu0 %1036
      %1038 = vrot.lane.b32.xlu0 %v959, 8
      %v1039 = vpop.permute.xlu0 %1038
      %1040 = vrot.lane.b32.xlu0 %v960, 8
      %v1041 = vpop.permute.xlu0 %1040
      %1042 = vrot.lane.b32.xlu0 %v961, 8
      %v1043 = vpop.permute.xlu0 %1042
      %1044 = vrot.lane.b32.xlu0 %v962, 8
      %v1045 = vpop.permute.xlu0 %1044
      %1046 = vrot.lane.b32.xlu0 %v963, 8
      %v1047 = vpop.permute.xlu0 %1046
      %1048 = vrot.lane.b32.xlu0 %v964, 8
      %v1049 = vpop.permute.xlu0 %1048
      %1050 = vrot.lane.b32.xlu0 %v965, 8
      %v1051 = vpop.permute.xlu0 %1050
      %1052 = vrot.lane.b32.xlu0 %v966, 8
      %v1053 = vpop.permute.xlu0 %1052
      %1054 = vrot.lane.b32.xlu0 %v967, 8
      %v1055 = vpop.permute.xlu0 %1054
      %1056 = vrot.lane.b32.xlu0 %v968, 8
      %v1057 = vpop.permute.xlu0 %1056
      %1058 = vrot.lane.b32.xlu0 %v969, 8
      %v1059 = vpop.permute.xlu0 %1058
      %1060 = vrot.lane.b32.xlu0 %v970, 8
      %v1061 = vpop.permute.xlu0 %1060
      %1062 = vrot.lane.b32.xlu0 %v971, 8
      %v1063 = vpop.permute.xlu0 %1062
      %1064 = vrot.lane.b32.xlu0 %v972, 8
      %v1065 = vpop.permute.xlu0 %1064
      %1066 = vrot.lane.b32.xlu0 %v973, 8
      %v1067 = vpop.permute.xlu0 %1066
      %1068 = vrot.lane.b32.xlu0 %v974, 8
      %v1069 = vpop.permute.xlu0 %1068
      %1070 = vrot.lane.b32.xlu0 %v975, 8
      %v1071 = vpop.permute.xlu0 %1070
      %vm1104 = vcmask 97344
      %1105 = vst.msk [vmem:[#allocation4] sm:$0xff] %vm1104, %v1009
      %1106 = vst.msk [vmem:[#allocation4 + $0x8] sm:$0xff] %vm1104, %v1011
      %1107 = vst.msk [vmem:[#allocation4 + $0x10] sm:$0xff] %vm1104, %v1013
      %1108 = vst.msk [vmem:[#allocation4 + $0x18] sm:$0xff] %vm1104, %v1015
      %1109 = vst.msk [vmem:[#allocation4 + $0x20] sm:$0xff] %vm1104, %v1017
      %1110 = vst.msk [vmem:[#allocation4 + $0x28] sm:$0xff] %vm1104, %v1019
      %1111 = vst.msk [vmem:[#allocation4 + $0x30] sm:$0xff] %vm1104, %v1021
      %1112 = vst.msk [vmem:[#allocation4 + $0x38] sm:$0xff] %vm1104, %v1023
      %1113 = vst.msk [vmem:[#allocation4 + $0x40] sm:$0xff] %vm1104, %v1025
      %1114 = vst.msk [vmem:[#allocation4 + $0x48] sm:$0xff] %vm1104, %v1027
      %1115 = vst.msk [vmem:[#allocation4 + $0x50] sm:$0xff] %vm1104, %v1029
      %1116 = vst.msk [vmem:[#allocation4 + $0x58] sm:$0xff] %vm1104, %v1031
      %1117 = vst.msk [vmem:[#allocation4 + $0x60] sm:$0xff] %vm1104, %v1033
      %1118 = vst.msk [vmem:[#allocation4 + $0x68] sm:$0xff] %vm1104, %v1035
      %1119 = vst.msk [vmem:[#allocation4 + $0x70] sm:$0xff] %vm1104, %v1037
      %1120 = vst.msk [vmem:[#allocation4 + $0x78] sm:$0xff] %vm1104, %v1039
      %1121 = vst.msk [vmem:[#allocation4 + $0x80] sm:$0xff] %vm1104, %v1041
      %1122 = vst.msk [vmem:[#allocation4 + $0x88] sm:$0xff] %vm1104, %v1043
      %1123 = vst.msk [vmem:[#allocation4 + $0x90] sm:$0xff] %vm1104, %v1045
      %1124 = vst.msk [vmem:[#allocation4 + $0x98] sm:$0xff] %vm1104, %v1047
      %1125 = vst.msk [vmem:[#allocation4 + $0xa0] sm:$0xff] %vm1104, %v1049
      %1126 = vst.msk [vmem:[#allocation4 + $0xa8] sm:$0xff] %vm1104, %v1051
      %1127 = vst.msk [vmem:[#allocation4 + $0xb0] sm:$0xff] %vm1104, %v1053
      %1128 = vst.msk [vmem:[#allocation4 + $0xb8] sm:$0xff] %vm1104, %v1055
      %1129 = vst.msk [vmem:[#allocation4 + $0xc0] sm:$0xff] %vm1104, %v1057
      %1130 = vst.msk [vmem:[#allocation4 + $0xc8] sm:$0xff] %vm1104, %v1059
      %1131 = vst.msk [vmem:[#allocation4 + $0xd0] sm:$0xff] %vm1104, %v1061
      %1132 = vst.msk [vmem:[#allocation4 + $0xd8] sm:$0xff] %vm1104, %v1063
      %1133 = vst.msk [vmem:[#allocation4 + $0xe0] sm:$0xff] %vm1104, %v1065
      %1134 = vst.msk [vmem:[#allocation4 + $0xe8] sm:$0xff] %vm1104, %v1067
      %1135 = vst.msk [vmem:[#allocation4 + $0xf0] sm:$0xff] %vm1104, %v1069
      %1136 = vst.msk [vmem:[#allocation4 + $0xf8] sm:$0xff] %vm1104, %v1071
      %v1137 = vld [vmem:[%s654] sm:$0xff]
      %v1138 = vld [vmem:[%s654 + $0x8] sm:$0xff]
      %v1139 = vld [vmem:[%s654 + $0x18] sm:$0xff]
      %v1140 = vld [vmem:[%s654 + $0x20] sm:$0xff]
      %v1141 = vld [vmem:[%s654 + $0x30] sm:$0xff]
      %v1142 = vld [vmem:[%s654 + $0x38] sm:$0xff]
      %v1143 = vld [vmem:[%s654 + $0x48] sm:$0xff]
      %v1144 = vld [vmem:[%s654 + $0x50] sm:$0xff]
      %v1145 = vld [vmem:[%s654 + $0x60] sm:$0xff]
      %v1146 = vld [vmem:[%s654 + $0x68] sm:$0xff]
      %v1147 = vld [vmem:[%s654 + $0x78] sm:$0xff]
      %v1148 = vld [vmem:[%s654 + $0x80] sm:$0xff]
      %v1149 = vld [vmem:[%s654 + $0x90] sm:$0xff]
      %v1150 = vld [vmem:[%s654 + $0x98] sm:$0xff]
      %v1151 = vld [vmem:[%s654 + $0xa8] sm:$0xff]
      %v1152 = vld [vmem:[%s654 + $0xb0] sm:$0xff]
      %v1153 = vld [vmem:[%s654 + $0xc0] sm:$0xff]
      %v1154 = vld [vmem:[%s654 + $0xc8] sm:$0xff]
      %v1155 = vld [vmem:[%s654 + $0xd8] sm:$0xff]
      %v1156 = vld [vmem:[%s654 + $0xe0] sm:$0xff]
      %v1157 = vld [vmem:[%s654 + $0xf0] sm:$0xff]
      %v1158 = vld [vmem:[%s654 + $0xf8] sm:$0xff]
      %v1159 = vld [vmem:[%s654 + $0x108] sm:$0xff]
      %v1160 = vld [vmem:[%s654 + $0x110] sm:$0xff]
      %v1161 = vld [vmem:[%s654 + $0x120] sm:$0xff]
      %v1162 = vld [vmem:[%s654 + $0x128] sm:$0xff]
      %v1163 = vld [vmem:[%s654 + $0x138] sm:$0xff]
      %v1164 = vld [vmem:[%s654 + $0x140] sm:$0xff]
      %v1165 = vld [vmem:[%s654 + $0x150] sm:$0xff]
      %v1166 = vld [vmem:[%s654 + $0x158] sm:$0xff]
      %v1167 = vld [vmem:[%s654 + $0x168] sm:$0xff]
      %v1168 = vld [vmem:[%s654 + $0x170] sm:$0xff]
      %1201 = vrot.lane.b32.xlu0 %v1137, 12
      %v1202 = vpop.permute.xlu0 %1201
      %1203 = vrot.lane.b32.xlu0 %v1138, 12
      %v1204 = vpop.permute.xlu0 %1203
      %1205 = vrot.lane.b32.xlu0 %v1139, 12
      %v1206 = vpop.permute.xlu0 %1205
      %1207 = vrot.lane.b32.xlu0 %v1140, 12
      %v1208 = vpop.permute.xlu0 %1207
      %1209 = vrot.lane.b32.xlu0 %v1141, 12
      %v1210 = vpop.permute.xlu0 %1209
      %1211 = vrot.lane.b32.xlu0 %v1142, 12
      %v1212 = vpop.permute.xlu0 %1211
      %1213 = vrot.lane.b32.xlu0 %v1143, 12
      %v1214 = vpop.permute.xlu0 %1213
      %1215 = vrot.lane.b32.xlu0 %v1144, 12
      %v1216 = vpop.permute.xlu0 %1215
      %1217 = vrot.lane.b32.xlu0 %v1145, 12
      %v1218 = vpop.permute.xlu0 %1217
      %1219 = vrot.lane.b32.xlu0 %v1146, 12
      %v1220 = vpop.permute.xlu0 %1219
      %1221 = vrot.lane.b32.xlu0 %v1147, 12
      %v1222 = vpop.permute.xlu0 %1221
      %1223 = vrot.lane.b32.xlu0 %v1148, 12
      %v1224 = vpop.permute.xlu0 %1223
      %1225 = vrot.lane.b32.xlu0 %v1149, 12
      %v1226 = vpop.permute.xlu0 %1225
      %1227 = vrot.lane.b32.xlu0 %v1150, 12
      %v1228 = vpop.permute.xlu0 %1227
      %1229 = vrot.lane.b32.xlu0 %v1151, 12
      %v1230 = vpop.permute.xlu0 %1229
      %1231 = vrot.lane.b32.xlu0 %v1152, 12
      %v1232 = vpop.permute.xlu0 %1231
      %1233 = vrot.lane.b32.xlu0 %v1153, 12
      %v1234 = vpop.permute.xlu0 %1233
      %1235 = vrot.lane.b32.xlu0 %v1154, 12
      %v1236 = vpop.permute.xlu0 %1235
      %1237 = vrot.lane.b32.xlu0 %v1155, 12
      %v1238 = vpop.permute.xlu0 %1237
      %1239 = vrot.lane.b32.xlu0 %v1156, 12
      %v1240 = vpop.permute.xlu0 %1239
      %1241 = vrot.lane.b32.xlu0 %v1157, 12
      %v1242 = vpop.permute.xlu0 %1241
      %1243 = vrot.lane.b32.xlu0 %v1158, 12
      %v1244 = vpop.permute.xlu0 %1243
      %1245 = vrot.lane.b32.xlu0 %v1159, 12
      %v1246 = vpop.permute.xlu0 %1245
      %1247 = vrot.lane.b32.xlu0 %v1160, 12
      %v1248 = vpop.permute.xlu0 %1247
      %1249 = vrot.lane.b32.xlu0 %v1161, 12
      %v1250 = vpop.permute.xlu0 %1249
      %1251 = vrot.lane.b32.xlu0 %v1162, 12
      %v1252 = vpop.permute.xlu0 %1251
      %1253 = vrot.lane.b32.xlu0 %v1163, 12
      %v1254 = vpop.permute.xlu0 %1253
      %1255 = vrot.lane.b32.xlu0 %v1164, 12
      %v1256 = vpop.permute.xlu0 %1255
      %1257 = vrot.lane.b32.xlu0 %v1165, 12
      %v1258 = vpop.permute.xlu0 %1257
      %1259 = vrot.lane.b32.xlu0 %v1166, 12
      %v1260 = vpop.permute.xlu0 %1259
      %1261 = vrot.lane.b32.xlu0 %v1167, 12
      %v1262 = vpop.permute.xlu0 %1261
      %1263 = vrot.lane.b32.xlu0 %v1168, 12
      %v1264 = vpop.permute.xlu0 %1263
      %vm1297 = vcmask 130144
      %1298 = vst.msk [vmem:[#allocation4] sm:$0xff] %vm1297, %v1202
      %1299 = vst.msk [vmem:[#allocation4 + $0x8] sm:$0xff] %vm1297, %v1204
      %1300 = vst.msk [vmem:[#allocation4 + $0x10] sm:$0xff] %vm1297, %v1206
      %1301 = vst.msk [vmem:[#allocation4 + $0x18] sm:$0xff] %vm1297, %v1208
      %1302 = vst.msk [vmem:[#allocation4 + $0x20] sm:$0xff] %vm1297, %v1210
      %1303 = vst.msk [vmem:[#allocation4 + $0x28] sm:$0xff] %vm1297, %v1212
      %1304 = vst.msk [vmem:[#allocation4 + $0x30] sm:$0xff] %vm1297, %v1214
      %1305 = vst.msk [vmem:[#allocation4 + $0x38] sm:$0xff] %vm1297, %v1216
      %1306 = vst.msk [vmem:[#allocation4 + $0x40] sm:$0xff] %vm1297, %v1218
      %1307 = vst.msk [vmem:[#allocation4 + $0x48] sm:$0xff] %vm1297, %v1220
      %1308 = vst.msk [vmem:[#allocation4 + $0x50] sm:$0xff] %vm1297, %v1222
      %1309 = vst.msk [vmem:[#allocation4 + $0x58] sm:$0xff] %vm1297, %v1224
      %1310 = vst.msk [vmem:[#allocation4 + $0x60] sm:$0xff] %vm1297, %v1226
      %1311 = vst.msk [vmem:[#allocation4 + $0x68] sm:$0xff] %vm1297, %v1228
      %1312 = vst.msk [vmem:[#allocation4 + $0x70] sm:$0xff] %vm1297, %v1230
      %1313 = vst.msk [vmem:[#allocation4 + $0x78] sm:$0xff] %vm1297, %v1232
      %1314 = vst.msk [vmem:[#allocation4 + $0x80] sm:$0xff] %vm1297, %v1234
      %1315 = vst.msk [vmem:[#allocation4 + $0x88] sm:$0xff] %vm1297, %v1236
      %1316 = vst.msk [vmem:[#allocation4 + $0x90] sm:$0xff] %vm1297, %v1238
      %1317 = vst.msk [vmem:[#allocation4 + $0x98] sm:$0xff] %vm1297, %v1240
      %1318 = vst.msk [vmem:[#allocation4 + $0xa0] sm:$0xff] %vm1297, %v1242
      %1319 = vst.msk [vmem:[#allocation4 + $0xa8] sm:$0xff] %vm1297, %v1244
      %1320 = vst.msk [vmem:[#allocation4 + $0xb0] sm:$0xff] %vm1297, %v1246
      %1321 = vst.msk [vmem:[#allocation4 + $0xb8] sm:$0xff] %vm1297, %v1248
      %1322 = vst.msk [vmem:[#allocation4 + $0xc0] sm:$0xff] %vm1297, %v1250
      %1323 = vst.msk [vmem:[#allocation4 + $0xc8] sm:$0xff] %vm1297, %v1252
      %1324 = vst.msk [vmem:[#allocation4 + $0xd0] sm:$0xff] %vm1297, %v1254
      %1325 = vst.msk [vmem:[#allocation4 + $0xd8] sm:$0xff] %vm1297, %v1256
      %1326 = vst.msk [vmem:[#allocation4 + $0xe0] sm:$0xff] %vm1297, %v1258
      %1327 = vst.msk [vmem:[#allocation4 + $0xe8] sm:$0xff] %vm1297, %v1260
      %1328 = vst.msk [vmem:[#allocation4 + $0xf0] sm:$0xff] %vm1297, %v1262
      %1329 = vst.msk [vmem:[#allocation4 + $0xf8] sm:$0xff] %vm1297, %v1264
      %v1330 = vld [vmem:[%s654 + $0x1] sm:$0xff]
      %v1331 = vld [vmem:[%s654 + $0x9] sm:$0xff]
      %v1332 = vld [vmem:[%s654 + $0x19] sm:$0xff]
      %v1333 = vld [vmem:[%s654 + $0x21] sm:$0xff]
      %v1334 = vld [vmem:[%s654 + $0x31] sm:$0xff]
      %v1335 = vld [vmem:[%s654 + $0x39] sm:$0xff]
      %v1336 = vld [vmem:[%s654 + $0x49] sm:$0xff]
      %v1337 = vld [vmem:[%s654 + $0x51] sm:$0xff]
      %v1338 = vld [vmem:[%s654 + $0x61] sm:$0xff]
      %v1339 = vld [vmem:[%s654 + $0x69] sm:$0xff]
      %v1340 = vld [vmem:[%s654 + $0x79] sm:$0xff]
      %v1341 = vld [vmem:[%s654 + $0x81] sm:$0xff]
      %v1342 = vld [vmem:[%s654 + $0x91] sm:$0xff]
      %v1343 = vld [vmem:[%s654 + $0x99] sm:$0xff]
      %v1344 = vld [vmem:[%s654 + $0xa9] sm:$0xff]
      %v1345 = vld [vmem:[%s654 + $0xb1] sm:$0xff]
      %v1346 = vld [vmem:[%s654 + $0xc1] sm:$0xff]
      %v1347 = vld [vmem:[%s654 + $0xc9] sm:$0xff]
      %v1348 = vld [vmem:[%s654 + $0xd9] sm:$0xff]
      %v1349 = vld [vmem:[%s654 + $0xe1] sm:$0xff]
      %v1350 = vld [vmem:[%s654 + $0xf1] sm:$0xff]
      %v1351 = vld [vmem:[%s654 + $0xf9] sm:$0xff]
      %v1352 = vld [vmem:[%s654 + $0x109] sm:$0xff]
      %v1353 = vld [vmem:[%s654 + $0x111] sm:$0xff]
      %v1354 = vld [vmem:[%s654 + $0x121] sm:$0xff]
      %v1355 = vld [vmem:[%s654 + $0x129] sm:$0xff]
      %v1356 = vld [vmem:[%s654 + $0x139] sm:$0xff]
      %v1357 = vld [vmem:[%s654 + $0x141] sm:$0xff]
      %v1358 = vld [vmem:[%s654 + $0x151] sm:$0xff]
      %v1359 = vld [vmem:[%s654 + $0x159] sm:$0xff]
      %v1360 = vld [vmem:[%s654 + $0x169] sm:$0xff]
      %v1361 = vld [vmem:[%s654 + $0x171] sm:$0xff]
      %1394 = vrot.lane.b32.xlu0 %v1330, 16
      %v1395 = vpop.permute.xlu0 %1394
      %1396 = vrot.lane.b32.xlu0 %v1331, 16
      %v1397 = vpop.permute.xlu0 %1396
      %1398 = vrot.lane.b32.xlu0 %v1332, 16
      %v1399 = vpop.permute.xlu0 %1398
      %1400 = vrot.lane.b32.xlu0 %v1333, 16
      %v1401 = vpop.permute.xlu0 %1400
      %1402 = vrot.lane.b32.xlu0 %v1334, 16
      %v1403 = vpop.permute.xlu0 %1402
      %1404 = vrot.lane.b32.xlu0 %v1335, 16
      %v1405 = vpop.permute.xlu0 %1404
      %1406 = vrot.lane.b32.xlu0 %v1336, 16
      %v1407 = vpop.permute.xlu0 %1406
      %1408 = vrot.lane.b32.xlu0 %v1337, 16
      %v1409 = vpop.permute.xlu0 %1408
      %1410 = vrot.lane.b32.xlu0 %v1338, 16
      %v1411 = vpop.permute.xlu0 %1410
      %1412 = vrot.lane.b32.xlu0 %v1339, 16
      %v1413 = vpop.permute.xlu0 %1412
      %1414 = vrot.lane.b32.xlu0 %v1340, 16
      %v1415 = vpop.permute.xlu0 %1414
      %1416 = vrot.lane.b32.xlu0 %v1341, 16
      %v1417 = vpop.permute.xlu0 %1416
      %1418 = vrot.lane.b32.xlu0 %v1342, 16
      %v1419 = vpop.permute.xlu0 %1418
      %1420 = vrot.lane.b32.xlu0 %v1343, 16
      %v1421 = vpop.permute.xlu0 %1420
      %1422 = vrot.lane.b32.xlu0 %v1344, 16
      %v1423 = vpop.permute.xlu0 %1422
      %1424 = vrot.lane.b32.xlu0 %v1345, 16
      %v1425 = vpop.permute.xlu0 %1424
      %1426 = vrot.lane.b32.xlu0 %v1346, 16
      %v1427 = vpop.permute.xlu0 %1426
      %1428 = vrot.lane.b32.xlu0 %v1347, 16
      %v1429 = vpop.permute.xlu0 %1428
      %1430 = vrot.lane.b32.xlu0 %v1348, 16
      %v1431 = vpop.permute.xlu0 %1430
      %1432 = vrot.lane.b32.xlu0 %v1349, 16
      %v1433 = vpop.permute.xlu0 %1432
      %1434 = vrot.lane.b32.xlu0 %v1350, 16
      %v1435 = vpop.permute.xlu0 %1434
      %1436 = vrot.lane.b32.xlu0 %v1351, 16
      %v1437 = vpop.permute.xlu0 %1436
      %1438 = vrot.lane.b32.xlu0 %v1352, 16
      %v1439 = vpop.permute.xlu0 %1438
      %1440 = vrot.lane.b32.xlu0 %v1353, 16
      %v1441 = vpop.permute.xlu0 %1440
      %1442 = vrot.lane.b32.xlu0 %v1354, 16
      %v1443 = vpop.permute.xlu0 %1442
      %1444 = vrot.lane.b32.xlu0 %v1355, 16
      %v1445 = vpop.permute.xlu0 %1444
      %1446 = vrot.lane.b32.xlu0 %v1356, 16
      %v1447 = vpop.permute.xlu0 %1446
      %1448 = vrot.lane.b32.xlu0 %v1357, 16
      %v1449 = vpop.permute.xlu0 %1448
      %1450 = vrot.lane.b32.xlu0 %v1358, 16
      %v1451 = vpop.permute.xlu0 %1450
      %1452 = vrot.lane.b32.xlu0 %v1359, 16
      %v1453 = vpop.permute.xlu0 %1452
      %1454 = vrot.lane.b32.xlu0 %v1360, 16
      %v1455 = vpop.permute.xlu0 %1454
      %1456 = vrot.lane.b32.xlu0 %v1361, 16
      %v1457 = vpop.permute.xlu0 %1456
      %vm1490 = vcmask 162944
      %1491 = vst.msk [vmem:[#allocation4] sm:$0xff] %vm1490, %v1395
      %1492 = vst.msk [vmem:[#allocation4 + $0x8] sm:$0xff] %vm1490, %v1397
      %1493 = vst.msk [vmem:[#allocation4 + $0x10] sm:$0xff] %vm1490, %v1399
      %1494 = vst.msk [vmem:[#allocation4 + $0x18] sm:$0xff] %vm1490, %v1401
      %1495 = vst.msk [vmem:[#allocation4 + $0x20] sm:$0xff] %vm1490, %v1403
      %1496 = vst.msk [vmem:[#allocation4 + $0x28] sm:$0xff] %vm1490, %v1405
      %1497 = vst.msk [vmem:[#allocation4 + $0x30] sm:$0xff] %vm1490, %v1407
      %1498 = vst.msk [vmem:[#allocation4 + $0x38] sm:$0xff] %vm1490, %v1409
      %1499 = vst.msk [vmem:[#allocation4 + $0x40] sm:$0xff] %vm1490, %v1411
      %1500 = vst.msk [vmem:[#allocation4 + $0x48] sm:$0xff] %vm1490, %v1413
      %1501 = vst.msk [vmem:[#allocation4 + $0x50] sm:$0xff] %vm1490, %v1415
      %1502 = vst.msk [vmem:[#allocation4 + $0x58] sm:$0xff] %vm1490, %v1417
      %1503 = vst.msk [vmem:[#allocation4 + $0x60] sm:$0xff] %vm1490, %v1419
      %1504 = vst.msk [vmem:[#allocation4 + $0x68] sm:$0xff] %vm1490, %v1421
      %1505 = vst.msk [vmem:[#allocation4 + $0x70] sm:$0xff] %vm1490, %v1423
      %1506 = vst.msk [vmem:[#allocation4 + $0x78] sm:$0xff] %vm1490, %v1425
      %1507 = vst.msk [vmem:[#allocation4 + $0x80] sm:$0xff] %vm1490, %v1427
      %1508 = vst.msk [vmem:[#allocation4 + $0x88] sm:$0xff] %vm1490, %v1429
      %1509 = vst.msk [vmem:[#allocation4 + $0x90] sm:$0xff] %vm1490, %v1431
      %1510 = vst.msk [vmem:[#allocation4 + $0x98] sm:$0xff] %vm1490, %v1433
      %1511 = vst.msk [vmem:[#allocation4 + $0xa0] sm:$0xff] %vm1490, %v1435
      %1512 = vst.msk [vmem:[#allocation4 + $0xa8] sm:$0xff] %vm1490, %v1437
      %1513 = vst.msk [vmem:[#allocation4 + $0xb0] sm:$0xff] %vm1490, %v1439
      %1514 = vst.msk [vmem:[#allocation4 + $0xb8] sm:$0xff] %vm1490, %v1441
      %1515 = vst.msk [vmem:[#allocation4 + $0xc0] sm:$0xff] %vm1490, %v1443
      %1516 = vst.msk [vmem:[#allocation4 + $0xc8] sm:$0xff] %vm1490, %v1445
      %1517 = vst.msk [vmem:[#allocation4 + $0xd0] sm:$0xff] %vm1490, %v1447
      %1518 = vst.msk [vmem:[#allocation4 + $0xd8] sm:$0xff] %vm1490, %v1449
      %1519 = vst.msk [vmem:[#allocation4 + $0xe0] sm:$0xff] %vm1490, %v1451
      %1520 = vst.msk [vmem:[#allocation4 + $0xe8] sm:$0xff] %vm1490, %v1453
      %1521 = vst.msk [vmem:[#allocation4 + $0xf0] sm:$0xff] %vm1490, %v1455
      %1522 = vst.msk [vmem:[#allocation4 + $0xf8] sm:$0xff] %vm1490, %v1457
      %v1523 = vld [vmem:[%s654 + $0x2] sm:$0xff]
      %v1524 = vld [vmem:[%s654 + $0xa] sm:$0xff]
      %v1525 = vld [vmem:[%s654 + $0x1a] sm:$0xff]
      %v1526 = vld [vmem:[%s654 + $0x22] sm:$0xff]
      %v1527 = vld [vmem:[%s654 + $0x32] sm:$0xff]
      %v1528 = vld [vmem:[%s654 + $0x3a] sm:$0xff]
      %v1529 = vld [vmem:[%s654 + $0x4a] sm:$0xff]
      %v1530 = vld [vmem:[%s654 + $0x52] sm:$0xff]
      %v1531 = vld [vmem:[%s654 + $0x62] sm:$0xff]
      %v1532 = vld [vmem:[%s654 + $0x6a] sm:$0xff]
      %v1533 = vld [vmem:[%s654 + $0x7a] sm:$0xff]
      %v1534 = vld [vmem:[%s654 + $0x82] sm:$0xff]
      %v1535 = vld [vmem:[%s654 + $0x92] sm:$0xff]
      %v1536 = vld [vmem:[%s654 + $0x9a] sm:$0xff]
      %v1537 = vld [vmem:[%s654 + $0xaa] sm:$0xff]
      %v1538 = vld [vmem:[%s654 + $0xb2] sm:$0xff]
      %v1539 = vld [vmem:[%s654 + $0xc2] sm:$0xff]
      %v1540 = vld [vmem:[%s654 + $0xca] sm:$0xff]
      %v1541 = vld [vmem:[%s654 + $0xda] sm:$0xff]
      %v1542 = vld [vmem:[%s654 + $0xe2] sm:$0xff]
      %v1543 = vld [vmem:[%s654 + $0xf2] sm:$0xff]
      %v1544 = vld [vmem:[%s654 + $0xfa] sm:$0xff]
      %v1545 = vld [vmem:[%s654 + $0x10a] sm:$0xff]
      %v1546 = vld [vmem:[%s654 + $0x112] sm:$0xff]
      %v1547 = vld [vmem:[%s654 + $0x122] sm:$0xff]
      %v1548 = vld [vmem:[%s654 + $0x12a] sm:$0xff]
      %v1549 = vld [vmem:[%s654 + $0x13a] sm:$0xff]
      %v1550 = vld [vmem:[%s654 + $0x142] sm:$0xff]
      %v1551 = vld [vmem:[%s654 + $0x152] sm:$0xff]
      %v1552 = vld [vmem:[%s654 + $0x15a] sm:$0xff]
      %v1553 = vld [vmem:[%s654 + $0x16a] sm:$0xff]
      %v1554 = vld [vmem:[%s654 + $0x172] sm:$0xff]
      %1587 = vrot.lane.b32.xlu0 %v1523, 20
      %v1588 = vpop.permute.xlu0 %1587
      %1589 = vrot.lane.b32.xlu0 %v1524, 20
      %v1590 = vpop.permute.xlu0 %1589
      %1591 = vrot.lane.b32.xlu0 %v1525, 20
      %v1592 = vpop.permute.xlu0 %1591
      %1593 = vrot.lane.b32.xlu0 %v1526, 20
      %v1594 = vpop.permute.xlu0 %1593
      %1595 = vrot.lane.b32.xlu0 %v1527, 20
      %v1596 = vpop.permute.xlu0 %1595
      %1597 = vrot.lane.b32.xlu0 %v1528, 20
      %v1598 = vpop.permute.xlu0 %1597
      %1599 = vrot.lane.b32.xlu0 %v1529, 20
      %v1600 = vpop.permute.xlu0 %1599
      %1601 = vrot.lane.b32.xlu0 %v1530, 20
      %v1602 = vpop.permute.xlu0 %1601
      %1603 = vrot.lane.b32.xlu0 %v1531, 20
      %v1604 = vpop.permute.xlu0 %1603
      %1605 = vrot.lane.b32.xlu0 %v1532, 20
      %v1606 = vpop.permute.xlu0 %1605
      %1607 = vrot.lane.b32.xlu0 %v1533, 20
      %v1608 = vpop.permute.xlu0 %1607
      %1609 = vrot.lane.b32.xlu0 %v1534, 20
      %v1610 = vpop.permute.xlu0 %1609
      %1611 = vrot.lane.b32.xlu0 %v1535, 20
      %v1612 = vpop.permute.xlu0 %1611
      %1613 = vrot.lane.b32.xlu0 %v1536, 20
      %v1614 = vpop.permute.xlu0 %1613
      %1615 = vrot.lane.b32.xlu0 %v1537, 20
      %v1616 = vpop.permute.xlu0 %1615
      %1617 = vrot.lane.b32.xlu0 %v1538, 20
      %v1618 = vpop.permute.xlu0 %1617
      %1619 = vrot.lane.b32.xlu0 %v1539, 20
      %v1620 = vpop.permute.xlu0 %1619
      %1621 = vrot.lane.b32.xlu0 %v1540, 20
      %v1622 = vpop.permute.xlu0 %1621
      %1623 = vrot.lane.b32.xlu0 %v1541, 20
      %v1624 = vpop.permute.xlu0 %1623
      %1625 = vrot.lane.b32.xlu0 %v1542, 20
      %v1626 = vpop.permute.xlu0 %1625
      %1627 = vrot.lane.b32.xlu0 %v1543, 20
      %v1628 = vpop.permute.xlu0 %1627
      %1629 = vrot.lane.b32.xlu0 %v1544, 20
      %v1630 = vpop.permute.xlu0 %1629
      %1631 = vrot.lane.b32.xlu0 %v1545, 20
      %v1632 = vpop.permute.xlu0 %1631
      %1633 = vrot.lane.b32.xlu0 %v1546, 20
      %v1634 = vpop.permute.xlu0 %1633
      %1635 = vrot.lane.b32.xlu0 %v1547, 20
      %v1636 = vpop.permute.xlu0 %1635
      %1637 = vrot.lane.b32.xlu0 %v1548, 20
      %v1638 = vpop.permute.xlu0 %1637
      %1639 = vrot.lane.b32.xlu0 %v1549, 20
      %v1640 = vpop.permute.xlu0 %1639
      %1641 = vrot.lane.b32.xlu0 %v1550, 20
      %v1642 = vpop.permute.xlu0 %1641
      %1643 = vrot.lane.b32.xlu0 %v1551, 20
      %v1644 = vpop.permute.xlu0 %1643
      %1645 = vrot.lane.b32.xlu0 %v1552, 20
      %v1646 = vpop.permute.xlu0 %1645
      %1647 = vrot.lane.b32.xlu0 %v1553, 20
      %v1648 = vpop.permute.xlu0 %1647
      %1649 = vrot.lane.b32.xlu0 %v1554, 20
      %v1650 = vpop.permute.xlu0 %1649
      %vm1683 = vcmask 195744
      %1684 = vst.msk [vmem:[#allocation4] sm:$0xff] %vm1683, %v1588
      %1685 = vst.msk [vmem:[#allocation4 + $0x8] sm:$0xff] %vm1683, %v1590
      %1686 = vst.msk [vmem:[#allocation4 + $0x10] sm:$0xff] %vm1683, %v1592
      %1687 = vst.msk [vmem:[#allocation4 + $0x18] sm:$0xff] %vm1683, %v1594
      %1688 = vst.msk [vmem:[#allocation4 + $0x20] sm:$0xff] %vm1683, %v1596
      %1689 = vst.msk [vmem:[#allocation4 + $0x28] sm:$0xff] %vm1683, %v1598
      %1690 = vst.msk [vmem:[#allocation4 + $0x30] sm:$0xff] %vm1683, %v1600
      %1691 = vst.msk [vmem:[#allocation4 + $0x38] sm:$0xff] %vm1683, %v1602
      %1692 = vst.msk [vmem:[#allocation4 + $0x40] sm:$0xff] %vm1683, %v1604
      %1693 = vst.msk [vmem:[#allocation4 + $0x48] sm:$0xff] %vm1683, %v1606
      %1694 = vst.msk [vmem:[#allocation4 + $0x50] sm:$0xff] %vm1683, %v1608
      %1695 = vst.msk [vmem:[#allocation4 + $0x58] sm:$0xff] %vm1683, %v1610
      %1696 = vst.msk [vmem:[#allocation4 + $0x60] sm:$0xff] %vm1683, %v1612
      %1697 = vst.msk [vmem:[#allocation4 + $0x68] sm:$0xff] %vm1683, %v1614
      %1698 = vst.msk [vmem:[#allocation4 + $0x70] sm:$0xff] %vm1683, %v1616
      %1699 = vst.msk [vmem:[#allocation4 + $0x78] sm:$0xff] %vm1683, %v1618
      %1700 = vst.msk [vmem:[#allocation4 + $0x80] sm:$0xff] %vm1683, %v1620
      %1701 = vst.msk [vmem:[#allocation4 + $0x88] sm:$0xff] %vm1683, %v1622
      %1702 = vst.msk [vmem:[#allocation4 + $0x90] sm:$0xff] %vm1683, %v1624
      %1703 = vst.msk [vmem:[#allocation4 + $0x98] sm:$0xff] %vm1683, %v1626
      %1704 = vst.msk [vmem:[#allocation4 + $0xa0] sm:$0xff] %vm1683, %v1628
      %1705 = vst.msk [vmem:[#allocation4 + $0xa8] sm:$0xff] %vm1683, %v1630
      %1706 = vst.msk [vmem:[#allocation4 + $0xb0] sm:$0xff] %vm1683, %v1632
      %1707 = vst.msk [vmem:[#allocation4 + $0xb8] sm:$0xff] %vm1683, %v1634
      %1708 = vst.msk [vmem:[#allocation4 + $0xc0] sm:$0xff] %vm1683, %v1636
      %1709 = vst.msk [vmem:[#allocation4 + $0xc8] sm:$0xff] %vm1683, %v1638
      %1710 = vst.msk [vmem:[#allocation4 + $0xd0] sm:$0xff] %vm1683, %v1640
      %1711 = vst.msk [vmem:[#allocation4 + $0xd8] sm:$0xff] %vm1683, %v1642
      %1712 = vst.msk [vmem:[#allocation4 + $0xe0] sm:$0xff] %vm1683, %v1644
      %1713 = vst.msk [vmem:[#allocation4 + $0xe8] sm:$0xff] %vm1683, %v1646
      %1714 = vst.msk [vmem:[#allocation4 + $0xf0] sm:$0xff] %vm1683, %v1648
      %1715 = vst.msk [vmem:[#allocation4 + $0xf8] sm:$0xff] %vm1683, %v1650
      %s1716 = scalar_lea.vmem [#allocation3], 48
      %v1717 = vld [vmem:[%s1716] sm:$0xff]
      %v1718 = vld [vmem:[%s1716 + $0x8] sm:$0xff]
      %v1719 = vld [vmem:[%s1716 + $0x18] sm:$0xff]
      %v1720 = vld [vmem:[%s1716 + $0x20] sm:$0xff]
      %v1721 = vld [vmem:[%s1716 + $0x30] sm:$0xff]
      %v1722 = vld [vmem:[%s1716 + $0x38] sm:$0xff]
      %v1723 = vld [vmem:[%s1716 + $0x48] sm:$0xff]
      %v1724 = vld [vmem:[%s1716 + $0x50] sm:$0xff]
      %v1725 = vld [vmem:[%s1716 + $0x60] sm:$0xff]
      %v1726 = vld [vmem:[%s1716 + $0x68] sm:$0xff]
      %v1727 = vld [vmem:[%s1716 + $0x78] sm:$0xff]
      %v1728 = vld [vmem:[%s1716 + $0x80] sm:$0xff]
      %v1729 = vld [vmem:[%s1716 + $0x90] sm:$0xff]
      %v1730 = vld [vmem:[%s1716 + $0x98] sm:$0xff]
      %v1731 = vld [vmem:[%s1716 + $0xa8] sm:$0xff]
      %v1732 = vld [vmem:[%s1716 + $0xb0] sm:$0xff]
      %v1733 = vld [vmem:[%s1716 + $0xc0] sm:$0xff]
      %v1734 = vld [vmem:[%s1716 + $0xc8] sm:$0xff]
      %v1735 = vld [vmem:[%s1716 + $0xd8] sm:$0xff]
      %v1736 = vld [vmem:[%s1716 + $0xe0] sm:$0xff]
      %v1737 = vld [vmem:[%s1716 + $0xf0] sm:$0xff]
      %v1738 = vld [vmem:[%s1716 + $0xf8] sm:$0xff]
      %v1739 = vld [vmem:[%s1716 + $0x108] sm:$0xff]
      %v1740 = vld [vmem:[%s1716 + $0x110] sm:$0xff]
      %v1741 = vld [vmem:[%s1716 + $0x120] sm:$0xff]
      %v1742 = vld [vmem:[%s1716 + $0x128] sm:$0xff]
      %v1743 = vld [vmem:[%s1716 + $0x138] sm:$0xff]
      %v1744 = vld [vmem:[%s1716 + $0x140] sm:$0xff]
      %v1745 = vld [vmem:[%s1716 + $0x150] sm:$0xff]
      %v1746 = vld [vmem:[%s1716 + $0x158] sm:$0xff]
      %v1747 = vld [vmem:[%s1716 + $0x168] sm:$0xff]
      %v1748 = vld [vmem:[%s1716 + $0x170] sm:$0xff]
      %1781 = vrot.lane.b32.xlu0 %v1717, 24
      %v1782 = vpop.permute.xlu0 %1781
      %1783 = vrot.lane.b32.xlu0 %v1718, 24
      %v1784 = vpop.permute.xlu0 %1783
      %1785 = vrot.lane.b32.xlu0 %v1719, 24
      %v1786 = vpop.permute.xlu0 %1785
      %1787 = vrot.lane.b32.xlu0 %v1720, 24
      %v1788 = vpop.permute.xlu0 %1787
      %1789 = vrot.lane.b32.xlu0 %v1721, 24
      %v1790 = vpop.permute.xlu0 %1789
      %1791 = vrot.lane.b32.xlu0 %v1722, 24
      %v1792 = vpop.permute.xlu0 %1791
      %1793 = vrot.lane.b32.xlu0 %v1723, 24
      %v1794 = vpop.permute.xlu0 %1793
      %1795 = vrot.lane.b32.xlu0 %v1724, 24
      %v1796 = vpop.permute.xlu0 %1795
      %1797 = vrot.lane.b32.xlu0 %v1725, 24
      %v1798 = vpop.permute.xlu0 %1797
      %1799 = vrot.lane.b32.xlu0 %v1726, 24
      %v1800 = vpop.permute.xlu0 %1799
      %1801 = vrot.lane.b32.xlu0 %v1727, 24
      %v1802 = vpop.permute.xlu0 %1801
      %1803 = vrot.lane.b32.xlu0 %v1728, 24
      %v1804 = vpop.permute.xlu0 %1803
      %1805 = vrot.lane.b32.xlu0 %v1729, 24
      %v1806 = vpop.permute.xlu0 %1805
      %1807 = vrot.lane.b32.xlu0 %v1730, 24
      %v1808 = vpop.permute.xlu0 %1807
      %1809 = vrot.lane.b32.xlu0 %v1731, 24
      %v1810 = vpop.permute.xlu0 %1809
      %1811 = vrot.lane.b32.xlu0 %v1732, 24
      %v1812 = vpop.permute.xlu0 %1811
      %1813 = vrot.lane.b32.xlu0 %v1733, 24
      %v1814 = vpop.permute.xlu0 %1813
      %1815 = vrot.lane.b32.xlu0 %v1734, 24
      %v1816 = vpop.permute.xlu0 %1815
      %1817 = vrot.lane.b32.xlu0 %v1735, 24
      %v1818 = vpop.permute.xlu0 %1817
      %1819 = vrot.lane.b32.xlu0 %v1736, 24
      %v1820 = vpop.permute.xlu0 %1819
      %1821 = vrot.lane.b32.xlu0 %v1737, 24
      %v1822 = vpop.permute.xlu0 %1821
      %1823 = vrot.lane.b32.xlu0 %v1738, 24
      %v1824 = vpop.permute.xlu0 %1823
      %1825 = vrot.lane.b32.xlu0 %v1739, 24
      %v1826 = vpop.permute.xlu0 %1825
      %1827 = vrot.lane.b32.xlu0 %v1740, 24
      %v1828 = vpop.permute.xlu0 %1827
      %1829 = vrot.lane.b32.xlu0 %v1741, 24
      %v1830 = vpop.permute.xlu0 %1829
      %1831 = vrot.lane.b32.xlu0 %v1742, 24
      %v1832 = vpop.permute.xlu0 %1831
      %1833 = vrot.lane.b32.xlu0 %v1743, 24
      %v1834 = vpop.permute.xlu0 %1833
      %1835 = vrot.lane.b32.xlu0 %v1744, 24
      %v1836 = vpop.permute.xlu0 %1835
      %1837 = vrot.lane.b32.xlu0 %v1745, 24
      %v1838 = vpop.permute.xlu0 %1837
      %1839 = vrot.lane.b32.xlu0 %v1746, 24
      %v1840 = vpop.permute.xlu0 %1839
      %1841 = vrot.lane.b32.xlu0 %v1747, 24
      %v1842 = vpop.permute.xlu0 %1841
      %1843 = vrot.lane.b32.xlu0 %v1748, 24
      %v1844 = vpop.permute.xlu0 %1843
      %vm1877 = vcmask 228544
      %1878 = vst.msk [vmem:[#allocation4] sm:$0xff] %vm1877, %v1782
      %1879 = vst.msk [vmem:[#allocation4 + $0x8] sm:$0xff] %vm1877, %v1784
      %1880 = vst.msk [vmem:[#allocation4 + $0x10] sm:$0xff] %vm1877, %v1786
      %1881 = vst.msk [vmem:[#allocation4 + $0x18] sm:$0xff] %vm1877, %v1788
      %1882 = vst.msk [vmem:[#allocation4 + $0x20] sm:$0xff] %vm1877, %v1790
      %1883 = vst.msk [vmem:[#allocation4 + $0x28] sm:$0xff] %vm1877, %v1792
      %1884 = vst.msk [vmem:[#allocation4 + $0x30] sm:$0xff] %vm1877, %v1794
      %1885 = vst.msk [vmem:[#allocation4 + $0x38] sm:$0xff] %vm1877, %v1796
      %1886 = vst.msk [vmem:[#allocation4 + $0x40] sm:$0xff] %vm1877, %v1798
      %1887 = vst.msk [vmem:[#allocation4 + $0x48] sm:$0xff] %vm1877, %v1800
      %1888 = vst.msk [vmem:[#allocation4 + $0x50] sm:$0xff] %vm1877, %v1802
      %1889 = vst.msk [vmem:[#allocation4 + $0x58] sm:$0xff] %vm1877, %v1804
      %1890 = vst.msk [vmem:[#allocation4 + $0x60] sm:$0xff] %vm1877, %v1806
      %1891 = vst.msk [vmem:[#allocation4 + $0x68] sm:$0xff] %vm1877, %v1808
      %1892 = vst.msk [vmem:[#allocation4 + $0x70] sm:$0xff] %vm1877, %v1810
      %1893 = vst.msk [vmem:[#allocation4 + $0x78] sm:$0xff] %vm1877, %v1812
      %1894 = vst.msk [vmem:[#allocation4 + $0x80] sm:$0xff] %vm1877, %v1814
      %1895 = vst.msk [vmem:[#allocation4 + $0x88] sm:$0xff] %vm1877, %v1816
      %1896 = vst.msk [vmem:[#allocation4 + $0x90] sm:$0xff] %vm1877, %v1818
      %1897 = vst.msk [vmem:[#allocation4 + $0x98] sm:$0xff] %vm1877, %v1820
      %1898 = vst.msk [vmem:[#allocation4 + $0xa0] sm:$0xff] %vm1877, %v1822
      %1899 = vst.msk [vmem:[#allocation4 + $0xa8] sm:$0xff] %vm1877, %v1824
      %1900 = vst.msk [vmem:[#allocation4 + $0xb0] sm:$0xff] %vm1877, %v1826
      %1901 = vst.msk [vmem:[#allocation4 + $0xb8] sm:$0xff] %vm1877, %v1828
      %1902 = vst.msk [vmem:[#allocation4 + $0xc0] sm:$0xff] %vm1877, %v1830
      %1903 = vst.msk [vmem:[#allocation4 + $0xc8] sm:$0xff] %vm1877, %v1832
      %1904 = vst.msk [vmem:[#allocation4 + $0xd0] sm:$0xff] %vm1877, %v1834
      %1905 = vst.msk [vmem:[#allocation4 + $0xd8] sm:$0xff] %vm1877, %v1836
      %1906 = vst.msk [vmem:[#allocation4 + $0xe0] sm:$0xff] %vm1877, %v1838
      %1907 = vst.msk [vmem:[#allocation4 + $0xe8] sm:$0xff] %vm1877, %v1840
      %1908 = vst.msk [vmem:[#allocation4 + $0xf0] sm:$0xff] %vm1877, %v1842
      %1909 = vst.msk [vmem:[#allocation4 + $0xf8] sm:$0xff] %vm1877, %v1844
      %v1910 = vld [vmem:[%s1716 + $0x1] sm:$0xff]
      %v1911 = vld [vmem:[%s1716 + $0x9] sm:$0xff]
      %v1912 = vld [vmem:[%s1716 + $0x19] sm:$0xff]
      %v1913 = vld [vmem:[%s1716 + $0x21] sm:$0xff]
      %v1914 = vld [vmem:[%s1716 + $0x31] sm:$0xff]
      %v1915 = vld [vmem:[%s1716 + $0x39] sm:$0xff]
      %v1916 = vld [vmem:[%s1716 + $0x49] sm:$0xff]
      %v1917 = vld [vmem:[%s1716 + $0x51] sm:$0xff]
      %v1918 = vld [vmem:[%s1716 + $0x61] sm:$0xff]
      %v1919 = vld [vmem:[%s1716 + $0x69] sm:$0xff]
      %v1920 = vld [vmem:[%s1716 + $0x79] sm:$0xff]
      %v1921 = vld [vmem:[%s1716 + $0x81] sm:$0xff]
      %v1922 = vld [vmem:[%s1716 + $0x91] sm:$0xff]
      %v1923 = vld [vmem:[%s1716 + $0x99] sm:$0xff]
      %v1924 = vld [vmem:[%s1716 + $0xa9] sm:$0xff]
      %v1925 = vld [vmem:[%s1716 + $0xb1] sm:$0xff]
      %v1926 = vld [vmem:[%s1716 + $0xc1] sm:$0xff]
      %v1927 = vld [vmem:[%s1716 + $0xc9] sm:$0xff]
      %v1928 = vld [vmem:[%s1716 + $0xd9] sm:$0xff]
      %v1929 = vld [vmem:[%s1716 + $0xe1] sm:$0xff]
      %v1930 = vld [vmem:[%s1716 + $0xf1] sm:$0xff]
      %v1931 = vld [vmem:[%s1716 + $0xf9] sm:$0xff]
      %v1932 = vld [vmem:[%s1716 + $0x109] sm:$0xff]
      %v1933 = vld [vmem:[%s1716 + $0x111] sm:$0xff]
      %v1934 = vld [vmem:[%s1716 + $0x121] sm:$0xff]
      %v1935 = vld [vmem:[%s1716 + $0x129] sm:$0xff]
      %v1936 = vld [vmem:[%s1716 + $0x139] sm:$0xff]
      %v1937 = vld [vmem:[%s1716 + $0x141] sm:$0xff]
      %v1938 = vld [vmem:[%s1716 + $0x151] sm:$0xff]
      %v1939 = vld [vmem:[%s1716 + $0x159] sm:$0xff]
      %v1940 = vld [vmem:[%s1716 + $0x169] sm:$0xff]
      %v1941 = vld [vmem:[%s1716 + $0x171] sm:$0xff]
      %1974 = vrot.lane.b32.xlu0 %v1910, 28
      %v1975 = vpop.permute.xlu0 %1974
      %1976 = vrot.lane.b32.xlu0 %v1911, 28
      %v1977 = vpop.permute.xlu0 %1976
      %1978 = vrot.lane.b32.xlu0 %v1912, 28
      %v1979 = vpop.permute.xlu0 %1978
      %1980 = vrot.lane.b32.xlu0 %v1913, 28
      %v1981 = vpop.permute.xlu0 %1980
      %1982 = vrot.lane.b32.xlu0 %v1914, 28
      %v1983 = vpop.permute.xlu0 %1982
      %1984 = vrot.lane.b32.xlu0 %v1915, 28
      %v1985 = vpop.permute.xlu0 %1984
      %1986 = vrot.lane.b32.xlu0 %v1916, 28
      %v1987 = vpop.permute.xlu0 %1986
      %1988 = vrot.lane.b32.xlu0 %v1917, 28
      %v1989 = vpop.permute.xlu0 %1988
      %1990 = vrot.lane.b32.xlu0 %v1918, 28
      %v1991 = vpop.permute.xlu0 %1990
      %1992 = vrot.lane.b32.xlu0 %v1919, 28
      %v1993 = vpop.permute.xlu0 %1992
      %1994 = vrot.lane.b32.xlu0 %v1920, 28
      %v1995 = vpop.permute.xlu0 %1994
      %1996 = vrot.lane.b32.xlu0 %v1921, 28
      %v1997 = vpop.permute.xlu0 %1996
      %1998 = vrot.lane.b32.xlu0 %v1922, 28
      %v1999 = vpop.permute.xlu0 %1998
      %2000 = vrot.lane.b32.xlu0 %v1923, 28
      %v2001 = vpop.permute.xlu0 %2000
      %2002 = vrot.lane.b32.xlu0 %v1924, 28
      %v2003 = vpop.permute.xlu0 %2002
      %2004 = vrot.lane.b32.xlu0 %v1925, 28
      %v2005 = vpop.permute.xlu0 %2004
      %2006 = vrot.lane.b32.xlu0 %v1926, 28
      %v2007 = vpop.permute.xlu0 %2006
      %2008 = vrot.lane.b32.xlu0 %v1927, 28
      %v2009 = vpop.permute.xlu0 %2008
      %2010 = vrot.lane.b32.xlu0 %v1928, 28
      %v2011 = vpop.permute.xlu0 %2010
      %2012 = vrot.lane.b32.xlu0 %v1929, 28
      %v2013 = vpop.permute.xlu0 %2012
      %2014 = vrot.lane.b32.xlu0 %v1930, 28
      %v2015 = vpop.permute.xlu0 %2014
      %2016 = vrot.lane.b32.xlu0 %v1931, 28
      %v2017 = vpop.permute.xlu0 %2016
      %2018 = vrot.lane.b32.xlu0 %v1932, 28
      %v2019 = vpop.permute.xlu0 %2018
      %2020 = vrot.lane.b32.xlu0 %v1933, 28
      %v2021 = vpop.permute.xlu0 %2020
      %2022 = vrot.lane.b32.xlu0 %v1934, 28
      %v2023 = vpop.permute.xlu0 %2022
      %2024 = vrot.lane.b32.xlu0 %v1935, 28
      %v2025 = vpop.permute.xlu0 %2024
      %2026 = vrot.lane.b32.xlu0 %v1936, 28
      %v2027 = vpop.permute.xlu0 %2026
      %2028 = vrot.lane.b32.xlu0 %v1937, 28
      %v2029 = vpop.permute.xlu0 %2028
      %2030 = vrot.lane.b32.xlu0 %v1938, 28
      %v2031 = vpop.permute.xlu0 %2030
      %2032 = vrot.lane.b32.xlu0 %v1939, 28
      %v2033 = vpop.permute.xlu0 %2032
      %2034 = vrot.lane.b32.xlu0 %v1940, 28
      %v2035 = vpop.permute.xlu0 %2034
      %2036 = vrot.lane.b32.xlu0 %v1941, 28
      %v2037 = vpop.permute.xlu0 %2036
      %vm2070 = vcmask 261344
      %2071 = vst.msk [vmem:[#allocation4] sm:$0xff] %vm2070, %v1975
      %2072 = vst.msk [vmem:[#allocation4 + $0x8] sm:$0xff] %vm2070, %v1977
      %2073 = vst.msk [vmem:[#allocation4 + $0x10] sm:$0xff] %vm2070, %v1979
      %2074 = vst.msk [vmem:[#allocation4 + $0x18] sm:$0xff] %vm2070, %v1981
      %2075 = vst.msk [vmem:[#allocation4 + $0x20] sm:$0xff] %vm2070, %v1983
      %2076 = vst.msk [vmem:[#allocation4 + $0x28] sm:$0xff] %vm2070, %v1985
      %2077 = vst.msk [vmem:[#allocation4 + $0x30] sm:$0xff] %vm2070, %v1987
      %2078 = vst.msk [vmem:[#allocation4 + $0x38] sm:$0xff] %vm2070, %v1989
      %2079 = vst.msk [vmem:[#allocation4 + $0x40] sm:$0xff] %vm2070, %v1991
      %2080 = vst.msk [vmem:[#allocation4 + $0x48] sm:$0xff] %vm2070, %v1993
      %2081 = vst.msk [vmem:[#allocation4 + $0x50] sm:$0xff] %vm2070, %v1995
      %2082 = vst.msk [vmem:[#allocation4 + $0x58] sm:$0xff] %vm2070, %v1997
      %2083 = vst.msk [vmem:[#allocation4 + $0x60] sm:$0xff] %vm2070, %v1999
      %2084 = vst.msk [vmem:[#allocation4 + $0x68] sm:$0xff] %vm2070, %v2001
      %2085 = vst.msk [vmem:[#allocation4 + $0x70] sm:$0xff] %vm2070, %v2003
      %2086 = vst.msk [vmem:[#allocation4 + $0x78] sm:$0xff] %vm2070, %v2005
      %2087 = vst.msk [vmem:[#allocation4 + $0x80] sm:$0xff] %vm2070, %v2007
      %2088 = vst.msk [vmem:[#allocation4 + $0x88] sm:$0xff] %vm2070, %v2009
      %2089 = vst.msk [vmem:[#allocation4 + $0x90] sm:$0xff] %vm2070, %v2011
      %2090 = vst.msk [vmem:[#allocation4 + $0x98] sm:$0xff] %vm2070, %v2013
      %2091 = vst.msk [vmem:[#allocation4 + $0xa0] sm:$0xff] %vm2070, %v2015
      %2092 = vst.msk [vmem:[#allocation4 + $0xa8] sm:$0xff] %vm2070, %v2017
      %2093 = vst.msk [vmem:[#allocation4 + $0xb0] sm:$0xff] %vm2070, %v2019
      %2094 = vst.msk [vmem:[#allocation4 + $0xb8] sm:$0xff] %vm2070, %v2021
      %2095 = vst.msk [vmem:[#allocation4 + $0xc0] sm:$0xff] %vm2070, %v2023
      %2096 = vst.msk [vmem:[#allocation4 + $0xc8] sm:$0xff] %vm2070, %v2025
      %2097 = vst.msk [vmem:[#allocation4 + $0xd0] sm:$0xff] %vm2070, %v2027
      %2098 = vst.msk [vmem:[#allocation4 + $0xd8] sm:$0xff] %vm2070, %v2029
      %2099 = vst.msk [vmem:[#allocation4 + $0xe0] sm:$0xff] %vm2070, %v2031
      %2100 = vst.msk [vmem:[#allocation4 + $0xe8] sm:$0xff] %vm2070, %v2033
      %2101 = vst.msk [vmem:[#allocation4 + $0xf0] sm:$0xff] %vm2070, %v2035
      %2102 = vst.msk [vmem:[#allocation4 + $0xf8] sm:$0xff] %vm2070, %v2037
      %v2103 = vld [vmem:[%s1716 + $0x2] sm:$0xff]
      %v2104 = vld [vmem:[%s1716 + $0xa] sm:$0xff]
      %v2105 = vld [vmem:[%s1716 + $0x1a] sm:$0xff]
      %v2106 = vld [vmem:[%s1716 + $0x22] sm:$0xff]
      %v2107 = vld [vmem:[%s1716 + $0x32] sm:$0xff]
      %v2108 = vld [vmem:[%s1716 + $0x3a] sm:$0xff]
      %v2109 = vld [vmem:[%s1716 + $0x4a] sm:$0xff]
      %v2110 = vld [vmem:[%s1716 + $0x52] sm:$0xff]
      %v2111 = vld [vmem:[%s1716 + $0x62] sm:$0xff]
      %v2112 = vld [vmem:[%s1716 + $0x6a] sm:$0xff]
      %v2113 = vld [vmem:[%s1716 + $0x7a] sm:$0xff]
      %v2114 = vld [vmem:[%s1716 + $0x82] sm:$0xff]
      %v2115 = vld [vmem:[%s1716 + $0x92] sm:$0xff]
      %v2116 = vld [vmem:[%s1716 + $0x9a] sm:$0xff]
      %v2117 = vld [vmem:[%s1716 + $0xaa] sm:$0xff]
      %v2118 = vld [vmem:[%s1716 + $0xb2] sm:$0xff]
      %v2119 = vld [vmem:[%s1716 + $0xc2] sm:$0xff]
      %v2120 = vld [vmem:[%s1716 + $0xca] sm:$0xff]
      %v2121 = vld [vmem:[%s1716 + $0xda] sm:$0xff]
      %v2122 = vld [vmem:[%s1716 + $0xe2] sm:$0xff]
      %v2123 = vld [vmem:[%s1716 + $0xf2] sm:$0xff]
      %v2124 = vld [vmem:[%s1716 + $0xfa] sm:$0xff]
      %v2125 = vld [vmem:[%s1716 + $0x10a] sm:$0xff]
      %v2126 = vld [vmem:[%s1716 + $0x112] sm:$0xff]
      %v2127 = vld [vmem:[%s1716 + $0x122] sm:$0xff]
      %v2128 = vld [vmem:[%s1716 + $0x12a] sm:$0xff]
      %v2129 = vld [vmem:[%s1716 + $0x13a] sm:$0xff]
      %v2130 = vld [vmem:[%s1716 + $0x142] sm:$0xff]
      %v2131 = vld [vmem:[%s1716 + $0x152] sm:$0xff]
      %v2132 = vld [vmem:[%s1716 + $0x15a] sm:$0xff]
      %v2133 = vld [vmem:[%s1716 + $0x16a] sm:$0xff]
      %v2134 = vld [vmem:[%s1716 + $0x172] sm:$0xff]
      %2167 = vrot.lane.b32.xlu0 %v2103, 32
      %v2168 = vpop.permute.xlu0 %2167
      %2169 = vrot.lane.b32.xlu0 %v2104, 32
      %v2170 = vpop.permute.xlu0 %2169
      %2171 = vrot.lane.b32.xlu0 %v2105, 32
      %v2172 = vpop.permute.xlu0 %2171
      %2173 = vrot.lane.b32.xlu0 %v2106, 32
      %v2174 = vpop.permute.xlu0 %2173
      %2175 = vrot.lane.b32.xlu0 %v2107, 32
      %v2176 = vpop.permute.xlu0 %2175
      %2177 = vrot.lane.b32.xlu0 %v2108, 32
      %v2178 = vpop.permute.xlu0 %2177
      %2179 = vrot.lane.b32.xlu0 %v2109, 32
      %v2180 = vpop.permute.xlu0 %2179
      %2181 = vrot.lane.b32.xlu0 %v2110, 32
      %v2182 = vpop.permute.xlu0 %2181
      %2183 = vrot.lane.b32.xlu0 %v2111, 32
      %v2184 = vpop.permute.xlu0 %2183
      %2185 = vrot.lane.b32.xlu0 %v2112, 32
      %v2186 = vpop.permute.xlu0 %2185
      %2187 = vrot.lane.b32.xlu0 %v2113, 32
      %v2188 = vpop.permute.xlu0 %2187
      %2189 = vrot.lane.b32.xlu0 %v2114, 32
      %v2190 = vpop.permute.xlu0 %2189
      %2191 = vrot.lane.b32.xlu0 %v2115, 32
      %v2192 = vpop.permute.xlu0 %2191
      %2193 = vrot.lane.b32.xlu0 %v2116, 32
      %v2194 = vpop.permute.xlu0 %2193
      %2195 = vrot.lane.b32.xlu0 %v2117, 32
      %v2196 = vpop.permute.xlu0 %2195
      %2197 = vrot.lane.b32.xlu0 %v2118, 32
      %v2198 = vpop.permute.xlu0 %2197
      %2199 = vrot.lane.b32.xlu0 %v2119, 32
      %v2200 = vpop.permute.xlu0 %2199
      %2201 = vrot.lane.b32.xlu0 %v2120, 32
      %v2202 = vpop.permute.xlu0 %2201
      %2203 = vrot.lane.b32.xlu0 %v2121, 32
      %v2204 = vpop.permute.xlu0 %2203
      %2205 = vrot.lane.b32.xlu0 %v2122, 32
      %v2206 = vpop.permute.xlu0 %2205
      %2207 = vrot.lane.b32.xlu0 %v2123, 32
      %v2208 = vpop.permute.xlu0 %2207
      %2209 = vrot.lane.b32.xlu0 %v2124, 32
      %v2210 = vpop.permute.xlu0 %2209
      %2211 = vrot.lane.b32.xlu0 %v2125, 32
      %v2212 = vpop.permute.xlu0 %2211
      %2213 = vrot.lane.b32.xlu0 %v2126, 32
      %v2214 = vpop.permute.xlu0 %2213
      %2215 = vrot.lane.b32.xlu0 %v2127, 32
      %v2216 = vpop.permute.xlu0 %2215
      %2217 = vrot.lane.b32.xlu0 %v2128, 32
      %v2218 = vpop.permute.xlu0 %2217
      %2219 = vrot.lane.b32.xlu0 %v2129, 32
      %v2220 = vpop.permute.xlu0 %2219
      %2221 = vrot.lane.b32.xlu0 %v2130, 32
      %v2222 = vpop.permute.xlu0 %2221
      %2223 = vrot.lane.b32.xlu0 %v2131, 32
      %v2224 = vpop.permute.xlu0 %2223
      %2225 = vrot.lane.b32.xlu0 %v2132, 32
      %v2226 = vpop.permute.xlu0 %2225
      %2227 = vrot.lane.b32.xlu0 %v2133, 32
      %v2228 = vpop.permute.xlu0 %2227
      %2229 = vrot.lane.b32.xlu0 %v2134, 32
      %v2230 = vpop.permute.xlu0 %2229
      %vm2263 = vcmask 294144
      %2264 = vst.msk [vmem:[#allocation4] sm:$0xff] %vm2263, %v2168
      %2265 = vst.msk [vmem:[#allocation4 + $0x8] sm:$0xff] %vm2263, %v2170
      %2266 = vst.msk [vmem:[#allocation4 + $0x10] sm:$0xff] %vm2263, %v2172
      %2267 = vst.msk [vmem:[#allocation4 + $0x18] sm:$0xff] %vm2263, %v2174
      %2268 = vst.msk [vmem:[#allocation4 + $0x20] sm:$0xff] %vm2263, %v2176
      %2269 = vst.msk [vmem:[#allocation4 + $0x28] sm:$0xff] %vm2263, %v2178
      %2270 = vst.msk [vmem:[#allocation4 + $0x30] sm:$0xff] %vm2263, %v2180
      %2271 = vst.msk [vmem:[#allocation4 + $0x38] sm:$0xff] %vm2263, %v2182
      %2272 = vst.msk [vmem:[#allocation4 + $0x40] sm:$0xff] %vm2263, %v2184
      %2273 = vst.msk [vmem:[#allocation4 + $0x48] sm:$0xff] %vm2263, %v2186
      %2274 = vst.msk [vmem:[#allocation4 + $0x50] sm:$0xff] %vm2263, %v2188
      %2275 = vst.msk [vmem:[#allocation4 + $0x58] sm:$0xff] %vm2263, %v2190
      %2276 = vst.msk [vmem:[#allocation4 + $0x60] sm:$0xff] %vm2263, %v2192
      %2277 = vst.msk [vmem:[#allocation4 + $0x68] sm:$0xff] %vm2263, %v2194
      %2278 = vst.msk [vmem:[#allocation4 + $0x70] sm:$0xff] %vm2263, %v2196
      %2279 = vst.msk [vmem:[#allocation4 + $0x78] sm:$0xff] %vm2263, %v2198
      %2280 = vst.msk [vmem:[#allocation4 + $0x80] sm:$0xff] %vm2263, %v2200
      %2281 = vst.msk [vmem:[#allocation4 + $0x88] sm:$0xff] %vm2263, %v2202
      %2282 = vst.msk [vmem:[#allocation4 + $0x90] sm:$0xff] %vm2263, %v2204
      %2283 = vst.msk [vmem:[#allocation4 + $0x98] sm:$0xff] %vm2263, %v2206
      %2284 = vst.msk [vmem:[#allocation4 + $0xa0] sm:$0xff] %vm2263, %v2208
      %2285 = vst.msk [vmem:[#allocation4 + $0xa8] sm:$0xff] %vm2263, %v2210
      %2286 = vst.msk [vmem:[#allocation4 + $0xb0] sm:$0xff] %vm2263, %v2212
      %2287 = vst.msk [vmem:[#allocation4 + $0xb8] sm:$0xff] %vm2263, %v2214
      %2288 = vst.msk [vmem:[#allocation4 + $0xc0] sm:$0xff] %vm2263, %v2216
      %2289 = vst.msk [vmem:[#allocation4 + $0xc8] sm:$0xff] %vm2263, %v2218
      %2290 = vst.msk [vmem:[#allocation4 + $0xd0] sm:$0xff] %vm2263, %v2220
      %2291 = vst.msk [vmem:[#allocation4 + $0xd8] sm:$0xff] %vm2263, %v2222
      %2292 = vst.msk [vmem:[#allocation4 + $0xe0] sm:$0xff] %vm2263, %v2224
      %2293 = vst.msk [vmem:[#allocation4 + $0xe8] sm:$0xff] %vm2263, %v2226
      %2294 = vst.msk [vmem:[#allocation4 + $0xf0] sm:$0xff] %vm2263, %v2228
      %2295 = vst.msk [vmem:[#allocation4 + $0xf8] sm:$0xff] %vm2263, %v2230
      %v2296 = vld [vmem:[#allocation4] sm:$0xff]
      %v2297 = vld [vmem:[#allocation4 + $0x8] sm:$0xff]
      %v2298 = vld [vmem:[#allocation4 + $0x10] sm:$0xff]
      %v2299 = vld [vmem:[#allocation4 + $0x18] sm:$0xff]
      %v2300 = vld [vmem:[#allocation4 + $0x20] sm:$0xff]
      %v2301 = vld [vmem:[#allocation4 + $0x28] sm:$0xff]
      %v2302 = vld [vmem:[#allocation4 + $0x30] sm:$0xff]
      %v2303 = vld [vmem:[#allocation4 + $0x38] sm:$0xff]
      %v2304 = vld [vmem:[#allocation4 + $0x40] sm:$0xff]
      %v2305 = vld [vmem:[#allocation4 + $0x48] sm:$0xff]
      %v2306 = vld [vmem:[#allocation4 + $0x50] sm:$0xff]
      %v2307 = vld [vmem:[#allocation4 + $0x58] sm:$0xff]
      %v2308 = vld [vmem:[#allocation4 + $0x60] sm:$0xff]
      %v2309 = vld [vmem:[#allocation4 + $0x68] sm:$0xff]
      %v2310 = vld [vmem:[#allocation4 + $0x70] sm:$0xff]
      %v2311 = vld [vmem:[#allocation4 + $0x78] sm:$0xff]
      %v2312 = vld [vmem:[#allocation4 + $0x80] sm:$0xff]
      %v2313 = vld [vmem:[#allocation4 + $0x88] sm:$0xff]
      %v2314 = vld [vmem:[#allocation4 + $0x90] sm:$0xff]
      %v2315 = vld [vmem:[#allocation4 + $0x98] sm:$0xff]
      %v2316 = vld [vmem:[#allocation4 + $0xa0] sm:$0xff]
      %v2317 = vld [vmem:[#allocation4 + $0xa8] sm:$0xff]
      %v2318 = vld [vmem:[#allocation4 + $0xb0] sm:$0xff]
      %v2319 = vld [vmem:[#allocation4 + $0xb8] sm:$0xff]
      %v2320 = vld [vmem:[#allocation4 + $0xc0] sm:$0xff]
      %v2321 = vld [vmem:[#allocation4 + $0xc8] sm:$0xff]
      %v2322 = vld [vmem:[#allocation4 + $0xd0] sm:$0xff]
      %v2323 = vld [vmem:[#allocation4 + $0xd8] sm:$0xff]
      %v2324 = vld [vmem:[#allocation4 + $0xe0] sm:$0xff]
      %v2325 = vld [vmem:[#allocation4 + $0xe8] sm:$0xff]
      %v2326 = vld [vmem:[#allocation4 + $0xf0] sm:$0xff]
      %v2327 = vld [vmem:[#allocation4 + $0xf8] sm:$0xff]
      %v2328 = vpack.c.bf16 %v2297, %v2296
      %v2329 = vpack.c.bf16 %v2299, %v2298
      %v2330 = vpack.c.bf16 %v2301, %v2300
      %v2331 = vpack.c.bf16 %v2303, %v2302
      %v2332 = vpack.c.bf16 %v2305, %v2304
      %v2333 = vpack.c.bf16 %v2307, %v2306
      %v2334 = vpack.c.bf16 %v2309, %v2308
      %v2335 = vpack.c.bf16 %v2311, %v2310
      %v2336 = vpack.c.bf16 %v2313, %v2312
      %v2337 = vpack.c.bf16 %v2315, %v2314
      %v2338 = vpack.c.bf16 %v2317, %v2316
      %v2339 = vpack.c.bf16 %v2319, %v2318
      %v2340 = vpack.c.bf16 %v2321, %v2320
      %v2341 = vpack.c.bf16 %v2323, %v2322
      %v2342 = vpack.c.bf16 %v2325, %v2324
      %v2343 = vpack.c.bf16 %v2327, %v2326
      %v2344 = vld [vmem:[%s3] sm:$0xf]
      %v2345 = vld [vmem:[%s3 + $0x4] sm:$0xf]
      %v2346 = vld [vmem:[%s3 + $0x8] sm:$0xf]
      %v2347 = vld [vmem:[%s3 + $0xc] sm:$0xf]
      %v2348 = vld [vmem:[%s3 + $0x10] sm:$0x3]
      %v2349 = vld [vmem:[%s4] sm:$0x1]
      %v2351 = vlaneseq
      %v2352 = vshrl.u32 %v2351, 7
      %v2353 = vsub.s32 0, %v2352
      %v2354 = vrot.slane %v2349, %v2353
      %v2361 = vunpack.c.l.b16 %v2344
      %v2362 = vunpack.c.l.b16 %v2345
      %v2363 = vunpack.c.l.b16 %v2346
      %v2364 = vunpack.c.l.b16 %v2347
      %v2365 = vunpack.c.l.b16 %v2348
      %v2366 = vpack.c.b16 %v2362, %v2361
      %v2367 = vpack.c.b16 %v2364, %v2363
      %v2368 = vpack.c.b16 %v2365, %v2365
      %vm2371 = vcmask 293888
      %v2373 = vsel %vm2371, %v2328, 0
      %v2376 = vsel %vm2371, %v2329, 0
      %v2379 = vsel %vm2371, %v2330, 0
      %v2382 = vsel %vm2371, %v2331, 0
      %v2385 = vsel %vm2371, %v2332, 0
      %v2388 = vsel %vm2371, %v2333, 0
      %v2391 = vsel %vm2371, %v2334, 0
      %v2394 = vsel %vm2371, %v2335, 0
      %v2397 = vsel %vm2371, %v2336, 0
      %v2400 = vsel %vm2371, %v2337, 0
      %v2403 = vsel %vm2371, %v2338, 0
      %v2406 = vsel %vm2371, %v2339, 0
      %v2409 = vsel %vm2371, %v2340, 0
      %v2412 = vsel %vm2371, %v2341, 0
      %v2415 = vsel %vm2371, %v2342, 0
      %v2418 = vsel %vm2371, %v2343, 0
      %vm2420 = vcmask 1041408
      %v2422 = vsel %vm2420, %v2368, 0
      %2424 = vmatprep.subr.bf16.mxu0 0
      %2425 = vmatpush1.bf16.msra.mxu0 %v2366
      %2426 = vmatprep.subr.bf16.mxu0 0
      %2427 = vmatpush1.bf16.msra.mxu0 %v2367
      %2428 = vmatprep.subr.bf16.mxu0 0
      %2429 = vmatpush1.bf16.msra.mxu0 %v2422
      %2430 = vmatprep.subr.bf16.mxu0 0
      %2431 = vmatpush1.bf16.msra.mxu0 0
      %2432 = vmatprep.subr.bf16.mxu0 0
      %2433 = vmatpush1.bf16.msra.mxu0 0
      %2434 = vmatprep.subr.bf16.mxu0 0
      %2435 = vmatpush1.bf16.msra.mxu0 0
      %2436 = vmatprep.subr.bf16.mxu0 0
      %2437 = vmatpush1.bf16.msra.mxu0 0
      %2438 = vmatprep.subr.bf16.mxu0 0
      %2439 = vmatpush1.bf16.msra.mxu0 0
      %2440 = vmatprep.subr.bf16.mxu0 0
      %2441 = vmatpush1.bf16.msra.mxu0 0
      %2442 = vmatprep.subr.bf16.mxu0 0
      %2443 = vmatpush1.bf16.msra.mxu0 0
      %2444 = vmatprep.subr.bf16.mxu0 0
      %2445 = vmatpush1.bf16.msra.mxu0 0
      %2446 = vmatprep.subr.bf16.mxu0 0
      %2447 = vmatpush1.bf16.msra.mxu0 0
      %2448 = vmatprep.subr.bf16.mxu0 0
      %2449 = vmatpush1.bf16.msra.mxu0 0
      %2450 = vmatprep.subr.bf16.mxu0 0
      %2451 = vmatpush1.bf16.msra.mxu0 0
      %2452 = vmatprep.subr.bf16.mxu0 0
      %2453 = vmatpush1.bf16.msra.mxu0 0
      %2454 = vmatprep.subr.bf16.mxu0 0
      %2455 = vmatpush1.bf16.msra.mxu0 0
      %2456 = vmatprep.mubr.bf16.mxu0 0
      %2457 = vmatmul.mubr.bf16.gmra.mrb[0].mxu0 %v2373
      %v2458 = vpop.f32.mrb[0].mxu0
      %v2459 = vadd.f32 %v2354, %v2458
      %v2460 = vpop.f32.mrb[0].mxu0
      %v2461 = vpop.f32.mrb[0].mxu0
      %v2462 = vadd.f32 %v2354, %v2461
      %v2463 = vpop.f32.mrb[0].mxu0
      %2464 = vmatprep.mubr.bf16.mxu0 0
      %2465 = vmatmul.mubr.bf16.gmra.mrb[0].mxu0 %v2376
      %v2466 = vpop.f32.mrb[0].mxu0
      %v2467 = vadd.f32 %v2354, %v2466
      %v2468 = vpop.f32.mrb[0].mxu0
      %v2469 = vpop.f32.mrb[0].mxu0
      %v2470 = vadd.f32 %v2354, %v2469
      %v2471 = vpop.f32.mrb[0].mxu0
      %2472 = vmatprep.mubr.bf16.mxu0 0
      %2473 = vmatmul.mubr.bf16.gmra.mrb[0].mxu0 %v2379
      %v2474 = vpop.f32.mrb[0].mxu0
      %v2475 = vadd.f32 %v2354, %v2474
      %v2476 = vpop.f32.mrb[0].mxu0
      %v2477 = vpop.f32.mrb[0].mxu0
      %v2478 = vadd.f32 %v2354, %v2477
      %v2479 = vpop.f32.mrb[0].mxu0
      %2480 = vmatprep.mubr.bf16.mxu0 0
      %2481 = vmatmul.mubr.bf16.gmra.mrb[0].mxu0 %v2382
      %v2482 = vpop.f32.mrb[0].mxu0
      %v2483 = vadd.f32 %v2354, %v2482
      %v2484 = vpop.f32.mrb[0].mxu0
      %v2485 = vpop.f32.mrb[0].mxu0
      %v2486 = vadd.f32 %v2354, %v2485
      %v2487 = vpop.f32.mrb[0].mxu0
      %2488 = vmatprep.mubr.bf16.mxu0 0
      %2489 = vmatmul.mubr.bf16.gmra.mrb[0].mxu0 %v2385
      %v2490 = vpop.f32.mrb[0].mxu0
      %v2491 = vadd.f32 %v2354, %v2490
      %v2492 = vpop.f32.mrb[0].mxu0
      %v2493 = vpop.f32.mrb[0].mxu0
      %v2494 = vadd.f32 %v2354, %v2493
      %v2495 = vpop.f32.mrb[0].mxu0
      %2496 = vmatprep.mubr.bf16.mxu0 0
      %2497 = vmatmul.mubr.bf16.gmra.mrb[0].mxu0 %v2388
      %v2498 = vpop.f32.mrb[0].mxu0
      %v2499 = vadd.f32 %v2354, %v2498
      %v2500 = vpop.f32.mrb[0].mxu0
      %v2501 = vpop.f32.mrb[0].mxu0
      %v2502 = vadd.f32 %v2354, %v2501
      %v2503 = vpop.f32.mrb[0].mxu0
      %2504 = vmatprep.mubr.bf16.mxu0 0
      %2505 = vmatmul.mubr.bf16.gmra.mrb[0].mxu0 %v2391
      %v2506 = vpop.f32.mrb[0].mxu0
      %v2507 = vadd.f32 %v2354, %v2506
      %v2508 = vpop.f32.mrb[0].mxu0
      %v2509 = vpop.f32.mrb[0].mxu0
      %v2510 = vadd.f32 %v2354, %v2509
      %v2511 = vpop.f32.mrb[0].mxu0
      %2512 = vmatprep.mubr.bf16.mxu0 0
      %2513 = vmatmul.mubr.bf16.gmra.mrb[0].mxu0 %v2394
      %v2514 = vpop.f32.mrb[0].mxu0
      %v2515 = vadd.f32 %v2354, %v2514
      %v2516 = vpop.f32.mrb[0].mxu0
      %v2517 = vpop.f32.mrb[0].mxu0
      %v2518 = vadd.f32 %v2354, %v2517
      %v2519 = vpop.f32.mrb[0].mxu0
      %2520 = vmatprep.mubr.bf16.mxu0 0
      %2521 = vmatmul.mubr.bf16.gmra.mrb[0].mxu0 %v2397
      %v2522 = vpop.f32.mrb[0].mxu0
      %v2523 = vadd.f32 %v2354, %v2522
      %v2524 = vpop.f32.mrb[0].mxu0
      %v2525 = vpop.f32.mrb[0].mxu0
      %v2526 = vadd.f32 %v2354, %v2525
      %v2527 = vpop.f32.mrb[0].mxu0
      %2528 = vmatprep.mubr.bf16.mxu0 0
      %2529 = vmatmul.mubr.bf16.gmra.mrb[0].mxu0 %v2400
      %v2530 = vpop.f32.mrb[0].mxu0
      %v2531 = vadd.f32 %v2354, %v2530
      %v2532 = vpop.f32.mrb[0].mxu0
      %v2533 = vpop.f32.mrb[0].mxu0
      %v2534 = vadd.f32 %v2354, %v2533
      %v2535 = vpop.f32.mrb[0].mxu0
      %2536 = vmatprep.mubr.bf16.mxu0 0
      %2537 = vmatmul.mubr.bf16.gmra.mrb[0].mxu0 %v2403
      %v2538 = vpop.f32.mrb[0].mxu0
      %v2539 = vadd.f32 %v2354, %v2538
      %v2540 = vpop.f32.mrb[0].mxu0
      %v2541 = vpop.f32.mrb[0].mxu0
      %v2542 = vadd.f32 %v2354, %v2541
      %v2543 = vpop.f32.mrb[0].mxu0
      %2544 = vmatprep.mubr.bf16.mxu0 0
      %2545 = vmatmul.mubr.bf16.gmra.mrb[0].mxu0 %v2406
      %v2546 = vpop.f32.mrb[0].mxu0
      %v2547 = vadd.f32 %v2354, %v2546
      %v2548 = vpop.f32.mrb[0].mxu0
      %v2549 = vpop.f32.mrb[0].mxu0
      %v2550 = vadd.f32 %v2354, %v2549
      %v2551 = vpop.f32.mrb[0].mxu0
      %2552 = vmatprep.mubr.bf16.mxu0 0
      %2553 = vmatmul.mubr.bf16.gmra.mrb[0].mxu0 %v2409
      %v2554 = vpop.f32.mrb[0].mxu0
      %v2555 = vadd.f32 %v2354, %v2554
      %v2556 = vpop.f32.mrb[0].mxu0
      %v2557 = vpop.f32.mrb[0].mxu0
      %v2558 = vadd.f32 %v2354, %v2557
      %v2559 = vpop.f32.mrb[0].mxu0
      %2560 = vmatprep.mubr.bf16.mxu0 0
      %2561 = vmatmul.mubr.bf16.gmra.mrb[0].mxu0 %v2412
      %v2562 = vpop.f32.mrb[0].mxu0
      %v2563 = vadd.f32 %v2354, %v2562
      %v2564 = vpop.f32.mrb[0].mxu0
      %v2565 = vpop.f32.mrb[0].mxu0
      %v2566 = vadd.f32 %v2354, %v2565
      %v2567 = vpop.f32.mrb[0].mxu0
      %2568 = vmatprep.mubr.bf16.mxu0 0
      %2569 = vmatmul.mubr.bf16.gmra.mrb[0].mxu0 %v2415
      %v2570 = vpop.f32.mrb[0].mxu0
      %v2571 = vadd.f32 %v2354, %v2570
      %v2572 = vpop.f32.mrb[0].mxu0
      %v2573 = vpop.f32.mrb[0].mxu0
      %v2574 = vadd.f32 %v2354, %v2573
      %v2575 = vpop.f32.mrb[0].mxu0
      %2576 = vmatprep.mubr.bf16.mxu0 0
      %2577 = vmatmul.mubr.bf16.gmra.mrb[0].mxu0 %v2418
      %v2578 = vpop.f32.mrb[0].mxu0
      %v2579 = vadd.f32 %v2354, %v2578
      %v2580 = vpop.f32.mrb[0].mxu0
      %v2581 = vpop.f32.mrb[0].mxu0
      %v2582 = vadd.f32 %v2354, %v2581
      %v2583 = vpop.f32.mrb[0].mxu0
      %2584 = vdwg.mxu0
      %2617 = vrot.lane.b32.xlu0 %v2459, 4
      %v2618 = vpop.permute.xlu0 %2617
      %2619 = vrot.lane.b32.xlu0 %v2462, 4
      %v2620 = vpop.permute.xlu0 %2619
      %2621 = vrot.lane.b32.xlu0 %v2467, 4
      %v2622 = vpop.permute.xlu0 %2621
      %2623 = vrot.lane.b32.xlu0 %v2470, 4
      %v2624 = vpop.permute.xlu0 %2623
      %2625 = vrot.lane.b32.xlu0 %v2475, 4
      %v2626 = vpop.permute.xlu0 %2625
      %2627 = vrot.lane.b32.xlu0 %v2478, 4
      %v2628 = vpop.permute.xlu0 %2627
      %2629 = vrot.lane.b32.xlu0 %v2483, 4
      %v2630 = vpop.permute.xlu0 %2629
      %2631 = vrot.lane.b32.xlu0 %v2486, 4
      %v2632 = vpop.permute.xlu0 %2631
      %2633 = vrot.lane.b32.xlu0 %v2491, 4
      %v2634 = vpop.permute.xlu0 %2633
      %2635 = vrot.lane.b32.xlu0 %v2494, 4
      %v2636 = vpop.permute.xlu0 %2635
      %2637 = vrot.lane.b32.xlu0 %v2499, 4
      %v2638 = vpop.permute.xlu0 %2637
      %2639 = vrot.lane.b32.xlu0 %v2502, 4
      %v2640 = vpop.permute.xlu0 %2639
      %2641 = vrot.lane.b32.xlu0 %v2507, 4
      %v2642 = vpop.permute.xlu0 %2641
      %2643 = vrot.lane.b32.xlu0 %v2510, 4
      %v2644 = vpop.permute.xlu0 %2643
      %2645 = vrot.lane.b32.xlu0 %v2515, 4
      %v2646 = vpop.permute.xlu0 %2645
      %2647 = vrot.lane.b32.xlu0 %v2518, 4
      %v2648 = vpop.permute.xlu0 %2647
      %2649 = vrot.lane.b32.xlu0 %v2523, 4
      %v2650 = vpop.permute.xlu0 %2649
      %2651 = vrot.lane.b32.xlu0 %v2526, 4
      %v2652 = vpop.permute.xlu0 %2651
      %2653 = vrot.lane.b32.xlu0 %v2531, 4
      %v2654 = vpop.permute.xlu0 %2653
      %2655 = vrot.lane.b32.xlu0 %v2534, 4
      %v2656 = vpop.permute.xlu0 %2655
      %2657 = vrot.lane.b32.xlu0 %v2539, 4
      %v2658 = vpop.permute.xlu0 %2657
      %2659 = vrot.lane.b32.xlu0 %v2542, 4
      %v2660 = vpop.permute.xlu0 %2659
      %2661 = vrot.lane.b32.xlu0 %v2547, 4
      %v2662 = vpop.permute.xlu0 %2661
      %2663 = vrot.lane.b32.xlu0 %v2550, 4
      %v2664 = vpop.permute.xlu0 %2663
      %2665 = vrot.lane.b32.xlu0 %v2555, 4
      %v2666 = vpop.permute.xlu0 %2665
      %2667 = vrot.lane.b32.xlu0 %v2558, 4
      %v2668 = vpop.permute.xlu0 %2667
      %2669 = vrot.lane.b32.xlu0 %v2563, 4
      %v2670 = vpop.permute.xlu0 %2669
      %2671 = vrot.lane.b32.xlu0 %v2566, 4
      %v2672 = vpop.permute.xlu0 %2671
      %2673 = vrot.lane.b32.xlu0 %v2571, 4
      %v2674 = vpop.permute.xlu0 %2673
      %2675 = vrot.lane.b32.xlu0 %v2574, 4
      %v2676 = vpop.permute.xlu0 %2675
      %2677 = vrot.lane.b32.xlu0 %v2579, 4
      %v2678 = vpop.permute.xlu0 %2677
      %2679 = vrot.lane.b32.xlu0 %v2582, 4
      %v2680 = vpop.permute.xlu0 %2679
      %2713 = vst.msk [vmem:[%s478 + $0x1] sm:$0xff] %vm911, %v2618
      %2714 = vst.msk [vmem:[%s478 + $0x9] sm:$0xff] %vm911, %v2620
      %2715 = vst.msk [vmem:[%s478 + $0x19] sm:$0xff] %vm911, %v2622
      %2716 = vst.msk [vmem:[%s478 + $0x21] sm:$0xff] %vm911, %v2624
      %2717 = vst.msk [vmem:[%s478 + $0x31] sm:$0xff] %vm911, %v2626
      %2718 = vst.msk [vmem:[%s478 + $0x39] sm:$0xff] %vm911, %v2628
      %2719 = vst.msk [vmem:[%s478 + $0x49] sm:$0xff] %vm911, %v2630
      %2720 = vst.msk [vmem:[%s478 + $0x51] sm:$0xff] %vm911, %v2632
      %2721 = vst.msk [vmem:[%s478 + $0x61] sm:$0xff] %vm911, %v2634
      %2722 = vst.msk [vmem:[%s478 + $0x69] sm:$0xff] %vm911, %v2636
      %2723 = vst.msk [vmem:[%s478 + $0x79] sm:$0xff] %vm911, %v2638
      %2724 = vst.msk [vmem:[%s478 + $0x81] sm:$0xff] %vm911, %v2640
      %2725 = vst.msk [vmem:[%s478 + $0x91] sm:$0xff] %vm911, %v2642
      %2726 = vst.msk [vmem:[%s478 + $0x99] sm:$0xff] %vm911, %v2644
      %2727 = vst.msk [vmem:[%s478 + $0xa9] sm:$0xff] %vm911, %v2646
      %2728 = vst.msk [vmem:[%s478 + $0xb1] sm:$0xff] %vm911, %v2648
      %2729 = vst.msk [vmem:[%s478 + $0xc1] sm:$0xff] %vm911, %v2650
      %2730 = vst.msk [vmem:[%s478 + $0xc9] sm:$0xff] %vm911, %v2652
      %2731 = vst.msk [vmem:[%s478 + $0xd9] sm:$0xff] %vm911, %v2654
      %2732 = vst.msk [vmem:[%s478 + $0xe1] sm:$0xff] %vm911, %v2656
      %2733 = vst.msk [vmem:[%s478 + $0xf1] sm:$0xff] %vm911, %v2658
      %2734 = vst.msk [vmem:[%s478 + $0xf9] sm:$0xff] %vm911, %v2660
      %2735 = vst.msk [vmem:[%s478 + $0x109] sm:$0xff] %vm911, %v2662
      %2736 = vst.msk [vmem:[%s478 + $0x111] sm:$0xff] %vm911, %v2664
      %2737 = vst.msk [vmem:[%s478 + $0x121] sm:$0xff] %vm911, %v2666
      %2738 = vst.msk [vmem:[%s478 + $0x129] sm:$0xff] %vm911, %v2668
      %2739 = vst.msk [vmem:[%s478 + $0x139] sm:$0xff] %vm911, %v2670
      %2740 = vst.msk [vmem:[%s478 + $0x141] sm:$0xff] %vm911, %v2672
      %2741 = vst.msk [vmem:[%s478 + $0x151] sm:$0xff] %vm911, %v2674
      %2742 = vst.msk [vmem:[%s478 + $0x159] sm:$0xff] %vm911, %v2676
      %2743 = vst.msk [vmem:[%s478 + $0x169] sm:$0xff] %vm911, %v2678
      %2744 = vst.msk [vmem:[%s478 + $0x171] sm:$0xff] %vm911, %v2680
      %v2745 = vld [vmem:[%s478 + $0x1] sm:$0xff]
      %v2746 = vld [vmem:[%s478 + $0x9] sm:$0xff]
      %v2747 = vld [vmem:[%s478 + $0x19] sm:$0xff]
      %v2748 = vld [vmem:[%s478 + $0x21] sm:$0xff]
      %v2749 = vld [vmem:[%s478 + $0x31] sm:$0xff]
      %v2750 = vld [vmem:[%s478 + $0x39] sm:$0xff]
      %v2751 = vld [vmem:[%s478 + $0x49] sm:$0xff]
      %v2752 = vld [vmem:[%s478 + $0x51] sm:$0xff]
      %v2753 = vld [vmem:[%s478 + $0x61] sm:$0xff]
      %v2754 = vld [vmem:[%s478 + $0x69] sm:$0xff]
      %v2755 = vld [vmem:[%s478 + $0x79] sm:$0xff]
      %v2756 = vld [vmem:[%s478 + $0x81] sm:$0xff]
      %v2757 = vld [vmem:[%s478 + $0x91] sm:$0xff]
      %v2758 = vld [vmem:[%s478 + $0x99] sm:$0xff]
      %v2759 = vld [vmem:[%s478 + $0xa9] sm:$0xff]
      %v2760 = vld [vmem:[%s478 + $0xb1] sm:$0xff]
      %v2761 = vld [vmem:[%s478 + $0xc1] sm:$0xff]
      %v2762 = vld [vmem:[%s478 + $0xc9] sm:$0xff]
      %v2763 = vld [vmem:[%s478 + $0xd9] sm:$0xff]
      %v2764 = vld [vmem:[%s478 + $0xe1] sm:$0xff]
      %v2765 = vld [vmem:[%s478 + $0xf1] sm:$0xff]
      %v2766 = vld [vmem:[%s478 + $0xf9] sm:$0xff]
      %v2767 = vld [vmem:[%s478 + $0x109] sm:$0xff]
      %v2768 = vld [vmem:[%s478 + $0x111] sm:$0xff]
      %v2769 = vld [vmem:[%s478 + $0x121] sm:$0xff]
      %v2770 = vld [vmem:[%s478 + $0x129] sm:$0xff]
      %v2771 = vld [vmem:[%s478 + $0x139] sm:$0xff]
      %v2772 = vld [vmem:[%s478 + $0x141] sm:$0xff]
      %v2773 = vld [vmem:[%s478 + $0x151] sm:$0xff]
      %v2774 = vld [vmem:[%s478 + $0x159] sm:$0xff]
      %v2775 = vld [vmem:[%s478 + $0x169] sm:$0xff]
      %v2776 = vld [vmem:[%s478 + $0x171] sm:$0xff]
      %v2777 = vld [vmem:[%s5] sm:$0x1]
      %v2779 = vlaneseq
      %v2780 = vshrl.u32 %v2779, 7
      %v2781 = vsub.s32 0, %v2780
      %v2782 = vrot.slane %v2777, %v2781
      %v2784 = vmul.f32 %v2745, %v2782
      %v2785 = vmul.f32 %v2746, %v2782
      %v2786 = vmul.f32 %v2747, %v2782
      %v2787 = vmul.f32 %v2748, %v2782
      %v2788 = vmul.f32 %v2749, %v2782
      %v2789 = vmul.f32 %v2750, %v2782
      %v2790 = vmul.f32 %v2751, %v2782
      %v2791 = vmul.f32 %v2752, %v2782
      %v2792 = vmul.f32 %v2753, %v2782
      %v2793 = vmul.f32 %v2754, %v2782
      %v2794 = vmul.f32 %v2755, %v2782
      %v2795 = vmul.f32 %v2756, %v2782
      %v2796 = vmul.f32 %v2757, %v2782
      %v2797 = vmul.f32 %v2758, %v2782
      %v2798 = vmul.f32 %v2759, %v2782
      %v2799 = vmul.f32 %v2760, %v2782
      %v2800 = vmul.f32 %v2761, %v2782
      %v2801 = vmul.f32 %v2762, %v2782
      %v2802 = vmul.f32 %v2763, %v2782
      %v2803 = vmul.f32 %v2764, %v2782
      %v2804 = vmul.f32 %v2765, %v2782
      %v2805 = vmul.f32 %v2766, %v2782
      %v2806 = vmul.f32 %v2767, %v2782
      %v2807 = vmul.f32 %v2768, %v2782
      %v2808 = vmul.f32 %v2769, %v2782
      %v2809 = vmul.f32 %v2770, %v2782
      %v2810 = vmul.f32 %v2771, %v2782
      %v2811 = vmul.f32 %v2772, %v2782
      %v2812 = vmul.f32 %v2773, %v2782
      %v2813 = vmul.f32 %v2774, %v2782
      %v2814 = vmul.f32 %v2775, %v2782
      %v2815 = vmul.f32 %v2776, %v2782
      %v2816 = vld [vmem:[%s6] sm:$0x1]
      %v2818 = vlaneseq
      %v2819 = vshrl.u32 %v2818, 7
      %v2820 = vsub.s32 0, %v2819
      %v2821 = vrot.slane %v2816, %v2820
      %v2823 = vadd.f32 %v2784, %v2821
      %v2824 = vadd.f32 %v2785, %v2821
      %v2825 = vadd.f32 %v2786, %v2821
      %v2826 = vadd.f32 %v2787, %v2821
      %v2827 = vadd.f32 %v2788, %v2821
      %v2828 = vadd.f32 %v2789, %v2821
      %v2829 = vadd.f32 %v2790, %v2821
      %v2830 = vadd.f32 %v2791, %v2821
      %v2831 = vadd.f32 %v2792, %v2821
      %v2832 = vadd.f32 %v2793, %v2821
      %v2833 = vadd.f32 %v2794, %v2821
      %v2834 = vadd.f32 %v2795, %v2821
      %v2835 = vadd.f32 %v2796, %v2821
      %v2836 = vadd.f32 %v2797, %v2821
      %v2837 = vadd.f32 %v2798, %v2821
      %v2838 = vadd.f32 %v2799, %v2821
      %v2839 = vadd.f32 %v2800, %v2821
      %v2840 = vadd.f32 %v2801, %v2821
      %v2841 = vadd.f32 %v2802, %v2821
      %v2842 = vadd.f32 %v2803, %v2821
      %v2843 = vadd.f32 %v2804, %v2821
      %v2844 = vadd.f32 %v2805, %v2821
      %v2845 = vadd.f32 %v2806, %v2821
      %v2846 = vadd.f32 %v2807, %v2821
      %v2847 = vadd.f32 %v2808, %v2821
      %v2848 = vadd.f32 %v2809, %v2821
      %v2849 = vadd.f32 %v2810, %v2821
      %v2850 = vadd.f32 %v2811, %v2821
      %v2851 = vadd.f32 %v2812, %v2821
      %v2852 = vadd.f32 %v2813, %v2821
      %v2853 = vadd.f32 %v2814, %v2821
      %v2854 = vadd.f32 %v2815, %v2821
      %v2855 = vmax.f32 %v2823, 0.0
      %v2856 = vmax.f32 %v2824, 0.0
      %v2857 = vmax.f32 %v2825, 0.0
      %v2858 = vmax.f32 %v2826, 0.0
      %v2859 = vmax.f32 %v2827, 0.0
      %v2860 = vmax.f32 %v2828, 0.0
      %v2861 = vmax.f32 %v2829, 0.0
      %v2862 = vmax.f32 %v2830, 0.0
      %v2863 = vmax.f32 %v2831, 0.0
      %v2864 = vmax.f32 %v2832, 0.0
      %v2865 = vmax.f32 %v2833, 0.0
      %v2866 = vmax.f32 %v2834, 0.0
      %v2867 = vmax.f32 %v2835, 0.0
      %v2868 = vmax.f32 %v2836, 0.0
      %v2869 = vmax.f32 %v2837, 0.0
      %v2870 = vmax.f32 %v2838, 0.0
      %v2871 = vmax.f32 %v2839, 0.0
      %v2872 = vmax.f32 %v2840, 0.0
      %v2873 = vmax.f32 %v2841, 0.0
      %v2874 = vmax.f32 %v2842, 0.0
      %v2875 = vmax.f32 %v2843, 0.0
      %v2876 = vmax.f32 %v2844, 0.0
      %v2877 = vmax.f32 %v2845, 0.0
      %v2878 = vmax.f32 %v2846, 0.0
      %v2879 = vmax.f32 %v2847, 0.0
      %v2880 = vmax.f32 %v2848, 0.0
      %v2881 = vmax.f32 %v2849, 0.0
      %v2882 = vmax.f32 %v2850, 0.0
      %v2883 = vmax.f32 %v2851, 0.0
      %v2884 = vmax.f32 %v2852, 0.0
      %v2885 = vmax.f32 %v2853, 0.0
      %v2886 = vmax.f32 %v2854, 0.0
      %2887 = vst.msk [vmem:[%s654 + $0x1] sm:$0xff] %vm390, %v2855
      %2888 = vst.msk [vmem:[%s654 + $0x9] sm:$0xff] %vm390, %v2856
      %2889 = vst.msk [vmem:[%s654 + $0x19] sm:$0xff] %vm390, %v2857
      %2890 = vst.msk [vmem:[%s654 + $0x21] sm:$0xff] %vm390, %v2858
      %2891 = vst.msk [vmem:[%s654 + $0x31] sm:$0xff] %vm390, %v2859
      %2892 = vst.msk [vmem:[%s654 + $0x39] sm:$0xff] %vm390, %v2860
      %2893 = vst.msk [vmem:[%s654 + $0x49] sm:$0xff] %vm390, %v2861
      %2894 = vst.msk [vmem:[%s654 + $0x51] sm:$0xff] %vm390, %v2862
      %2895 = vst.msk [vmem:[%s654 + $0x61] sm:$0xff] %vm390, %v2863
      %2896 = vst.msk [vmem:[%s654 + $0x69] sm:$0xff] %vm390, %v2864
      %2897 = vst.msk [vmem:[%s654 + $0x79] sm:$0xff] %vm390, %v2865
      %2898 = vst.msk [vmem:[%s654 + $0x81] sm:$0xff] %vm390, %v2866
      %2899 = vst.msk [vmem:[%s654 + $0x91] sm:$0xff] %vm390, %v2867
      %2900 = vst.msk [vmem:[%s654 + $0x99] sm:$0xff] %vm390, %v2868
      %2901 = vst.msk [vmem:[%s654 + $0xa9] sm:$0xff] %vm390, %v2869
      %2902 = vst.msk [vmem:[%s654 + $0xb1] sm:$0xff] %vm390, %v2870
      %2903 = vst.msk [vmem:[%s654 + $0xc1] sm:$0xff] %vm390, %v2871
      %2904 = vst.msk [vmem:[%s654 + $0xc9] sm:$0xff] %vm390, %v2872
      %2905 = vst.msk [vmem:[%s654 + $0xd9] sm:$0xff] %vm390, %v2873
      %2906 = vst.msk [vmem:[%s654 + $0xe1] sm:$0xff] %vm390, %v2874
      %2907 = vst.msk [vmem:[%s654 + $0xf1] sm:$0xff] %vm390, %v2875
      %2908 = vst.msk [vmem:[%s654 + $0xf9] sm:$0xff] %vm390, %v2876
      %2909 = vst.msk [vmem:[%s654 + $0x109] sm:$0xff] %vm390, %v2877
      %2910 = vst.msk [vmem:[%s654 + $0x111] sm:$0xff] %vm390, %v2878
      %2911 = vst.msk [vmem:[%s654 + $0x121] sm:$0xff] %vm390, %v2879
      %2912 = vst.msk [vmem:[%s654 + $0x129] sm:$0xff] %vm390, %v2880
      %2913 = vst.msk [vmem:[%s654 + $0x139] sm:$0xff] %vm390, %v2881
      %2914 = vst.msk [vmem:[%s654 + $0x141] sm:$0xff] %vm390, %v2882
      %2915 = vst.msk [vmem:[%s654 + $0x151] sm:$0xff] %vm390, %v2883
      %2916 = vst.msk [vmem:[%s654 + $0x159] sm:$0xff] %vm390, %v2884
      %2917 = vst.msk [vmem:[%s654 + $0x169] sm:$0xff] %vm390, %v2885
      %2918 = vst.msk [vmem:[%s654 + $0x171] sm:$0xff] %vm390, %v2886
      %v2919 = vld [vmem:[#allocation3] sm:$0xff]
      %v2920 = vld [vmem:[#allocation3 + $0x8] sm:$0xff]
      %v2921 = vld [vmem:[#allocation3 + $0x18] sm:$0xff]
      %v2922 = vld [vmem:[#allocation3 + $0x20] sm:$0xff]
      %v2923 = vld [vmem:[#allocation3 + $0x30] sm:$0xff]
      %v2924 = vld [vmem:[#allocation3 + $0x38] sm:$0xff]
      %v2925 = vld [vmem:[#allocation3 + $0x48] sm:$0xff]
      %v2926 = vld [vmem:[#allocation3 + $0x50] sm:$0xff]
      %v2927 = vld [vmem:[#allocation3 + $0x60] sm:$0xff]
      %v2928 = vld [vmem:[#allocation3 + $0x68] sm:$0xff]
      %v2929 = vld [vmem:[#allocation3 + $0x78] sm:$0xff]
      %v2930 = vld [vmem:[#allocation3 + $0x80] sm:$0xff]
      %v2931 = vld [vmem:[#allocation3 + $0x90] sm:$0xff]
      %v2932 = vld [vmem:[#allocation3 + $0x98] sm:$0xff]
      %v2933 = vld [vmem:[#allocation3 + $0xa8] sm:$0xff]
      %v2934 = vld [vmem:[#allocation3 + $0xb0] sm:$0xff]
      %v2935 = vld [vmem:[#allocation3 + $0xc0] sm:$0xff]
      %v2936 = vld [vmem:[#allocation3 + $0xc8] sm:$0xff]
      %v2937 = vld [vmem:[#allocation3 + $0xd8] sm:$0xff]
      %v2938 = vld [vmem:[#allocation3 + $0xe0] sm:$0xff]
      %v2939 = vld [vmem:[#allocation3 + $0xf0] sm:$0xff]
      %v2940 = vld [vmem:[#allocation3 + $0xf8] sm:$0xff]
      %v2941 = vld [vmem:[#allocation3 + $0x108] sm:$0xff]
      %v2942 = vld [vmem:[#allocation3 + $0x110] sm:$0xff]
      %v2943 = vld [vmem:[#allocation3 + $0x120] sm:$0xff]
      %v2944 = vld [vmem:[#allocation3 + $0x128] sm:$0xff]
      %v2945 = vld [vmem:[#allocation3 + $0x138] sm:$0xff]
      %v2946 = vld [vmem:[#allocation3 + $0x140] sm:$0xff]
      %v2947 = vld [vmem:[#allocation3 + $0x150] sm:$0xff]
      %v2948 = vld [vmem:[#allocation3 + $0x158] sm:$0xff]
      %v2949 = vld [vmem:[#allocation3 + $0x168] sm:$0xff]
      %v2950 = vld [vmem:[#allocation3 + $0x170] sm:$0xff]
      %2951 = vst.msk [vmem:[#allocation4] sm:$0xff] %vm390, %v2919
      %2952 = vst.msk [vmem:[#allocation4 + $0x8] sm:$0xff] %vm390, %v2920
      %2953 = vst.msk [vmem:[#allocation4 + $0x10] sm:$0xff] %vm390, %v2921
      %2954 = vst.msk [vmem:[#allocation4 + $0x18] sm:$0xff] %vm390, %v2922
      %2955 = vst.msk [vmem:[#allocation4 + $0x20] sm:$0xff] %vm390, %v2923
      %2956 = vst.msk [vmem:[#allocation4 + $0x28] sm:$0xff] %vm390, %v2924
      %2957 = vst.msk [vmem:[#allocation4 + $0x30] sm:$0xff] %vm390, %v2925
      %2958 = vst.msk [vmem:[#allocation4 + $0x38] sm:$0xff] %vm390, %v2926
      %2959 = vst.msk [vmem:[#allocation4 + $0x40] sm:$0xff] %vm390, %v2927
      %2960 = vst.msk [vmem:[#allocation4 + $0x48] sm:$0xff] %vm390, %v2928
      %2961 = vst.msk [vmem:[#allocation4 + $0x50] sm:$0xff] %vm390, %v2929
      %2962 = vst.msk [vmem:[#allocation4 + $0x58] sm:$0xff] %vm390, %v2930
      %2963 = vst.msk [vmem:[#allocation4 + $0x60] sm:$0xff] %vm390, %v2931
      %2964 = vst.msk [vmem:[#allocation4 + $0x68] sm:$0xff] %vm390, %v2932
      %2965 = vst.msk [vmem:[#allocation4 + $0x70] sm:$0xff] %vm390, %v2933
      %2966 = vst.msk [vmem:[#allocation4 + $0x78] sm:$0xff] %vm390, %v2934
      %2967 = vst.msk [vmem:[#allocation4 + $0x80] sm:$0xff] %vm390, %v2935
      %2968 = vst.msk [vmem:[#allocation4 + $0x88] sm:$0xff] %vm390, %v2936
      %2969 = vst.msk [vmem:[#allocation4 + $0x90] sm:$0xff] %vm390, %v2937
      %2970 = vst.msk [vmem:[#allocation4 + $0x98] sm:$0xff] %vm390, %v2938
      %2971 = vst.msk [vmem:[#allocation4 + $0xa0] sm:$0xff] %vm390, %v2939
      %2972 = vst.msk [vmem:[#allocation4 + $0xa8] sm:$0xff] %vm390, %v2940
      %2973 = vst.msk [vmem:[#allocation4 + $0xb0] sm:$0xff] %vm390, %v2941
      %2974 = vst.msk [vmem:[#allocation4 + $0xb8] sm:$0xff] %vm390, %v2942
      %2975 = vst.msk [vmem:[#allocation4 + $0xc0] sm:$0xff] %vm390, %v2943
      %2976 = vst.msk [vmem:[#allocation4 + $0xc8] sm:$0xff] %vm390, %v2944
      %2977 = vst.msk [vmem:[#allocation4 + $0xd0] sm:$0xff] %vm390, %v2945
      %2978 = vst.msk [vmem:[#allocation4 + $0xd8] sm:$0xff] %vm390, %v2946
      %2979 = vst.msk [vmem:[#allocation4 + $0xe0] sm:$0xff] %vm390, %v2947
      %2980 = vst.msk [vmem:[#allocation4 + $0xe8] sm:$0xff] %vm390, %v2948
      %2981 = vst.msk [vmem:[#allocation4 + $0xf0] sm:$0xff] %vm390, %v2949
      %2982 = vst.msk [vmem:[#allocation4 + $0xf8] sm:$0xff] %vm390, %v2950
      %v2983 = vld [vmem:[#allocation3 + $0x1] sm:$0xff]
      %v2984 = vld [vmem:[#allocation3 + $0x9] sm:$0xff]
      %v2985 = vld [vmem:[#allocation3 + $0x19] sm:$0xff]
      %v2986 = vld [vmem:[#allocation3 + $0x21] sm:$0xff]
      %v2987 = vld [vmem:[#allocation3 + $0x31] sm:$0xff]
      %v2988 = vld [vmem:[#allocation3 + $0x39] sm:$0xff]
      %v2989 = vld [vmem:[#allocation3 + $0x49] sm:$0xff]
      %v2990 = vld [vmem:[#allocation3 + $0x51] sm:$0xff]
      %v2991 = vld [vmem:[#allocation3 + $0x61] sm:$0xff]
      %v2992 = vld [vmem:[#allocation3 + $0x69] sm:$0xff]
      %v2993 = vld [vmem:[#allocation3 + $0x79] sm:$0xff]
      %v2994 = vld [vmem:[#allocation3 + $0x81] sm:$0xff]
      %v2995 = vld [vmem:[#allocation3 + $0x91] sm:$0xff]
      %v2996 = vld [vmem:[#allocation3 + $0x99] sm:$0xff]
      %v2997 = vld [vmem:[#allocation3 + $0xa9] sm:$0xff]
      %v2998 = vld [vmem:[#allocation3 + $0xb1] sm:$0xff]
      %v2999 = vld [vmem:[#allocation3 + $0xc1] sm:$0xff]
      %v3000 = vld [vmem:[#allocation3 + $0xc9] sm:$0xff]
      %v3001 = vld [vmem:[#allocation3 + $0xd9] sm:$0xff]
      %v3002 = vld [vmem:[#allocation3 + $0xe1] sm:$0xff]
      %v3003 = vld [vmem:[#allocation3 + $0xf1] sm:$0xff]
      %v3004 = vld [vmem:[#allocation3 + $0xf9] sm:$0xff]
      %v3005 = vld [vmem:[#allocation3 + $0x109] sm:$0xff]
      %v3006 = vld [vmem:[#allocation3 + $0x111] sm:$0xff]
      %v3007 = vld [vmem:[#allocation3 + $0x121] sm:$0xff]
      %v3008 = vld [vmem:[#allocation3 + $0x129] sm:$0xff]
      %v3009 = vld [vmem:[#allocation3 + $0x139] sm:$0xff]
      %v3010 = vld [vmem:[#allocation3 + $0x141] sm:$0xff]
      %v3011 = vld [vmem:[#allocation3 + $0x151] sm:$0xff]
      %v3012 = vld [vmem:[#allocation3 + $0x159] sm:$0xff]
      %v3013 = vld [vmem:[#allocation3 + $0x169] sm:$0xff]
      %v3014 = vld [vmem:[#allocation3 + $0x171] sm:$0xff]
      %3047 = vrot.lane.b32.xlu0 %v2983, 8
      %v3048 = vpop.permute.xlu0 %3047
      %3049 = vrot.lane.b32.xlu0 %v2984, 8
      %v3050 = vpop.permute.xlu0 %3049
      %3051 = vrot.lane.b32.xlu0 %v2985, 8
      %v3052 = vpop.permute.xlu0 %3051
      %3053 = vrot.lane.b32.xlu0 %v2986, 8
      %v3054 = vpop.permute.xlu0 %3053
      %3055 = vrot.lane.b32.xlu0 %v2987, 8
      %v3056 = vpop.permute.xlu0 %3055
      %3057 = vrot.lane.b32.xlu0 %v2988, 8
      %v3058 = vpop.permute.xlu0 %3057
      %3059 = vrot.lane.b32.xlu0 %v2989, 8
      %v3060 = vpop.permute.xlu0 %3059
      %3061 = vrot.lane.b32.xlu0 %v2990, 8
      %v3062 = vpop.permute.xlu0 %3061
      %3063 = vrot.lane.b32.xlu0 %v2991, 8
      %v3064 = vpop.permute.xlu0 %3063
      %3065 = vrot.lane.b32.xlu0 %v2992, 8
      %v3066 = vpop.permute.xlu0 %3065
      %3067 = vrot.lane.b32.xlu0 %v2993, 8
      %v3068 = vpop.permute.xlu0 %3067
      %3069 = vrot.lane.b32.xlu0 %v2994, 8
      %v3070 = vpop.permute.xlu0 %3069
      %3071 = vrot.lane.b32.xlu0 %v2995, 8
      %v3072 = vpop.permute.xlu0 %3071
      %3073 = vrot.lane.b32.xlu0 %v2996, 8
      %v3074 = vpop.permute.xlu0 %3073
      %3075 = vrot.lane.b32.xlu0 %v2997, 8
      %v3076 = vpop.permute.xlu0 %3075
      %3077 = vrot.lane.b32.xlu0 %v2998, 8
      %v3078 = vpop.permute.xlu0 %3077
      %3079 = vrot.lane.b32.xlu0 %v2999, 8
      %v3080 = vpop.permute.xlu0 %3079
      %3081 = vrot.lane.b32.xlu0 %v3000, 8
      %v3082 = vpop.permute.xlu0 %3081
      %3083 = vrot.lane.b32.xlu0 %v3001, 8
      %v3084 = vpop.permute.xlu0 %3083
      %3085 = vrot.lane.b32.xlu0 %v3002, 8
      %v3086 = vpop.permute.xlu0 %3085
      %3087 = vrot.lane.b32.xlu0 %v3003, 8
      %v3088 = vpop.permute.xlu0 %3087
      %3089 = vrot.lane.b32.xlu0 %v3004, 8
      %v3090 = vpop.permute.xlu0 %3089
      %3091 = vrot.lane.b32.xlu0 %v3005, 8
      %v3092 = vpop.permute.xlu0 %3091
      %3093 = vrot.lane.b32.xlu0 %v3006, 8
      %v3094 = vpop.permute.xlu0 %3093
      %3095 = vrot.lane.b32.xlu0 %v3007, 8
      %v3096 = vpop.permute.xlu0 %3095
      %3097 = vrot.lane.b32.xlu0 %v3008, 8
      %v3098 = vpop.permute.xlu0 %3097
      %3099 = vrot.lane.b32.xlu0 %v3009, 8
      %v3100 = vpop.permute.xlu0 %3099
      %3101 = vrot.lane.b32.xlu0 %v3010, 8
      %v3102 = vpop.permute.xlu0 %3101
      %3103 = vrot.lane.b32.xlu0 %v3011, 8
      %v3104 = vpop.permute.xlu0 %3103
      %3105 = vrot.lane.b32.xlu0 %v3012, 8
      %v3106 = vpop.permute.xlu0 %3105
      %3107 = vrot.lane.b32.xlu0 %v3013, 8
      %v3108 = vpop.permute.xlu0 %3107
      %3109 = vrot.lane.b32.xlu0 %v3014, 8
      %v3110 = vpop.permute.xlu0 %3109
      %vm3143 = vcmask 130112
      %3144 = vst.msk [vmem:[#allocation4] sm:$0xff] %vm3143, %v3048
      %3145 = vst.msk [vmem:[#allocation4 + $0x8] sm:$0xff] %vm3143, %v3050
      %3146 = vst.msk [vmem:[#allocation4 + $0x10] sm:$0xff] %vm3143, %v3052
      %3147 = vst.msk [vmem:[#allocation4 + $0x18] sm:$0xff] %vm3143, %v3054
      %3148 = vst.msk [vmem:[#allocation4 + $0x20] sm:$0xff] %vm3143, %v3056
      %3149 = vst.msk [vmem:[#allocation4 + $0x28] sm:$0xff] %vm3143, %v3058
      %3150 = vst.msk [vmem:[#allocation4 + $0x30] sm:$0xff] %vm3143, %v3060
      %3151 = vst.msk [vmem:[#allocation4 + $0x38] sm:$0xff] %vm3143, %v3062
      %3152 = vst.msk [vmem:[#allocation4 + $0x40] sm:$0xff] %vm3143, %v3064
      %3153 = vst.msk [vmem:[#allocation4 + $0x48] sm:$0xff] %vm3143, %v3066
      %3154 = vst.msk [vmem:[#allocation4 + $0x50] sm:$0xff] %vm3143, %v3068
      %3155 = vst.msk [vmem:[#allocation4 + $0x58] sm:$0xff] %vm3143, %v3070
      %3156 = vst.msk [vmem:[#allocation4 + $0x60] sm:$0xff] %vm3143, %v3072
      %3157 = vst.msk [vmem:[#allocation4 + $0x68] sm:$0xff] %vm3143, %v3074
      %3158 = vst.msk [vmem:[#allocation4 + $0x70] sm:$0xff] %vm3143, %v3076
      %3159 = vst.msk [vmem:[#allocation4 + $0x78] sm:$0xff] %vm3143, %v3078
      %3160 = vst.msk [vmem:[#allocation4 + $0x80] sm:$0xff] %vm3143, %v3080
      %3161 = vst.msk [vmem:[#allocation4 + $0x88] sm:$0xff] %vm3143, %v3082
      %3162 = vst.msk [vmem:[#allocation4 + $0x90] sm:$0xff] %vm3143, %v3084
      %3163 = vst.msk [vmem:[#allocation4 + $0x98] sm:$0xff] %vm3143, %v3086
      %3164 = vst.msk [vmem:[#allocation4 + $0xa0] sm:$0xff] %vm3143, %v3088
      %3165 = vst.msk [vmem:[#allocation4 + $0xa8] sm:$0xff] %vm3143, %v3090
      %3166 = vst.msk [vmem:[#allocation4 + $0xb0] sm:$0xff] %vm3143, %v3092
      %3167 = vst.msk [vmem:[#allocation4 + $0xb8] sm:$0xff] %vm3143, %v3094
      %3168 = vst.msk [vmem:[#allocation4 + $0xc0] sm:$0xff] %vm3143, %v3096
      %3169 = vst.msk [vmem:[#allocation4 + $0xc8] sm:$0xff] %vm3143, %v3098
      %3170 = vst.msk [vmem:[#allocation4 + $0xd0] sm:$0xff] %vm3143, %v3100
      %3171 = vst.msk [vmem:[#allocation4 + $0xd8] sm:$0xff] %vm3143, %v3102
      %3172 = vst.msk [vmem:[#allocation4 + $0xe0] sm:$0xff] %vm3143, %v3104
      %3173 = vst.msk [vmem:[#allocation4 + $0xe8] sm:$0xff] %vm3143, %v3106
      %3174 = vst.msk [vmem:[#allocation4 + $0xf0] sm:$0xff] %vm3143, %v3108
      %3175 = vst.msk [vmem:[#allocation4 + $0xf8] sm:$0xff] %vm3143, %v3110
      %v3176 = vld [vmem:[#allocation3 + $0x2] sm:$0xff]
      %v3177 = vld [vmem:[#allocation3 + $0xa] sm:$0xff]
      %v3178 = vld [vmem:[#allocation3 + $0x1a] sm:$0xff]
      %v3179 = vld [vmem:[#allocation3 + $0x22] sm:$0xff]
      %v3180 = vld [vmem:[#allocation3 + $0x32] sm:$0xff]
      %v3181 = vld [vmem:[#allocation3 + $0x3a] sm:$0xff]
      %v3182 = vld [vmem:[#allocation3 + $0x4a] sm:$0xff]
      %v3183 = vld [vmem:[#allocation3 + $0x52] sm:$0xff]
      %v3184 = vld [vmem:[#allocation3 + $0x62] sm:$0xff]
      %v3185 = vld [vmem:[#allocation3 + $0x6a] sm:$0xff]
      %v3186 = vld [vmem:[#allocation3 + $0x7a] sm:$0xff]
      %v3187 = vld [vmem:[#allocation3 + $0x82] sm:$0xff]
      %v3188 = vld [vmem:[#allocation3 + $0x92] sm:$0xff]
      %v3189 = vld [vmem:[#allocation3 + $0x9a] sm:$0xff]
      %v3190 = vld [vmem:[#allocation3 + $0xaa] sm:$0xff]
      %v3191 = vld [vmem:[#allocation3 + $0xb2] sm:$0xff]
      %v3192 = vld [vmem:[#allocation3 + $0xc2] sm:$0xff]
      %v3193 = vld [vmem:[#allocation3 + $0xca] sm:$0xff]
      %v3194 = vld [vmem:[#allocation3 + $0xda] sm:$0xff]
      %v3195 = vld [vmem:[#allocation3 + $0xe2] sm:$0xff]
      %v3196 = vld [vmem:[#allocation3 + $0xf2] sm:$0xff]
      %v3197 = vld [vmem:[#allocation3 + $0xfa] sm:$0xff]
      %v3198 = vld [vmem:[#allocation3 + $0x10a] sm:$0xff]
      %v3199 = vld [vmem:[#allocation3 + $0x112] sm:$0xff]
      %v3200 = vld [vmem:[#allocation3 + $0x122] sm:$0xff]
      %v3201 = vld [vmem:[#allocation3 + $0x12a] sm:$0xff]
      %v3202 = vld [vmem:[#allocation3 + $0x13a] sm:$0xff]
      %v3203 = vld [vmem:[#allocation3 + $0x142] sm:$0xff]
      %v3204 = vld [vmem:[#allocation3 + $0x152] sm:$0xff]
      %v3205 = vld [vmem:[#allocation3 + $0x15a] sm:$0xff]
      %v3206 = vld [vmem:[#allocation3 + $0x16a] sm:$0xff]
      %v3207 = vld [vmem:[#allocation3 + $0x172] sm:$0xff]
      %3240 = vrot.lane.b32.xlu0 %v3176, 16
      %v3241 = vpop.permute.xlu0 %3240
      %3242 = vrot.lane.b32.xlu0 %v3177, 16
      %v3243 = vpop.permute.xlu0 %3242
      %3244 = vrot.lane.b32.xlu0 %v3178, 16
      %v3245 = vpop.permute.xlu0 %3244
      %3246 = vrot.lane.b32.xlu0 %v3179, 16
      %v3247 = vpop.permute.xlu0 %3246
      %3248 = vrot.lane.b32.xlu0 %v3180, 16
      %v3249 = vpop.permute.xlu0 %3248
      %3250 = vrot.lane.b32.xlu0 %v3181, 16
      %v3251 = vpop.permute.xlu0 %3250
      %3252 = vrot.lane.b32.xlu0 %v3182, 16
      %v3253 = vpop.permute.xlu0 %3252
      %3254 = vrot.lane.b32.xlu0 %v3183, 16
      %v3255 = vpop.permute.xlu0 %3254
      %3256 = vrot.lane.b32.xlu0 %v3184, 16
      %v3257 = vpop.permute.xlu0 %3256
      %3258 = vrot.lane.b32.xlu0 %v3185, 16
      %v3259 = vpop.permute.xlu0 %3258
      %3260 = vrot.lane.b32.xlu0 %v3186, 16
      %v3261 = vpop.permute.xlu0 %3260
      %3262 = vrot.lane.b32.xlu0 %v3187, 16
      %v3263 = vpop.permute.xlu0 %3262
      %3264 = vrot.lane.b32.xlu0 %v3188, 16
      %v3265 = vpop.permute.xlu0 %3264
      %3266 = vrot.lane.b32.xlu0 %v3189, 16
      %v3267 = vpop.permute.xlu0 %3266
      %3268 = vrot.lane.b32.xlu0 %v3190, 16
      %v3269 = vpop.permute.xlu0 %3268
      %3270 = vrot.lane.b32.xlu0 %v3191, 16
      %v3271 = vpop.permute.xlu0 %3270
      %3272 = vrot.lane.b32.xlu0 %v3192, 16
      %v3273 = vpop.permute.xlu0 %3272
      %3274 = vrot.lane.b32.xlu0 %v3193, 16
      %v3275 = vpop.permute.xlu0 %3274
      %3276 = vrot.lane.b32.xlu0 %v3194, 16
      %v3277 = vpop.permute.xlu0 %3276
      %3278 = vrot.lane.b32.xlu0 %v3195, 16
      %v3279 = vpop.permute.xlu0 %3278
      %3280 = vrot.lane.b32.xlu0 %v3196, 16
      %v3281 = vpop.permute.xlu0 %3280
      %3282 = vrot.lane.b32.xlu0 %v3197, 16
      %v3283 = vpop.permute.xlu0 %3282
      %3284 = vrot.lane.b32.xlu0 %v3198, 16
      %v3285 = vpop.permute.xlu0 %3284
      %3286 = vrot.lane.b32.xlu0 %v3199, 16
      %v3287 = vpop.permute.xlu0 %3286
      %3288 = vrot.lane.b32.xlu0 %v3200, 16
      %v3289 = vpop.permute.xlu0 %3288
      %3290 = vrot.lane.b32.xlu0 %v3201, 16
      %v3291 = vpop.permute.xlu0 %3290
      %3292 = vrot.lane.b32.xlu0 %v3202, 16
      %v3293 = vpop.permute.xlu0 %3292
      %3294 = vrot.lane.b32.xlu0 %v3203, 16
      %v3295 = vpop.permute.xlu0 %3294
      %3296 = vrot.lane.b32.xlu0 %v3204, 16
      %v3297 = vpop.permute.xlu0 %3296
      %3298 = vrot.lane.b32.xlu0 %v3205, 16
      %v3299 = vpop.permute.xlu0 %3298
      %3300 = vrot.lane.b32.xlu0 %v3206, 16
      %v3301 = vpop.permute.xlu0 %3300
      %3302 = vrot.lane.b32.xlu0 %v3207, 16
      %v3303 = vpop.permute.xlu0 %3302
      %vm3336 = vcmask 195712
      %3337 = vst.msk [vmem:[#allocation4] sm:$0xff] %vm3336, %v3241
      %3338 = vst.msk [vmem:[#allocation4 + $0x8] sm:$0xff] %vm3336, %v3243
      %3339 = vst.msk [vmem:[#allocation4 + $0x10] sm:$0xff] %vm3336, %v3245
      %3340 = vst.msk [vmem:[#allocation4 + $0x18] sm:$0xff] %vm3336, %v3247
      %3341 = vst.msk [vmem:[#allocation4 + $0x20] sm:$0xff] %vm3336, %v3249
      %3342 = vst.msk [vmem:[#allocation4 + $0x28] sm:$0xff] %vm3336, %v3251
      %3343 = vst.msk [vmem:[#allocation4 + $0x30] sm:$0xff] %vm3336, %v3253
      %3344 = vst.msk [vmem:[#allocation4 + $0x38] sm:$0xff] %vm3336, %v3255
      %3345 = vst.msk [vmem:[#allocation4 + $0x40] sm:$0xff] %vm3336, %v3257
      %3346 = vst.msk [vmem:[#allocation4 + $0x48] sm:$0xff] %vm3336, %v3259
      %3347 = vst.msk [vmem:[#allocation4 + $0x50] sm:$0xff] %vm3336, %v3261
      %3348 = vst.msk [vmem:[#allocation4 + $0x58] sm:$0xff] %vm3336, %v3263
      %3349 = vst.msk [vmem:[#allocation4 + $0x60] sm:$0xff] %vm3336, %v3265
      %3350 = vst.msk [vmem:[#allocation4 + $0x68] sm:$0xff] %vm3336, %v3267
      %3351 = vst.msk [vmem:[#allocation4 + $0x70] sm:$0xff] %vm3336, %v3269
      %3352 = vst.msk [vmem:[#allocation4 + $0x78] sm:$0xff] %vm3336, %v3271
      %3353 = vst.msk [vmem:[#allocation4 + $0x80] sm:$0xff] %vm3336, %v3273
      %3354 = vst.msk [vmem:[#allocation4 + $0x88] sm:$0xff] %vm3336, %v3275
      %3355 = vst.msk [vmem:[#allocation4 + $0x90] sm:$0xff] %vm3336, %v3277
      %3356 = vst.msk [vmem:[#allocation4 + $0x98] sm:$0xff] %vm3336, %v3279
      %3357 = vst.msk [vmem:[#allocation4 + $0xa0] sm:$0xff] %vm3336, %v3281
      %3358 = vst.msk [vmem:[#allocation4 + $0xa8] sm:$0xff] %vm3336, %v3283
      %3359 = vst.msk [vmem:[#allocation4 + $0xb0] sm:$0xff] %vm3336, %v3285
      %3360 = vst.msk [vmem:[#allocation4 + $0xb8] sm:$0xff] %vm3336, %v3287
      %3361 = vst.msk [vmem:[#allocation4 + $0xc0] sm:$0xff] %vm3336, %v3289
      %3362 = vst.msk [vmem:[#allocation4 + $0xc8] sm:$0xff] %vm3336, %v3291
      %3363 = vst.msk [vmem:[#allocation4 + $0xd0] sm:$0xff] %vm3336, %v3293
      %3364 = vst.msk [vmem:[#allocation4 + $0xd8] sm:$0xff] %vm3336, %v3295
      %3365 = vst.msk [vmem:[#allocation4 + $0xe0] sm:$0xff] %vm3336, %v3297
      %3366 = vst.msk [vmem:[#allocation4 + $0xe8] sm:$0xff] %vm3336, %v3299
      %3367 = vst.msk [vmem:[#allocation4 + $0xf0] sm:$0xff] %vm3336, %v3301
      %3368 = vst.msk [vmem:[#allocation4 + $0xf8] sm:$0xff] %vm3336, %v3303
      %v3369 = vld [vmem:[%s654] sm:$0xff]
      %v3370 = vld [vmem:[%s654 + $0x8] sm:$0xff]
      %v3371 = vld [vmem:[%s654 + $0x18] sm:$0xff]
      %v3372 = vld [vmem:[%s654 + $0x20] sm:$0xff]
      %v3373 = vld [vmem:[%s654 + $0x30] sm:$0xff]
      %v3374 = vld [vmem:[%s654 + $0x38] sm:$0xff]
      %v3375 = vld [vmem:[%s654 + $0x48] sm:$0xff]
      %v3376 = vld [vmem:[%s654 + $0x50] sm:$0xff]
      %v3377 = vld [vmem:[%s654 + $0x60] sm:$0xff]
      %v3378 = vld [vmem:[%s654 + $0x68] sm:$0xff]
      %v3379 = vld [vmem:[%s654 + $0x78] sm:$0xff]
      %v3380 = vld [vmem:[%s654 + $0x80] sm:$0xff]
      %v3381 = vld [vmem:[%s654 + $0x90] sm:$0xff]
      %v3382 = vld [vmem:[%s654 + $0x98] sm:$0xff]
      %v3383 = vld [vmem:[%s654 + $0xa8] sm:$0xff]
      %v3384 = vld [vmem:[%s654 + $0xb0] sm:$0xff]
      %v3385 = vld [vmem:[%s654 + $0xc0] sm:$0xff]
      %v3386 = vld [vmem:[%s654 + $0xc8] sm:$0xff]
      %v3387 = vld [vmem:[%s654 + $0xd8] sm:$0xff]
      %v3388 = vld [vmem:[%s654 + $0xe0] sm:$0xff]
      %v3389 = vld [vmem:[%s654 + $0xf0] sm:$0xff]
      %v3390 = vld [vmem:[%s654 + $0xf8] sm:$0xff]
      %v3391 = vld [vmem:[%s654 + $0x108] sm:$0xff]
      %v3392 = vld [vmem:[%s654 + $0x110] sm:$0xff]
      %v3393 = vld [vmem:[%s654 + $0x120] sm:$0xff]
      %v3394 = vld [vmem:[%s654 + $0x128] sm:$0xff]
      %v3395 = vld [vmem:[%s654 + $0x138] sm:$0xff]
      %v3396 = vld [vmem:[%s654 + $0x140] sm:$0xff]
      %v3397 = vld [vmem:[%s654 + $0x150] sm:$0xff]
      %v3398 = vld [vmem:[%s654 + $0x158] sm:$0xff]
      %v3399 = vld [vmem:[%s654 + $0x168] sm:$0xff]
      %v3400 = vld [vmem:[%s654 + $0x170] sm:$0xff]
      %3433 = vrot.lane.b32.xlu0 %v3369, 24
      %v3434 = vpop.permute.xlu0 %3433
      %3435 = vrot.lane.b32.xlu0 %v3370, 24
      %v3436 = vpop.permute.xlu0 %3435
      %3437 = vrot.lane.b32.xlu0 %v3371, 24
      %v3438 = vpop.permute.xlu0 %3437
      %3439 = vrot.lane.b32.xlu0 %v3372, 24
      %v3440 = vpop.permute.xlu0 %3439
      %3441 = vrot.lane.b32.xlu0 %v3373, 24
      %v3442 = vpop.permute.xlu0 %3441
      %3443 = vrot.lane.b32.xlu0 %v3374, 24
      %v3444 = vpop.permute.xlu0 %3443
      %3445 = vrot.lane.b32.xlu0 %v3375, 24
      %v3446 = vpop.permute.xlu0 %3445
      %3447 = vrot.lane.b32.xlu0 %v3376, 24
      %v3448 = vpop.permute.xlu0 %3447
      %3449 = vrot.lane.b32.xlu0 %v3377, 24
      %v3450 = vpop.permute.xlu0 %3449
      %3451 = vrot.lane.b32.xlu0 %v3378, 24
      %v3452 = vpop.permute.xlu0 %3451
      %3453 = vrot.lane.b32.xlu0 %v3379, 24
      %v3454 = vpop.permute.xlu0 %3453
      %3455 = vrot.lane.b32.xlu0 %v3380, 24
      %v3456 = vpop.permute.xlu0 %3455
      %3457 = vrot.lane.b32.xlu0 %v3381, 24
      %v3458 = vpop.permute.xlu0 %3457
      %3459 = vrot.lane.b32.xlu0 %v3382, 24
      %v3460 = vpop.permute.xlu0 %3459
      %3461 = vrot.lane.b32.xlu0 %v3383, 24
      %v3462 = vpop.permute.xlu0 %3461
      %3463 = vrot.lane.b32.xlu0 %v3384, 24
      %v3464 = vpop.permute.xlu0 %3463
      %3465 = vrot.lane.b32.xlu0 %v3385, 24
      %v3466 = vpop.permute.xlu0 %3465
      %3467 = vrot.lane.b32.xlu0 %v3386, 24
      %v3468 = vpop.permute.xlu0 %3467
      %3469 = vrot.lane.b32.xlu0 %v3387, 24
      %v3470 = vpop.permute.xlu0 %3469
      %3471 = vrot.lane.b32.xlu0 %v3388, 24
      %v3472 = vpop.permute.xlu0 %3471
      %3473 = vrot.lane.b32.xlu0 %v3389, 24
      %v3474 = vpop.permute.xlu0 %3473
      %3475 = vrot.lane.b32.xlu0 %v3390, 24
      %v3476 = vpop.permute.xlu0 %3475
      %3477 = vrot.lane.b32.xlu0 %v3391, 24
      %v3478 = vpop.permute.xlu0 %3477
      %3479 = vrot.lane.b32.xlu0 %v3392, 24
      %v3480 = vpop.permute.xlu0 %3479
      %3481 = vrot.lane.b32.xlu0 %v3393, 24
      %v3482 = vpop.permute.xlu0 %3481
      %3483 = vrot.lane.b32.xlu0 %v3394, 24
      %v3484 = vpop.permute.xlu0 %3483
      %3485 = vrot.lane.b32.xlu0 %v3395, 24
      %v3486 = vpop.permute.xlu0 %3485
      %3487 = vrot.lane.b32.xlu0 %v3396, 24
      %v3488 = vpop.permute.xlu0 %3487
      %3489 = vrot.lane.b32.xlu0 %v3397, 24
      %v3490 = vpop.permute.xlu0 %3489
      %3491 = vrot.lane.b32.xlu0 %v3398, 24
      %v3492 = vpop.permute.xlu0 %3491
      %3493 = vrot.lane.b32.xlu0 %v3399, 24
      %v3494 = vpop.permute.xlu0 %3493
      %3495 = vrot.lane.b32.xlu0 %v3400, 24
      %v3496 = vpop.permute.xlu0 %3495
      %vm3529 = vcmask 261312
      %3530 = vst.msk [vmem:[#allocation4] sm:$0xff] %vm3529, %v3434
      %3531 = vst.msk [vmem:[#allocation4 + $0x8] sm:$0xff] %vm3529, %v3436
      %3532 = vst.msk [vmem:[#allocation4 + $0x10] sm:$0xff] %vm3529, %v3438
      %3533 = vst.msk [vmem:[#allocation4 + $0x18] sm:$0xff] %vm3529, %v3440
      %3534 = vst.msk [vmem:[#allocation4 + $0x20] sm:$0xff] %vm3529, %v3442
      %3535 = vst.msk [vmem:[#allocation4 + $0x28] sm:$0xff] %vm3529, %v3444
      %3536 = vst.msk [vmem:[#allocation4 + $0x30] sm:$0xff] %vm3529, %v3446
      %3537 = vst.msk [vmem:[#allocation4 + $0x38] sm:$0xff] %vm3529, %v3448
      %3538 = vst.msk [vmem:[#allocation4 + $0x40] sm:$0xff] %vm3529, %v3450
      %3539 = vst.msk [vmem:[#allocation4 + $0x48] sm:$0xff] %vm3529, %v3452
      %3540 = vst.msk [vmem:[#allocation4 + $0x50] sm:$0xff] %vm3529, %v3454
      %3541 = vst.msk [vmem:[#allocation4 + $0x58] sm:$0xff] %vm3529, %v3456
      %3542 = vst.msk [vmem:[#allocation4 + $0x60] sm:$0xff] %vm3529, %v3458
      %3543 = vst.msk [vmem:[#allocation4 + $0x68] sm:$0xff] %vm3529, %v3460
      %3544 = vst.msk [vmem:[#allocation4 + $0x70] sm:$0xff] %vm3529, %v3462
      %3545 = vst.msk [vmem:[#allocation4 + $0x78] sm:$0xff] %vm3529, %v3464
      %3546 = vst.msk [vmem:[#allocation4 + $0x80] sm:$0xff] %vm3529, %v3466
      %3547 = vst.msk [vmem:[#allocation4 + $0x88] sm:$0xff] %vm3529, %v3468
      %3548 = vst.msk [vmem:[#allocation4 + $0x90] sm:$0xff] %vm3529, %v3470
      %3549 = vst.msk [vmem:[#allocation4 + $0x98] sm:$0xff] %vm3529, %v3472
      %3550 = vst.msk [vmem:[#allocation4 + $0xa0] sm:$0xff] %vm3529, %v3474
      %3551 = vst.msk [vmem:[#allocation4 + $0xa8] sm:$0xff] %vm3529, %v3476
      %3552 = vst.msk [vmem:[#allocation4 + $0xb0] sm:$0xff] %vm3529, %v3478
      %3553 = vst.msk [vmem:[#allocation4 + $0xb8] sm:$0xff] %vm3529, %v3480
      %3554 = vst.msk [vmem:[#allocation4 + $0xc0] sm:$0xff] %vm3529, %v3482
      %3555 = vst.msk [vmem:[#allocation4 + $0xc8] sm:$0xff] %vm3529, %v3484
      %3556 = vst.msk [vmem:[#allocation4 + $0xd0] sm:$0xff] %vm3529, %v3486
      %3557 = vst.msk [vmem:[#allocation4 + $0xd8] sm:$0xff] %vm3529, %v3488
      %3558 = vst.msk [vmem:[#allocation4 + $0xe0] sm:$0xff] %vm3529, %v3490
      %3559 = vst.msk [vmem:[#allocation4 + $0xe8] sm:$0xff] %vm3529, %v3492
      %3560 = vst.msk [vmem:[#allocation4 + $0xf0] sm:$0xff] %vm3529, %v3494
      %3561 = vst.msk [vmem:[#allocation4 + $0xf8] sm:$0xff] %vm3529, %v3496
      %v3562 = vld [vmem:[%s654 + $0x1] sm:$0xff]
      %v3563 = vld [vmem:[%s654 + $0x9] sm:$0xff]
      %v3564 = vld [vmem:[%s654 + $0x19] sm:$0xff]
      %v3565 = vld [vmem:[%s654 + $0x21] sm:$0xff]
      %v3566 = vld [vmem:[%s654 + $0x31] sm:$0xff]
      %v3567 = vld [vmem:[%s654 + $0x39] sm:$0xff]
      %v3568 = vld [vmem:[%s654 + $0x49] sm:$0xff]
      %v3569 = vld [vmem:[%s654 + $0x51] sm:$0xff]
      %v3570 = vld [vmem:[%s654 + $0x61] sm:$0xff]
      %v3571 = vld [vmem:[%s654 + $0x69] sm:$0xff]
      %v3572 = vld [vmem:[%s654 + $0x79] sm:$0xff]
      %v3573 = vld [vmem:[%s654 + $0x81] sm:$0xff]
      %v3574 = vld [vmem:[%s654 + $0x91] sm:$0xff]
      %v3575 = vld [vmem:[%s654 + $0x99] sm:$0xff]
      %v3576 = vld [vmem:[%s654 + $0xa9] sm:$0xff]
      %v3577 = vld [vmem:[%s654 + $0xb1] sm:$0xff]
      %v3578 = vld [vmem:[%s654 + $0xc1] sm:$0xff]
      %v3579 = vld [vmem:[%s654 + $0xc9] sm:$0xff]
      %v3580 = vld [vmem:[%s654 + $0xd9] sm:$0xff]
      %v3581 = vld [vmem:[%s654 + $0xe1] sm:$0xff]
      %v3582 = vld [vmem:[%s654 + $0xf1] sm:$0xff]
      %v3583 = vld [vmem:[%s654 + $0xf9] sm:$0xff]
      %v3584 = vld [vmem:[%s654 + $0x109] sm:$0xff]
      %v3585 = vld [vmem:[%s654 + $0x111] sm:$0xff]
      %v3586 = vld [vmem:[%s654 + $0x121] sm:$0xff]
      %v3587 = vld [vmem:[%s654 + $0x129] sm:$0xff]
      %v3588 = vld [vmem:[%s654 + $0x139] sm:$0xff]
      %v3589 = vld [vmem:[%s654 + $0x141] sm:$0xff]
      %v3590 = vld [vmem:[%s654 + $0x151] sm:$0xff]
      %v3591 = vld [vmem:[%s654 + $0x159] sm:$0xff]
      %v3592 = vld [vmem:[%s654 + $0x169] sm:$0xff]
      %v3593 = vld [vmem:[%s654 + $0x171] sm:$0xff]
      %3626 = vrot.lane.b32.xlu0 %v3562, 32
      %v3627 = vpop.permute.xlu0 %3626
      %3628 = vrot.lane.b32.xlu0 %v3563, 32
      %v3629 = vpop.permute.xlu0 %3628
      %3630 = vrot.lane.b32.xlu0 %v3564, 32
      %v3631 = vpop.permute.xlu0 %3630
      %3632 = vrot.lane.b32.xlu0 %v3565, 32
      %v3633 = vpop.permute.xlu0 %3632
      %3634 = vrot.lane.b32.xlu0 %v3566, 32
      %v3635 = vpop.permute.xlu0 %3634
      %3636 = vrot.lane.b32.xlu0 %v3567, 32
      %v3637 = vpop.permute.xlu0 %3636
      %3638 = vrot.lane.b32.xlu0 %v3568, 32
      %v3639 = vpop.permute.xlu0 %3638
      %3640 = vrot.lane.b32.xlu0 %v3569, 32
      %v3641 = vpop.permute.xlu0 %3640
      %3642 = vrot.lane.b32.xlu0 %v3570, 32
      %v3643 = vpop.permute.xlu0 %3642
      %3644 = vrot.lane.b32.xlu0 %v3571, 32
      %v3645 = vpop.permute.xlu0 %3644
      %3646 = vrot.lane.b32.xlu0 %v3572, 32
      %v3647 = vpop.permute.xlu0 %3646
      %3648 = vrot.lane.b32.xlu0 %v3573, 32
      %v3649 = vpop.permute.xlu0 %3648
      %3650 = vrot.lane.b32.xlu0 %v3574, 32
      %v3651 = vpop.permute.xlu0 %3650
      %3652 = vrot.lane.b32.xlu0 %v3575, 32
      %v3653 = vpop.permute.xlu0 %3652
      %3654 = vrot.lane.b32.xlu0 %v3576, 32
      %v3655 = vpop.permute.xlu0 %3654
      %3656 = vrot.lane.b32.xlu0 %v3577, 32
      %v3657 = vpop.permute.xlu0 %3656
      %3658 = vrot.lane.b32.xlu0 %v3578, 32
      %v3659 = vpop.permute.xlu0 %3658
      %3660 = vrot.lane.b32.xlu0 %v3579, 32
      %v3661 = vpop.permute.xlu0 %3660
      %3662 = vrot.lane.b32.xlu0 %v3580, 32
      %v3663 = vpop.permute.xlu0 %3662
      %3664 = vrot.lane.b32.xlu0 %v3581, 32
      %v3665 = vpop.permute.xlu0 %3664
      %3666 = vrot.lane.b32.xlu0 %v3582, 32
      %v3667 = vpop.permute.xlu0 %3666
      %3668 = vrot.lane.b32.xlu0 %v3583, 32
      %v3669 = vpop.permute.xlu0 %3668
      %3670 = vrot.lane.b32.xlu0 %v3584, 32
      %v3671 = vpop.permute.xlu0 %3670
      %3672 = vrot.lane.b32.xlu0 %v3585, 32
      %v3673 = vpop.permute.xlu0 %3672
      %3674 = vrot.lane.b32.xlu0 %v3586, 32
      %v3675 = vpop.permute.xlu0 %3674
      %3676 = vrot.lane.b32.xlu0 %v3587, 32
      %v3677 = vpop.permute.xlu0 %3676
      %3678 = vrot.lane.b32.xlu0 %v3588, 32
      %v3679 = vpop.permute.xlu0 %3678
      %3680 = vrot.lane.b32.xlu0 %v3589, 32
      %v3681 = vpop.permute.xlu0 %3680
      %3682 = vrot.lane.b32.xlu0 %v3590, 32
      %v3683 = vpop.permute.xlu0 %3682
      %3684 = vrot.lane.b32.xlu0 %v3591, 32
      %v3685 = vpop.permute.xlu0 %3684
      %3686 = vrot.lane.b32.xlu0 %v3592, 32
      %v3687 = vpop.permute.xlu0 %3686
      %3688 = vrot.lane.b32.xlu0 %v3593, 32
      %v3689 = vpop.permute.xlu0 %3688
      %vm3722 = vcmask 326912
      %3723 = vst.msk [vmem:[#allocation4] sm:$0xff] %vm3722, %v3627
      %3724 = vst.msk [vmem:[#allocation4 + $0x8] sm:$0xff] %vm3722, %v3629
      %3725 = vst.msk [vmem:[#allocation4 + $0x10] sm:$0xff] %vm3722, %v3631
      %3726 = vst.msk [vmem:[#allocation4 + $0x18] sm:$0xff] %vm3722, %v3633
      %3727 = vst.msk [vmem:[#allocation4 + $0x20] sm:$0xff] %vm3722, %v3635
      %3728 = vst.msk [vmem:[#allocation4 + $0x28] sm:$0xff] %vm3722, %v3637
      %3729 = vst.msk [vmem:[#allocation4 + $0x30] sm:$0xff] %vm3722, %v3639
      %3730 = vst.msk [vmem:[#allocation4 + $0x38] sm:$0xff] %vm3722, %v3641
      %3731 = vst.msk [vmem:[#allocation4 + $0x40] sm:$0xff] %vm3722, %v3643
      %3732 = vst.msk [vmem:[#allocation4 + $0x48] sm:$0xff] %vm3722, %v3645
      %3733 = vst.msk [vmem:[#allocation4 + $0x50] sm:$0xff] %vm3722, %v3647
      %3734 = vst.msk [vmem:[#allocation4 + $0x58] sm:$0xff] %vm3722, %v3649
      %3735 = vst.msk [vmem:[#allocation4 + $0x60] sm:$0xff] %vm3722, %v3651
      %3736 = vst.msk [vmem:[#allocation4 + $0x68] sm:$0xff] %vm3722, %v3653
      %3737 = vst.msk [vmem:[#allocation4 + $0x70] sm:$0xff] %vm3722, %v3655
      %3738 = vst.msk [vmem:[#allocation4 + $0x78] sm:$0xff] %vm3722, %v3657
      %3739 = vst.msk [vmem:[#allocation4 + $0x80] sm:$0xff] %vm3722, %v3659
      %3740 = vst.msk [vmem:[#allocation4 + $0x88] sm:$0xff] %vm3722, %v3661
      %3741 = vst.msk [vmem:[#allocation4 + $0x90] sm:$0xff] %vm3722, %v3663
      %3742 = vst.msk [vmem:[#allocation4 + $0x98] sm:$0xff] %vm3722, %v3665
      %3743 = vst.msk [vmem:[#allocation4 + $0xa0] sm:$0xff] %vm3722, %v3667
      %3744 = vst.msk [vmem:[#allocation4 + $0xa8] sm:$0xff] %vm3722, %v3669
      %3745 = vst.msk [vmem:[#allocation4 + $0xb0] sm:$0xff] %vm3722, %v3671
      %3746 = vst.msk [vmem:[#allocation4 + $0xb8] sm:$0xff] %vm3722, %v3673
      %3747 = vst.msk [vmem:[#allocation4 + $0xc0] sm:$0xff] %vm3722, %v3675
      %3748 = vst.msk [vmem:[#allocation4 + $0xc8] sm:$0xff] %vm3722, %v3677
      %3749 = vst.msk [vmem:[#allocation4 + $0xd0] sm:$0xff] %vm3722, %v3679
      %3750 = vst.msk [vmem:[#allocation4 + $0xd8] sm:$0xff] %vm3722, %v3681
      %3751 = vst.msk [vmem:[#allocation4 + $0xe0] sm:$0xff] %vm3722, %v3683
      %3752 = vst.msk [vmem:[#allocation4 + $0xe8] sm:$0xff] %vm3722, %v3685
      %3753 = vst.msk [vmem:[#allocation4 + $0xf0] sm:$0xff] %vm3722, %v3687
      %3754 = vst.msk [vmem:[#allocation4 + $0xf8] sm:$0xff] %vm3722, %v3689
      %v3755 = vld [vmem:[%s654 + $0x2] sm:$0xff]
      %v3756 = vld [vmem:[%s654 + $0xa] sm:$0xff]
      %v3757 = vld [vmem:[%s654 + $0x1a] sm:$0xff]
      %v3758 = vld [vmem:[%s654 + $0x22] sm:$0xff]
      %v3759 = vld [vmem:[%s654 + $0x32] sm:$0xff]
      %v3760 = vld [vmem:[%s654 + $0x3a] sm:$0xff]
      %v3761 = vld [vmem:[%s654 + $0x4a] sm:$0xff]
      %v3762 = vld [vmem:[%s654 + $0x52] sm:$0xff]
      %v3763 = vld [vmem:[%s654 + $0x62] sm:$0xff]
      %v3764 = vld [vmem:[%s654 + $0x6a] sm:$0xff]
      %v3765 = vld [vmem:[%s654 + $0x7a] sm:$0xff]
      %v3766 = vld [vmem:[%s654 + $0x82] sm:$0xff]
      %v3767 = vld [vmem:[%s654 + $0x92] sm:$0xff]
      %v3768 = vld [vmem:[%s654 + $0x9a] sm:$0xff]
      %v3769 = vld [vmem:[%s654 + $0xaa] sm:$0xff]
      %v3770 = vld [vmem:[%s654 + $0xb2] sm:$0xff]
      %v3771 = vld [vmem:[%s654 + $0xc2] sm:$0xff]
      %v3772 = vld [vmem:[%s654 + $0xca] sm:$0xff]
      %v3773 = vld [vmem:[%s654 + $0xda] sm:$0xff]
      %v3774 = vld [vmem:[%s654 + $0xe2] sm:$0xff]
      %v3775 = vld [vmem:[%s654 + $0xf2] sm:$0xff]
      %v3776 = vld [vmem:[%s654 + $0xfa] sm:$0xff]
      %v3777 = vld [vmem:[%s654 + $0x10a] sm:$0xff]
      %v3778 = vld [vmem:[%s654 + $0x112] sm:$0xff]
      %v3779 = vld [vmem:[%s654 + $0x122] sm:$0xff]
      %v3780 = vld [vmem:[%s654 + $0x12a] sm:$0xff]
      %v3781 = vld [vmem:[%s654 + $0x13a] sm:$0xff]
      %v3782 = vld [vmem:[%s654 + $0x142] sm:$0xff]
      %v3783 = vld [vmem:[%s654 + $0x152] sm:$0xff]
      %v3784 = vld [vmem:[%s654 + $0x15a] sm:$0xff]
      %v3785 = vld [vmem:[%s654 + $0x16a] sm:$0xff]
      %v3786 = vld [vmem:[%s654 + $0x172] sm:$0xff]
      %3819 = vrot.lane.b32.xlu0 %v3755, 40
      %v3820 = vpop.permute.xlu0 %3819
      %3821 = vrot.lane.b32.xlu0 %v3756, 40
      %v3822 = vpop.permute.xlu0 %3821
      %3823 = vrot.lane.b32.xlu0 %v3757, 40
      %v3824 = vpop.permute.xlu0 %3823
      %3825 = vrot.lane.b32.xlu0 %v3758, 40
      %v3826 = vpop.permute.xlu0 %3825
      %3827 = vrot.lane.b32.xlu0 %v3759, 40
      %v3828 = vpop.permute.xlu0 %3827
      %3829 = vrot.lane.b32.xlu0 %v3760, 40
      %v3830 = vpop.permute.xlu0 %3829
      %3831 = vrot.lane.b32.xlu0 %v3761, 40
      %v3832 = vpop.permute.xlu0 %3831
      %3833 = vrot.lane.b32.xlu0 %v3762, 40
      %v3834 = vpop.permute.xlu0 %3833
      %3835 = vrot.lane.b32.xlu0 %v3763, 40
      %v3836 = vpop.permute.xlu0 %3835
      %3837 = vrot.lane.b32.xlu0 %v3764, 40
      %v3838 = vpop.permute.xlu0 %3837
      %3839 = vrot.lane.b32.xlu0 %v3765, 40
      %v3840 = vpop.permute.xlu0 %3839
      %3841 = vrot.lane.b32.xlu0 %v3766, 40
      %v3842 = vpop.permute.xlu0 %3841
      %3843 = vrot.lane.b32.xlu0 %v3767, 40
      %v3844 = vpop.permute.xlu0 %3843
      %3845 = vrot.lane.b32.xlu0 %v3768, 40
      %v3846 = vpop.permute.xlu0 %3845
      %3847 = vrot.lane.b32.xlu0 %v3769, 40
      %v3848 = vpop.permute.xlu0 %3847
      %3849 = vrot.lane.b32.xlu0 %v3770, 40
      %v3850 = vpop.permute.xlu0 %3849
      %3851 = vrot.lane.b32.xlu0 %v3771, 40
      %v3852 = vpop.permute.xlu0 %3851
      %3853 = vrot.lane.b32.xlu0 %v3772, 40
      %v3854 = vpop.permute.xlu0 %3853
      %3855 = vrot.lane.b32.xlu0 %v3773, 40
      %v3856 = vpop.permute.xlu0 %3855
      %3857 = vrot.lane.b32.xlu0 %v3774, 40
      %v3858 = vpop.permute.xlu0 %3857
      %3859 = vrot.lane.b32.xlu0 %v3775, 40
      %v3860 = vpop.permute.xlu0 %3859
      %3861 = vrot.lane.b32.xlu0 %v3776, 40
      %v3862 = vpop.permute.xlu0 %3861
      %3863 = vrot.lane.b32.xlu0 %v3777, 40
      %v3864 = vpop.permute.xlu0 %3863
      %3865 = vrot.lane.b32.xlu0 %v3778, 40
      %v3866 = vpop.permute.xlu0 %3865
      %3867 = vrot.lane.b32.xlu0 %v3779, 40
      %v3868 = vpop.permute.xlu0 %3867
      %3869 = vrot.lane.b32.xlu0 %v3780, 40
      %v3870 = vpop.permute.xlu0 %3869
      %3871 = vrot.lane.b32.xlu0 %v3781, 40
      %v3872 = vpop.permute.xlu0 %3871
      %3873 = vrot.lane.b32.xlu0 %v3782, 40
      %v3874 = vpop.permute.xlu0 %3873
      %3875 = vrot.lane.b32.xlu0 %v3783, 40
      %v3876 = vpop.permute.xlu0 %3875
      %3877 = vrot.lane.b32.xlu0 %v3784, 40
      %v3878 = vpop.permute.xlu0 %3877
      %3879 = vrot.lane.b32.xlu0 %v3785, 40
      %v3880 = vpop.permute.xlu0 %3879
      %3881 = vrot.lane.b32.xlu0 %v3786, 40
      %v3882 = vpop.permute.xlu0 %3881
      %vm3915 = vcmask 392512
      %3916 = vst.msk [vmem:[#allocation4] sm:$0xff] %vm3915, %v3820
      %3917 = vst.msk [vmem:[#allocation4 + $0x8] sm:$0xff] %vm3915, %v3822
      %3918 = vst.msk [vmem:[#allocation4 + $0x10] sm:$0xff] %vm3915, %v3824
      %3919 = vst.msk [vmem:[#allocation4 + $0x18] sm:$0xff] %vm3915, %v3826
      %3920 = vst.msk [vmem:[#allocation4 + $0x20] sm:$0xff] %vm3915, %v3828
      %3921 = vst.msk [vmem:[#allocation4 + $0x28] sm:$0xff] %vm3915, %v3830
      %3922 = vst.msk [vmem:[#allocation4 + $0x30] sm:$0xff] %vm3915, %v3832
      %3923 = vst.msk [vmem:[#allocation4 + $0x38] sm:$0xff] %vm3915, %v3834
      %3924 = vst.msk [vmem:[#allocation4 + $0x40] sm:$0xff] %vm3915, %v3836
      %3925 = vst.msk [vmem:[#allocation4 + $0x48] sm:$0xff] %vm3915, %v3838
      %3926 = vst.msk [vmem:[#allocation4 + $0x50] sm:$0xff] %vm3915, %v3840
      %3927 = vst.msk [vmem:[#allocation4 + $0x58] sm:$0xff] %vm3915, %v3842
      %3928 = vst.msk [vmem:[#allocation4 + $0x60] sm:$0xff] %vm3915, %v3844
      %3929 = vst.msk [vmem:[#allocation4 + $0x68] sm:$0xff] %vm3915, %v3846
      %3930 = vst.msk [vmem:[#allocation4 + $0x70] sm:$0xff] %vm3915, %v3848
      %3931 = vst.msk [vmem:[#allocation4 + $0x78] sm:$0xff] %vm3915, %v3850
      %3932 = vst.msk [vmem:[#allocation4 + $0x80] sm:$0xff] %vm3915, %v3852
      %3933 = vst.msk [vmem:[#allocation4 + $0x88] sm:$0xff] %vm3915, %v3854
      %3934 = vst.msk [vmem:[#allocation4 + $0x90] sm:$0xff] %vm3915, %v3856
      %3935 = vst.msk [vmem:[#allocation4 + $0x98] sm:$0xff] %vm3915, %v3858
      %3936 = vst.msk [vmem:[#allocation4 + $0xa0] sm:$0xff] %vm3915, %v3860
      %3937 = vst.msk [vmem:[#allocation4 + $0xa8] sm:$0xff] %vm3915, %v3862
      %3938 = vst.msk [vmem:[#allocation4 + $0xb0] sm:$0xff] %vm3915, %v3864
      %3939 = vst.msk [vmem:[#allocation4 + $0xb8] sm:$0xff] %vm3915, %v3866
      %3940 = vst.msk [vmem:[#allocation4 + $0xc0] sm:$0xff] %vm3915, %v3868
      %3941 = vst.msk [vmem:[#allocation4 + $0xc8] sm:$0xff] %vm3915, %v3870
      %3942 = vst.msk [vmem:[#allocation4 + $0xd0] sm:$0xff] %vm3915, %v3872
      %3943 = vst.msk [vmem:[#allocation4 + $0xd8] sm:$0xff] %vm3915, %v3874
      %3944 = vst.msk [vmem:[#allocation4 + $0xe0] sm:$0xff] %vm3915, %v3876
      %3945 = vst.msk [vmem:[#allocation4 + $0xe8] sm:$0xff] %vm3915, %v3878
      %3946 = vst.msk [vmem:[#allocation4 + $0xf0] sm:$0xff] %vm3915, %v3880
      %3947 = vst.msk [vmem:[#allocation4 + $0xf8] sm:$0xff] %vm3915, %v3882
      %v3948 = vld [vmem:[%s1716] sm:$0xff]
      %v3949 = vld [vmem:[%s1716 + $0x8] sm:$0xff]
      %v3950 = vld [vmem:[%s1716 + $0x18] sm:$0xff]
      %v3951 = vld [vmem:[%s1716 + $0x20] sm:$0xff]
      %v3952 = vld [vmem:[%s1716 + $0x30] sm:$0xff]
      %v3953 = vld [vmem:[%s1716 + $0x38] sm:$0xff]
      %v3954 = vld [vmem:[%s1716 + $0x48] sm:$0xff]
      %v3955 = vld [vmem:[%s1716 + $0x50] sm:$0xff]
      %v3956 = vld [vmem:[%s1716 + $0x60] sm:$0xff]
      %v3957 = vld [vmem:[%s1716 + $0x68] sm:$0xff]
      %v3958 = vld [vmem:[%s1716 + $0x78] sm:$0xff]
      %v3959 = vld [vmem:[%s1716 + $0x80] sm:$0xff]
      %v3960 = vld [vmem:[%s1716 + $0x90] sm:$0xff]
      %v3961 = vld [vmem:[%s1716 + $0x98] sm:$0xff]
      %v3962 = vld [vmem:[%s1716 + $0xa8] sm:$0xff]
      %v3963 = vld [vmem:[%s1716 + $0xb0] sm:$0xff]
      %v3964 = vld [vmem:[%s1716 + $0xc0] sm:$0xff]
      %v3965 = vld [vmem:[%s1716 + $0xc8] sm:$0xff]
      %v3966 = vld [vmem:[%s1716 + $0xd8] sm:$0xff]
      %v3967 = vld [vmem:[%s1716 + $0xe0] sm:$0xff]
      %v3968 = vld [vmem:[%s1716 + $0xf0] sm:$0xff]
      %v3969 = vld [vmem:[%s1716 + $0xf8] sm:$0xff]
      %v3970 = vld [vmem:[%s1716 + $0x108] sm:$0xff]
      %v3971 = vld [vmem:[%s1716 + $0x110] sm:$0xff]
      %v3972 = vld [vmem:[%s1716 + $0x120] sm:$0xff]
      %v3973 = vld [vmem:[%s1716 + $0x128] sm:$0xff]
      %v3974 = vld [vmem:[%s1716 + $0x138] sm:$0xff]
      %v3975 = vld [vmem:[%s1716 + $0x140] sm:$0xff]
      %v3976 = vld [vmem:[%s1716 + $0x150] sm:$0xff]
      %v3977 = vld [vmem:[%s1716 + $0x158] sm:$0xff]
      %v3978 = vld [vmem:[%s1716 + $0x168] sm:$0xff]
      %v3979 = vld [vmem:[%s1716 + $0x170] sm:$0xff]
      %4012 = vrot.lane.b32.xlu0 %v3948, 48
      %v4013 = vpop.permute.xlu0 %4012
      %4014 = vrot.lane.b32.xlu0 %v3949, 48
      %v4015 = vpop.permute.xlu0 %4014
      %4016 = vrot.lane.b32.xlu0 %v3950, 48
      %v4017 = vpop.permute.xlu0 %4016
      %4018 = vrot.lane.b32.xlu0 %v3951, 48
      %v4019 = vpop.permute.xlu0 %4018
      %4020 = vrot.lane.b32.xlu0 %v3952, 48
      %v4021 = vpop.permute.xlu0 %4020
      %4022 = vrot.lane.b32.xlu0 %v3953, 48
      %v4023 = vpop.permute.xlu0 %4022
      %4024 = vrot.lane.b32.xlu0 %v3954, 48
      %v4025 = vpop.permute.xlu0 %4024
      %4026 = vrot.lane.b32.xlu0 %v3955, 48
      %v4027 = vpop.permute.xlu0 %4026
      %4028 = vrot.lane.b32.xlu0 %v3956, 48
      %v4029 = vpop.permute.xlu0 %4028
      %4030 = vrot.lane.b32.xlu0 %v3957, 48
      %v4031 = vpop.permute.xlu0 %4030
      %4032 = vrot.lane.b32.xlu0 %v3958, 48
      %v4033 = vpop.permute.xlu0 %4032
      %4034 = vrot.lane.b32.xlu0 %v3959, 48
      %v4035 = vpop.permute.xlu0 %4034
      %4036 = vrot.lane.b32.xlu0 %v3960, 48
      %v4037 = vpop.permute.xlu0 %4036
      %4038 = vrot.lane.b32.xlu0 %v3961, 48
      %v4039 = vpop.permute.xlu0 %4038
      %4040 = vrot.lane.b32.xlu0 %v3962, 48
      %v4041 = vpop.permute.xlu0 %4040
      %4042 = vrot.lane.b32.xlu0 %v3963, 48
      %v4043 = vpop.permute.xlu0 %4042
      %4044 = vrot.lane.b32.xlu0 %v3964, 48
      %v4045 = vpop.permute.xlu0 %4044
      %4046 = vrot.lane.b32.xlu0 %v3965, 48
      %v4047 = vpop.permute.xlu0 %4046
      %4048 = vrot.lane.b32.xlu0 %v3966, 48
      %v4049 = vpop.permute.xlu0 %4048
      %4050 = vrot.lane.b32.xlu0 %v3967, 48
      %v4051 = vpop.permute.xlu0 %4050
      %4052 = vrot.lane.b32.xlu0 %v3968, 48
      %v4053 = vpop.permute.xlu0 %4052
      %4054 = vrot.lane.b32.xlu0 %v3969, 48
      %v4055 = vpop.permute.xlu0 %4054
      %4056 = vrot.lane.b32.xlu0 %v3970, 48
      %v4057 = vpop.permute.xlu0 %4056
      %4058 = vrot.lane.b32.xlu0 %v3971, 48
      %v4059 = vpop.permute.xlu0 %4058
      %4060 = vrot.lane.b32.xlu0 %v3972, 48
      %v4061 = vpop.permute.xlu0 %4060
      %4062 = vrot.lane.b32.xlu0 %v3973, 48
      %v4063 = vpop.permute.xlu0 %4062
      %4064 = vrot.lane.b32.xlu0 %v3974, 48
      %v4065 = vpop.permute.xlu0 %4064
      %4066 = vrot.lane.b32.xlu0 %v3975, 48
      %v4067 = vpop.permute.xlu0 %4066
      %4068 = vrot.lane.b32.xlu0 %v3976, 48
      %v4069 = vpop.permute.xlu0 %4068
      %4070 = vrot.lane.b32.xlu0 %v3977, 48
      %v4071 = vpop.permute.xlu0 %4070
      %4072 = vrot.lane.b32.xlu0 %v3978, 48
      %v4073 = vpop.permute.xlu0 %4072
      %4074 = vrot.lane.b32.xlu0 %v3979, 48
      %v4075 = vpop.permute.xlu0 %4074
      %vm4108 = vcmask 458112
      %4109 = vst.msk [vmem:[#allocation4] sm:$0xff] %vm4108, %v4013
      %4110 = vst.msk [vmem:[#allocation4 + $0x8] sm:$0xff] %vm4108, %v4015
      %4111 = vst.msk [vmem:[#allocation4 + $0x10] sm:$0xff] %vm4108, %v4017
      %4112 = vst.msk [vmem:[#allocation4 + $0x18] sm:$0xff] %vm4108, %v4019
      %4113 = vst.msk [vmem:[#allocation4 + $0x20] sm:$0xff] %vm4108, %v4021
      %4114 = vst.msk [vmem:[#allocation4 + $0x28] sm:$0xff] %vm4108, %v4023
      %4115 = vst.msk [vmem:[#allocation4 + $0x30] sm:$0xff] %vm4108, %v4025
      %4116 = vst.msk [vmem:[#allocation4 + $0x38] sm:$0xff] %vm4108, %v4027
      %4117 = vst.msk [vmem:[#allocation4 + $0x40] sm:$0xff] %vm4108, %v4029
      %4118 = vst.msk [vmem:[#allocation4 + $0x48] sm:$0xff] %vm4108, %v4031
      %4119 = vst.msk [vmem:[#allocation4 + $0x50] sm:$0xff] %vm4108, %v4033
      %4120 = vst.msk [vmem:[#allocation4 + $0x58] sm:$0xff] %vm4108, %v4035
      %4121 = vst.msk [vmem:[#allocation4 + $0x60] sm:$0xff] %vm4108, %v4037
      %4122 = vst.msk [vmem:[#allocation4 + $0x68] sm:$0xff] %vm4108, %v4039
      %4123 = vst.msk [vmem:[#allocation4 + $0x70] sm:$0xff] %vm4108, %v4041
      %4124 = vst.msk [vmem:[#allocation4 + $0x78] sm:$0xff] %vm4108, %v4043
      %4125 = vst.msk [vmem:[#allocation4 + $0x80] sm:$0xff] %vm4108, %v4045
      %4126 = vst.msk [vmem:[#allocation4 + $0x88] sm:$0xff] %vm4108, %v4047
      %4127 = vst.msk [vmem:[#allocation4 + $0x90] sm:$0xff] %vm4108, %v4049
      %4128 = vst.msk [vmem:[#allocation4 + $0x98] sm:$0xff] %vm4108, %v4051
      %4129 = vst.msk [vmem:[#allocation4 + $0xa0] sm:$0xff] %vm4108, %v4053
      %4130 = vst.msk [vmem:[#allocation4 + $0xa8] sm:$0xff] %vm4108, %v4055
      %4131 = vst.msk [vmem:[#allocation4 + $0xb0] sm:$0xff] %vm4108, %v4057
      %4132 = vst.msk [vmem:[#allocation4 + $0xb8] sm:$0xff] %vm4108, %v4059
      %4133 = vst.msk [vmem:[#allocation4 + $0xc0] sm:$0xff] %vm4108, %v4061
      %4134 = vst.msk [vmem:[#allocation4 + $0xc8] sm:$0xff] %vm4108, %v4063
      %4135 = vst.msk [vmem:[#allocation4 + $0xd0] sm:$0xff] %vm4108, %v4065
      %4136 = vst.msk [vmem:[#allocation4 + $0xd8] sm:$0xff] %vm4108, %v4067
      %4137 = vst.msk [vmem:[#allocation4 + $0xe0] sm:$0xff] %vm4108, %v4069
      %4138 = vst.msk [vmem:[#allocation4 + $0xe8] sm:$0xff] %vm4108, %v4071
      %4139 = vst.msk [vmem:[#allocation4 + $0xf0] sm:$0xff] %vm4108, %v4073
      %4140 = vst.msk [vmem:[#allocation4 + $0xf8] sm:$0xff] %vm4108, %v4075
      %v4141 = vld [vmem:[%s1716 + $0x1] sm:$0xff]
      %v4142 = vld [vmem:[%s1716 + $0x9] sm:$0xff]
      %v4143 = vld [vmem:[%s1716 + $0x19] sm:$0xff]
      %v4144 = vld [vmem:[%s1716 + $0x21] sm:$0xff]
      %v4145 = vld [vmem:[%s1716 + $0x31] sm:$0xff]
      %v4146 = vld [vmem:[%s1716 + $0x39] sm:$0xff]
      %v4147 = vld [vmem:[%s1716 + $0x49] sm:$0xff]
      %v4148 = vld [vmem:[%s1716 + $0x51] sm:$0xff]
      %v4149 = vld [vmem:[%s1716 + $0x61] sm:$0xff]
      %v4150 = vld [vmem:[%s1716 + $0x69] sm:$0xff]
      %v4151 = vld [vmem:[%s1716 + $0x79] sm:$0xff]
      %v4152 = vld [vmem:[%s1716 + $0x81] sm:$0xff]
      %v4153 = vld [vmem:[%s1716 + $0x91] sm:$0xff]
      %v4154 = vld [vmem:[%s1716 + $0x99] sm:$0xff]
      %v4155 = vld [vmem:[%s1716 + $0xa9] sm:$0xff]
      %v4156 = vld [vmem:[%s1716 + $0xb1] sm:$0xff]
      %v4157 = vld [vmem:[%s1716 + $0xc1] sm:$0xff]
      %v4158 = vld [vmem:[%s1716 + $0xc9] sm:$0xff]
      %v4159 = vld [vmem:[%s1716 + $0xd9] sm:$0xff]
      %v4160 = vld [vmem:[%s1716 + $0xe1] sm:$0xff]
      %v4161 = vld [vmem:[%s1716 + $0xf1] sm:$0xff]
      %v4162 = vld [vmem:[%s1716 + $0xf9] sm:$0xff]
      %v4163 = vld [vmem:[%s1716 + $0x109] sm:$0xff]
      %v4164 = vld [vmem:[%s1716 + $0x111] sm:$0xff]
      %v4165 = vld [vmem:[%s1716 + $0x121] sm:$0xff]
      %v4166 = vld [vmem:[%s1716 + $0x129] sm:$0xff]
      %v4167 = vld [vmem:[%s1716 + $0x139] sm:$0xff]
      %v4168 = vld [vmem:[%s1716 + $0x141] sm:$0xff]
      %v4169 = vld [vmem:[%s1716 + $0x151] sm:$0xff]
      %v4170 = vld [vmem:[%s1716 + $0x159] sm:$0xff]
      %v4171 = vld [vmem:[%s1716 + $0x169] sm:$0xff]
      %v4172 = vld [vmem:[%s1716 + $0x171] sm:$0xff]
      %4205 = vrot.lane.b32.xlu0 %v4141, 56
      %v4206 = vpop.permute.xlu0 %4205
      %4207 = vrot.lane.b32.xlu0 %v4142, 56
      %v4208 = vpop.permute.xlu0 %4207
      %4209 = vrot.lane.b32.xlu0 %v4143, 56
      %v4210 = vpop.permute.xlu0 %4209
      %4211 = vrot.lane.b32.xlu0 %v4144, 56
      %v4212 = vpop.permute.xlu0 %4211
      %4213 = vrot.lane.b32.xlu0 %v4145, 56
      %v4214 = vpop.permute.xlu0 %4213
      %4215 = vrot.lane.b32.xlu0 %v4146, 56
      %v4216 = vpop.permute.xlu0 %4215
      %4217 = vrot.lane.b32.xlu0 %v4147, 56
      %v4218 = vpop.permute.xlu0 %4217
      %4219 = vrot.lane.b32.xlu0 %v4148, 56
      %v4220 = vpop.permute.xlu0 %4219
      %4221 = vrot.lane.b32.xlu0 %v4149, 56
      %v4222 = vpop.permute.xlu0 %4221
      %4223 = vrot.lane.b32.xlu0 %v4150, 56
      %v4224 = vpop.permute.xlu0 %4223
      %4225 = vrot.lane.b32.xlu0 %v4151, 56
      %v4226 = vpop.permute.xlu0 %4225
      %4227 = vrot.lane.b32.xlu0 %v4152, 56
      %v4228 = vpop.permute.xlu0 %4227
      %4229 = vrot.lane.b32.xlu0 %v4153, 56
      %v4230 = vpop.permute.xlu0 %4229
      %4231 = vrot.lane.b32.xlu0 %v4154, 56
      %v4232 = vpop.permute.xlu0 %4231
      %4233 = vrot.lane.b32.xlu0 %v4155, 56
      %v4234 = vpop.permute.xlu0 %4233
      %4235 = vrot.lane.b32.xlu0 %v4156, 56
      %v4236 = vpop.permute.xlu0 %4235
      %4237 = vrot.lane.b32.xlu0 %v4157, 56
      %v4238 = vpop.permute.xlu0 %4237
      %4239 = vrot.lane.b32.xlu0 %v4158, 56
      %v4240 = vpop.permute.xlu0 %4239
      %4241 = vrot.lane.b32.xlu0 %v4159, 56
      %v4242 = vpop.permute.xlu0 %4241
      %4243 = vrot.lane.b32.xlu0 %v4160, 56
      %v4244 = vpop.permute.xlu0 %4243
      %4245 = vrot.lane.b32.xlu0 %v4161, 56
      %v4246 = vpop.permute.xlu0 %4245
      %4247 = vrot.lane.b32.xlu0 %v4162, 56
      %v4248 = vpop.permute.xlu0 %4247
      %4249 = vrot.lane.b32.xlu0 %v4163, 56
      %v4250 = vpop.permute.xlu0 %4249
      %4251 = vrot.lane.b32.xlu0 %v4164, 56
      %v4252 = vpop.permute.xlu0 %4251
      %4253 = vrot.lane.b32.xlu0 %v4165, 56
      %v4254 = vpop.permute.xlu0 %4253
      %4255 = vrot.lane.b32.xlu0 %v4166, 56
      %v4256 = vpop.permute.xlu0 %4255
      %4257 = vrot.lane.b32.xlu0 %v4167, 56
      %v4258 = vpop.permute.xlu0 %4257
      %4259 = vrot.lane.b32.xlu0 %v4168, 56
      %v4260 = vpop.permute.xlu0 %4259
      %4261 = vrot.lane.b32.xlu0 %v4169, 56
      %v4262 = vpop.permute.xlu0 %4261
      %4263 = vrot.lane.b32.xlu0 %v4170, 56
      %v4264 = vpop.permute.xlu0 %4263
      %4265 = vrot.lane.b32.xlu0 %v4171, 56
      %v4266 = vpop.permute.xlu0 %4265
      %4267 = vrot.lane.b32.xlu0 %v4172, 56
      %v4268 = vpop.permute.xlu0 %4267
      %vm4301 = vcmask 523712
      %4302 = vst.msk [vmem:[#allocation4] sm:$0xff] %vm4301, %v4206
      %4303 = vst.msk [vmem:[#allocation4 + $0x8] sm:$0xff] %vm4301, %v4208
      %4304 = vst.msk [vmem:[#allocation4 + $0x10] sm:$0xff] %vm4301, %v4210
      %4305 = vst.msk [vmem:[#allocation4 + $0x18] sm:$0xff] %vm4301, %v4212
      %4306 = vst.msk [vmem:[#allocation4 + $0x20] sm:$0xff] %vm4301, %v4214
      %4307 = vst.msk [vmem:[#allocation4 + $0x28] sm:$0xff] %vm4301, %v4216
      %4308 = vst.msk [vmem:[#allocation4 + $0x30] sm:$0xff] %vm4301, %v4218
      %4309 = vst.msk [vmem:[#allocation4 + $0x38] sm:$0xff] %vm4301, %v4220
      %4310 = vst.msk [vmem:[#allocation4 + $0x40] sm:$0xff] %vm4301, %v4222
      %4311 = vst.msk [vmem:[#allocation4 + $0x48] sm:$0xff] %vm4301, %v4224
      %4312 = vst.msk [vmem:[#allocation4 + $0x50] sm:$0xff] %vm4301, %v4226
      %4313 = vst.msk [vmem:[#allocation4 + $0x58] sm:$0xff] %vm4301, %v4228
      %4314 = vst.msk [vmem:[#allocation4 + $0x60] sm:$0xff] %vm4301, %v4230
      %4315 = vst.msk [vmem:[#allocation4 + $0x68] sm:$0xff] %vm4301, %v4232
      %4316 = vst.msk [vmem:[#allocation4 + $0x70] sm:$0xff] %vm4301, %v4234
      %4317 = vst.msk [vmem:[#allocation4 + $0x78] sm:$0xff] %vm4301, %v4236
      %4318 = vst.msk [vmem:[#allocation4 + $0x80] sm:$0xff] %vm4301, %v4238
      %4319 = vst.msk [vmem:[#allocation4 + $0x88] sm:$0xff] %vm4301, %v4240
      %4320 = vst.msk [vmem:[#allocation4 + $0x90] sm:$0xff] %vm4301, %v4242
      %4321 = vst.msk [vmem:[#allocation4 + $0x98] sm:$0xff] %vm4301, %v4244
      %4322 = vst.msk [vmem:[#allocation4 + $0xa0] sm:$0xff] %vm4301, %v4246
      %4323 = vst.msk [vmem:[#allocation4 + $0xa8] sm:$0xff] %vm4301, %v4248
      %4324 = vst.msk [vmem:[#allocation4 + $0xb0] sm:$0xff] %vm4301, %v4250
      %4325 = vst.msk [vmem:[#allocation4 + $0xb8] sm:$0xff] %vm4301, %v4252
      %4326 = vst.msk [vmem:[#allocation4 + $0xc0] sm:$0xff] %vm4301, %v4254
      %4327 = vst.msk [vmem:[#allocation4 + $0xc8] sm:$0xff] %vm4301, %v4256
      %4328 = vst.msk [vmem:[#allocation4 + $0xd0] sm:$0xff] %vm4301, %v4258
      %4329 = vst.msk [vmem:[#allocation4 + $0xd8] sm:$0xff] %vm4301, %v4260
      %4330 = vst.msk [vmem:[#allocation4 + $0xe0] sm:$0xff] %vm4301, %v4262
      %4331 = vst.msk [vmem:[#allocation4 + $0xe8] sm:$0xff] %vm4301, %v4264
      %4332 = vst.msk [vmem:[#allocation4 + $0xf0] sm:$0xff] %vm4301, %v4266
      %4333 = vst.msk [vmem:[#allocation4 + $0xf8] sm:$0xff] %vm4301, %v4268
      %v4334 = vld [vmem:[%s1716 + $0x2] sm:$0xff]
      %v4335 = vld [vmem:[%s1716 + $0xa] sm:$0xff]
      %v4336 = vld [vmem:[%s1716 + $0x1a] sm:$0xff]
      %v4337 = vld [vmem:[%s1716 + $0x22] sm:$0xff]
      %v4338 = vld [vmem:[%s1716 + $0x32] sm:$0xff]
      %v4339 = vld [vmem:[%s1716 + $0x3a] sm:$0xff]
      %v4340 = vld [vmem:[%s1716 + $0x4a] sm:$0xff]
      %v4341 = vld [vmem:[%s1716 + $0x52] sm:$0xff]
      %v4342 = vld [vmem:[%s1716 + $0x62] sm:$0xff]
      %v4343 = vld [vmem:[%s1716 + $0x6a] sm:$0xff]
      %v4344 = vld [vmem:[%s1716 + $0x7a] sm:$0xff]
      %v4345 = vld [vmem:[%s1716 + $0x82] sm:$0xff]
      %v4346 = vld [vmem:[%s1716 + $0x92] sm:$0xff]
      %v4347 = vld [vmem:[%s1716 + $0x9a] sm:$0xff]
      %v4348 = vld [vmem:[%s1716 + $0xaa] sm:$0xff]
      %v4349 = vld [vmem:[%s1716 + $0xb2] sm:$0xff]
      %v4350 = vld [vmem:[%s1716 + $0xc2] sm:$0xff]
      %v4351 = vld [vmem:[%s1716 + $0xca] sm:$0xff]
      %v4352 = vld [vmem:[%s1716 + $0xda] sm:$0xff]
      %v4353 = vld [vmem:[%s1716 + $0xe2] sm:$0xff]
      %v4354 = vld [vmem:[%s1716 + $0xf2] sm:$0xff]
      %v4355 = vld [vmem:[%s1716 + $0xfa] sm:$0xff]
      %v4356 = vld [vmem:[%s1716 + $0x10a] sm:$0xff]
      %v4357 = vld [vmem:[%s1716 + $0x112] sm:$0xff]
      %v4358 = vld [vmem:[%s1716 + $0x122] sm:$0xff]
      %v4359 = vld [vmem:[%s1716 + $0x12a] sm:$0xff]
      %v4360 = vld [vmem:[%s1716 + $0x13a] sm:$0xff]
      %v4361 = vld [vmem:[%s1716 + $0x142] sm:$0xff]
      %v4362 = vld [vmem:[%s1716 + $0x152] sm:$0xff]
      %v4363 = vld [vmem:[%s1716 + $0x15a] sm:$0xff]
      %v4364 = vld [vmem:[%s1716 + $0x16a] sm:$0xff]
      %v4365 = vld [vmem:[%s1716 + $0x172] sm:$0xff]
      %4398 = vrot.lane.b32.xlu0 %v4334, 64
      %v4399 = vpop.permute.xlu0 %4398
      %4400 = vrot.lane.b32.xlu0 %v4335, 64
      %v4401 = vpop.permute.xlu0 %4400
      %4402 = vrot.lane.b32.xlu0 %v4336, 64
      %v4403 = vpop.permute.xlu0 %4402
      %4404 = vrot.lane.b32.xlu0 %v4337, 64
      %v4405 = vpop.permute.xlu0 %4404
      %4406 = vrot.lane.b32.xlu0 %v4338, 64
      %v4407 = vpop.permute.xlu0 %4406
      %4408 = vrot.lane.b32.xlu0 %v4339, 64
      %v4409 = vpop.permute.xlu0 %4408
      %4410 = vrot.lane.b32.xlu0 %v4340, 64
      %v4411 = vpop.permute.xlu0 %4410
      %4412 = vrot.lane.b32.xlu0 %v4341, 64
      %v4413 = vpop.permute.xlu0 %4412
      %4414 = vrot.lane.b32.xlu0 %v4342, 64
      %v4415 = vpop.permute.xlu0 %4414
      %4416 = vrot.lane.b32.xlu0 %v4343, 64
      %v4417 = vpop.permute.xlu0 %4416
      %4418 = vrot.lane.b32.xlu0 %v4344, 64
      %v4419 = vpop.permute.xlu0 %4418
      %4420 = vrot.lane.b32.xlu0 %v4345, 64
      %v4421 = vpop.permute.xlu0 %4420
      %4422 = vrot.lane.b32.xlu0 %v4346, 64
      %v4423 = vpop.permute.xlu0 %4422
      %4424 = vrot.lane.b32.xlu0 %v4347, 64
      %v4425 = vpop.permute.xlu0 %4424
      %4426 = vrot.lane.b32.xlu0 %v4348, 64
      %v4427 = vpop.permute.xlu0 %4426
      %4428 = vrot.lane.b32.xlu0 %v4349, 64
      %v4429 = vpop.permute.xlu0 %4428
      %4430 = vrot.lane.b32.xlu0 %v4350, 64
      %v4431 = vpop.permute.xlu0 %4430
      %4432 = vrot.lane.b32.xlu0 %v4351, 64
      %v4433 = vpop.permute.xlu0 %4432
      %4434 = vrot.lane.b32.xlu0 %v4352, 64
      %v4435 = vpop.permute.xlu0 %4434
      %4436 = vrot.lane.b32.xlu0 %v4353, 64
      %v4437 = vpop.permute.xlu0 %4436
      %4438 = vrot.lane.b32.xlu0 %v4354, 64
      %v4439 = vpop.permute.xlu0 %4438
      %4440 = vrot.lane.b32.xlu0 %v4355, 64
      %v4441 = vpop.permute.xlu0 %4440
      %4442 = vrot.lane.b32.xlu0 %v4356, 64
      %v4443 = vpop.permute.xlu0 %4442
      %4444 = vrot.lane.b32.xlu0 %v4357, 64
      %v4445 = vpop.permute.xlu0 %4444
      %4446 = vrot.lane.b32.xlu0 %v4358, 64
      %v4447 = vpop.permute.xlu0 %4446
      %4448 = vrot.lane.b32.xlu0 %v4359, 64
      %v4449 = vpop.permute.xlu0 %4448
      %4450 = vrot.lane.b32.xlu0 %v4360, 64
      %v4451 = vpop.permute.xlu0 %4450
      %4452 = vrot.lane.b32.xlu0 %v4361, 64
      %v4453 = vpop.permute.xlu0 %4452
      %4454 = vrot.lane.b32.xlu0 %v4362, 64
      %v4455 = vpop.permute.xlu0 %4454
      %4456 = vrot.lane.b32.xlu0 %v4363, 64
      %v4457 = vpop.permute.xlu0 %4456
      %4458 = vrot.lane.b32.xlu0 %v4364, 64
      %v4459 = vpop.permute.xlu0 %4458
      %4460 = vrot.lane.b32.xlu0 %v4365, 64
      %v4461 = vpop.permute.xlu0 %4460
      %vm4494 = vcmask 589312
      %4495 = vst.msk [vmem:[#allocation4] sm:$0xff] %vm4494, %v4399
      %4496 = vst.msk [vmem:[#allocation4 + $0x8] sm:$0xff] %vm4494, %v4401
      %4497 = vst.msk [vmem:[#allocation4 + $0x10] sm:$0xff] %vm4494, %v4403
      %4498 = vst.msk [vmem:[#allocation4 + $0x18] sm:$0xff] %vm4494, %v4405
      %4499 = vst.msk [vmem:[#allocation4 + $0x20] sm:$0xff] %vm4494, %v4407
      %4500 = vst.msk [vmem:[#allocation4 + $0x28] sm:$0xff] %vm4494, %v4409
      %4501 = vst.msk [vmem:[#allocation4 + $0x30] sm:$0xff] %vm4494, %v4411
      %4502 = vst.msk [vmem:[#allocation4 + $0x38] sm:$0xff] %vm4494, %v4413
      %4503 = vst.msk [vmem:[#allocation4 + $0x40] sm:$0xff] %vm4494, %v4415
      %4504 = vst.msk [vmem:[#allocation4 + $0x48] sm:$0xff] %vm4494, %v4417
      %4505 = vst.msk [vmem:[#allocation4 + $0x50] sm:$0xff] %vm4494, %v4419
      %4506 = vst.msk [vmem:[#allocation4 + $0x58] sm:$0xff] %vm4494, %v4421
      %4507 = vst.msk [vmem:[#allocation4 + $0x60] sm:$0xff] %vm4494, %v4423
      %4508 = vst.msk [vmem:[#allocation4 + $0x68] sm:$0xff] %vm4494, %v4425
      %4509 = vst.msk [vmem:[#allocation4 + $0x70] sm:$0xff] %vm4494, %v4427
      %4510 = vst.msk [vmem:[#allocation4 + $0x78] sm:$0xff] %vm4494, %v4429
      %4511 = vst.msk [vmem:[#allocation4 + $0x80] sm:$0xff] %vm4494, %v4431
      %4512 = vst.msk [vmem:[#allocation4 + $0x88] sm:$0xff] %vm4494, %v4433
      %4513 = vst.msk [vmem:[#allocation4 + $0x90] sm:$0xff] %vm4494, %v4435
      %4514 = vst.msk [vmem:[#allocation4 + $0x98] sm:$0xff] %vm4494, %v4437
      %4515 = vst.msk [vmem:[#allocation4 + $0xa0] sm:$0xff] %vm4494, %v4439
      %4516 = vst.msk [vmem:[#allocation4 + $0xa8] sm:$0xff] %vm4494, %v4441
      %4517 = vst.msk [vmem:[#allocation4 + $0xb0] sm:$0xff] %vm4494, %v4443
      %4518 = vst.msk [vmem:[#allocation4 + $0xb8] sm:$0xff] %vm4494, %v4445
      %4519 = vst.msk [vmem:[#allocation4 + $0xc0] sm:$0xff] %vm4494, %v4447
      %4520 = vst.msk [vmem:[#allocation4 + $0xc8] sm:$0xff] %vm4494, %v4449
      %4521 = vst.msk [vmem:[#allocation4 + $0xd0] sm:$0xff] %vm4494, %v4451
      %4522 = vst.msk [vmem:[#allocation4 + $0xd8] sm:$0xff] %vm4494, %v4453
      %4523 = vst.msk [vmem:[#allocation4 + $0xe0] sm:$0xff] %vm4494, %v4455
      %4524 = vst.msk [vmem:[#allocation4 + $0xe8] sm:$0xff] %vm4494, %v4457
      %4525 = vst.msk [vmem:[#allocation4 + $0xf0] sm:$0xff] %vm4494, %v4459
      %4526 = vst.msk [vmem:[#allocation4 + $0xf8] sm:$0xff] %vm4494, %v4461
      %v4527 = vld [vmem:[#allocation4] sm:$0xff]
      %v4528 = vld [vmem:[#allocation4 + $0x8] sm:$0xff]
      %v4529 = vld [vmem:[#allocation4 + $0x10] sm:$0xff]
      %v4530 = vld [vmem:[#allocation4 + $0x18] sm:$0xff]
      %v4531 = vld [vmem:[#allocation4 + $0x20] sm:$0xff]
      %v4532 = vld [vmem:[#allocation4 + $0x28] sm:$0xff]
      %v4533 = vld [vmem:[#allocation4 + $0x30] sm:$0xff]
      %v4534 = vld [vmem:[#allocation4 + $0x38] sm:$0xff]
      %v4535 = vld [vmem:[#allocation4 + $0x40] sm:$0xff]
      %v4536 = vld [vmem:[#allocation4 + $0x48] sm:$0xff]
      %v4537 = vld [vmem:[#allocation4 + $0x50] sm:$0xff]
      %v4538 = vld [vmem:[#allocation4 + $0x58] sm:$0xff]
      %v4539 = vld [vmem:[#allocation4 + $0x60] sm:$0xff]
      %v4540 = vld [vmem:[#allocation4 + $0x68] sm:$0xff]
      %v4541 = vld [vmem:[#allocation4 + $0x70] sm:$0xff]
      %v4542 = vld [vmem:[#allocation4 + $0x78] sm:$0xff]
      %v4543 = vld [vmem:[#allocation4 + $0x80] sm:$0xff]
      %v4544 = vld [vmem:[#allocation4 + $0x88] sm:$0xff]
      %v4545 = vld [vmem:[#allocation4 + $0x90] sm:$0xff]
      %v4546 = vld [vmem:[#allocation4 + $0x98] sm:$0xff]
      %v4547 = vld [vmem:[#allocation4 + $0xa0] sm:$0xff]
      %v4548 = vld [vmem:[#allocation4 + $0xa8] sm:$0xff]
      %v4549 = vld [vmem:[#allocation4 + $0xb0] sm:$0xff]
      %v4550 = vld [vmem:[#allocation4 + $0xb8] sm:$0xff]
      %v4551 = vld [vmem:[#allocation4 + $0xc0] sm:$0xff]
      %v4552 = vld [vmem:[#allocation4 + $0xc8] sm:$0xff]
      %v4553 = vld [vmem:[#allocation4 + $0xd0] sm:$0xff]
      %v4554 = vld [vmem:[#allocation4 + $0xd8] sm:$0xff]
      %v4555 = vld [vmem:[#allocation4 + $0xe0] sm:$0xff]
      %v4556 = vld [vmem:[#allocation4 + $0xe8] sm:$0xff]
      %v4557 = vld [vmem:[#allocation4 + $0xf0] sm:$0xff]
      %v4558 = vld [vmem:[#allocation4 + $0xf8] sm:$0xff]
      %v4559 = vpack.c.bf16 %v4528, %v4527
      %v4560 = vpack.c.bf16 %v4530, %v4529
      %v4561 = vpack.c.bf16 %v4532, %v4531
      %v4562 = vpack.c.bf16 %v4534, %v4533
      %v4563 = vpack.c.bf16 %v4536, %v4535
      %v4564 = vpack.c.bf16 %v4538, %v4537
      %v4565 = vpack.c.bf16 %v4540, %v4539
      %v4566 = vpack.c.bf16 %v4542, %v4541
      %v4567 = vpack.c.bf16 %v4544, %v4543
      %v4568 = vpack.c.bf16 %v4546, %v4545
      %v4569 = vpack.c.bf16 %v4548, %v4547
      %v4570 = vpack.c.bf16 %v4550, %v4549
      %v4571 = vpack.c.bf16 %v4552, %v4551
      %v4572 = vpack.c.bf16 %v4554, %v4553
      %v4573 = vpack.c.bf16 %v4556, %v4555
      %v4574 = vpack.c.bf16 %v4558, %v4557
      %v4575 = vld [vmem:[%s7] sm:$0xf]
      %v4576 = vld [vmem:[%s7 + $0x4] sm:$0xf]
      %v4577 = vld [vmem:[%s7 + $0x8] sm:$0xf]
      %v4578 = vld [vmem:[%s7 + $0xc] sm:$0xf]
      %v4579 = vld [vmem:[%s7 + $0x10] sm:$0xf]
      %v4580 = vld [vmem:[%s7 + $0x14] sm:$0xf]
      %v4581 = vld [vmem:[%s7 + $0x18] sm:$0xf]
      %v4582 = vld [vmem:[%s7 + $0x1c] sm:$0xf]
      %v4583 = vld [vmem:[%s7 + $0x20] sm:$0xf]
      %v4584 = vld [vmem:[%s8] sm:$0x1]
      %v4586 = vlaneseq
      %v4587 = vshrl.u32 %v4586, 7
      %v4588 = vsub.s32 0, %v4587
      %v4589 = vrot.slane %v4584, %v4588
      %v4600 = vunpack.c.l.b16 %v4575
      %v4601 = vunpack.c.l.b16 %v4576
      %v4602 = vunpack.c.l.b16 %v4577
      %v4603 = vunpack.c.l.b16 %v4578
      %v4604 = vunpack.c.l.b16 %v4579
      %v4605 = vunpack.c.l.b16 %v4580
      %v4606 = vunpack.c.l.b16 %v4581
      %v4607 = vunpack.c.l.b16 %v4582
      %v4608 = vunpack.c.l.b16 %v4583
      %v4609 = vpack.c.b16 %v4601, %v4600
      %v4610 = vpack.c.b16 %v4603, %v4602
      %v4611 = vpack.c.b16 %v4605, %v4604
      %v4612 = vpack.c.b16 %v4607, %v4606
      %v4613 = vpack.c.b16 %v4608, %v4608
      %vm4618 = vcmask 588800
      %v4620 = vsel %vm4618, %v4559, 0
      %v4623 = vsel %vm4618, %v4560, 0
      %v4626 = vsel %vm4618, %v4561, 0
      %v4629 = vsel %vm4618, %v4562, 0
      %v4632 = vsel %vm4618, %v4563, 0
      %v4635 = vsel %vm4618, %v4564, 0
      %v4638 = vsel %vm4618, %v4565, 0
      %v4641 = vsel %vm4618, %v4566, 0
      %v4644 = vsel %vm4618, %v4567, 0
      %v4647 = vsel %vm4618, %v4568, 0
      %v4650 = vsel %vm4618, %v4569, 0
      %v4653 = vsel %vm4618, %v4570, 0
      %v4656 = vsel %vm4618, %v4571, 0
      %v4659 = vsel %vm4618, %v4572, 0
      %v4662 = vsel %vm4618, %v4573, 0
      %v4665 = vsel %vm4618, %v4574, 0
      %vm4667 = vcmask 1043456
      %v4669 = vsel %vm4667, %v4613, 0
      %4671 = vmatprep.subr.bf16.mxu0 0
      %4672 = vmatpush1.bf16.msra.mxu0 %v4609
      %4673 = vmatprep.subr.bf16.mxu0 0
      %4674 = vmatpush1.bf16.msra.mxu0 %v4610
      %4675 = vmatprep.subr.bf16.mxu0 0
      %4676 = vmatpush1.bf16.msra.mxu0 %v4611
      %4677 = vmatprep.subr.bf16.mxu0 0
      %4678 = vmatpush1.bf16.msra.mxu0 %v4612
      %4679 = vmatprep.subr.bf16.mxu0 0
      %4680 = vmatpush1.bf16.msra.mxu0 %v4669
      %4681 = vmatprep.subr.bf16.mxu0 0
      %4682 = vmatpush1.bf16.msra.mxu0 0
      %4683 = vmatprep.subr.bf16.mxu0 0
      %4684 = vmatpush1.bf16.msra.mxu0 0
      %4685 = vmatprep.subr.bf16.mxu0 0
      %4686 = vmatpush1.bf16.msra.mxu0 0
      %4687 = vmatprep.subr.bf16.mxu0 0
      %4688 = vmatpush1.bf16.msra.mxu0 0
      %4689 = vmatprep.subr.bf16.mxu0 0
      %4690 = vmatpush1.bf16.msra.mxu0 0
      %4691 = vmatprep.subr.bf16.mxu0 0
      %4692 = vmatpush1.bf16.msra.mxu0 0
      %4693 = vmatprep.subr.bf16.mxu0 0
      %4694 = vmatpush1.bf16.msra.mxu0 0
      %4695 = vmatprep.subr.bf16.mxu0 0
      %4696 = vmatpush1.bf16.msra.mxu0 0
      %4697 = vmatprep.subr.bf16.mxu0 0
      %4698 = vmatpush1.bf16.msra.mxu0 0
      %4699 = vmatprep.subr.bf16.mxu0 0
      %4700 = vmatpush1.bf16.msra.mxu0 0
      %4701 = vmatprep.subr.bf16.mxu0 0
      %4702 = vmatpush1.bf16.msra.mxu0 0
      %4703 = vmatprep.mubr.bf16.mxu0 0
      %4704 = vmatmul.mubr.bf16.gmra.mrb[0].mxu0 %v4620
      %v4705 = vpop.f32.mrb[0].mxu0
      %v4706 = vadd.f32 %v4589, %v4705
      %v4707 = vpop.f32.mrb[0].mxu0
      %v4708 = vpop.f32.mrb[0].mxu0
      %v4709 = vadd.f32 %v4589, %v4708
      %v4710 = vpop.f32.mrb[0].mxu0
      %4711 = vmatprep.mubr.bf16.mxu0 0
      %4712 = vmatmul.mubr.bf16.gmra.mrb[0].mxu0 %v4623
      %v4713 = vpop.f32.mrb[0].mxu0
      %v4714 = vadd.f32 %v4589, %v4713
      %v4715 = vpop.f32.mrb[0].mxu0
      %v4716 = vpop.f32.mrb[0].mxu0
      %v4717 = vadd.f32 %v4589, %v4716
      %v4718 = vpop.f32.mrb[0].mxu0
      %4719 = vmatprep.mubr.bf16.mxu0 0
      %4720 = vmatmul.mubr.bf16.gmra.mrb[0].mxu0 %v4626
      %v4721 = vpop.f32.mrb[0].mxu0
      %v4722 = vadd.f32 %v4589, %v4721
      %v4723 = vpop.f32.mrb[0].mxu0
      %v4724 = vpop.f32.mrb[0].mxu0
      %v4725 = vadd.f32 %v4589, %v4724
      %v4726 = vpop.f32.mrb[0].mxu0
      %4727 = vmatprep.mubr.bf16.mxu0 0
      %4728 = vmatmul.mubr.bf16.gmra.mrb[0].mxu0 %v4629
      %v4729 = vpop.f32.mrb[0].mxu0
      %v4730 = vadd.f32 %v4589, %v4729
      %v4731 = vpop.f32.mrb[0].mxu0
      %v4732 = vpop.f32.mrb[0].mxu0
      %v4733 = vadd.f32 %v4589, %v4732
      %v4734 = vpop.f32.mrb[0].mxu0
      %4735 = vmatprep.mubr.bf16.mxu0 0
      %4736 = vmatmul.mubr.bf16.gmra.mrb[0].mxu0 %v4632
      %v4737 = vpop.f32.mrb[0].mxu0
      %v4738 = vadd.f32 %v4589, %v4737
      %v4739 = vpop.f32.mrb[0].mxu0
      %v4740 = vpop.f32.mrb[0].mxu0
      %v4741 = vadd.f32 %v4589, %v4740
      %v4742 = vpop.f32.mrb[0].mxu0
      %4743 = vmatprep.mubr.bf16.mxu0 0
      %4744 = vmatmul.mubr.bf16.gmra.mrb[0].mxu0 %v4635
      %v4745 = vpop.f32.mrb[0].mxu0
      %v4746 = vadd.f32 %v4589, %v4745
      %v4747 = vpop.f32.mrb[0].mxu0
      %v4748 = vpop.f32.mrb[0].mxu0
      %v4749 = vadd.f32 %v4589, %v4748
      %v4750 = vpop.f32.mrb[0].mxu0
      %4751 = vmatprep.mubr.bf16.mxu0 0
      %4752 = vmatmul.mubr.bf16.gmra.mrb[0].mxu0 %v4638
      %v4753 = vpop.f32.mrb[0].mxu0
      %v4754 = vadd.f32 %v4589, %v4753
      %v4755 = vpop.f32.mrb[0].mxu0
      %v4756 = vpop.f32.mrb[0].mxu0
      %v4757 = vadd.f32 %v4589, %v4756
      %v4758 = vpop.f32.mrb[0].mxu0
      %4759 = vmatprep.mubr.bf16.mxu0 0
      %4760 = vmatmul.mubr.bf16.gmra.mrb[0].mxu0 %v4641
      %v4761 = vpop.f32.mrb[0].mxu0
      %v4762 = vadd.f32 %v4589, %v4761
      %v4763 = vpop.f32.mrb[0].mxu0
      %v4764 = vpop.f32.mrb[0].mxu0
      %v4765 = vadd.f32 %v4589, %v4764
      %v4766 = vpop.f32.mrb[0].mxu0
      %4767 = vmatprep.mubr.bf16.mxu0 0
      %4768 = vmatmul.mubr.bf16.gmra.mrb[0].mxu0 %v4644
      %v4769 = vpop.f32.mrb[0].mxu0
      %v4770 = vadd.f32 %v4589, %v4769
      %v4771 = vpop.f32.mrb[0].mxu0
      %v4772 = vpop.f32.mrb[0].mxu0
      %v4773 = vadd.f32 %v4589, %v4772
      %v4774 = vpop.f32.mrb[0].mxu0
      %4775 = vmatprep.mubr.bf16.mxu0 0
      %4776 = vmatmul.mubr.bf16.gmra.mrb[0].mxu0 %v4647
      %v4777 = vpop.f32.mrb[0].mxu0
      %v4778 = vadd.f32 %v4589, %v4777
      %v4779 = vpop.f32.mrb[0].mxu0
      %v4780 = vpop.f32.mrb[0].mxu0
      %v4781 = vadd.f32 %v4589, %v4780
      %v4782 = vpop.f32.mrb[0].mxu0
      %4783 = vmatprep.mubr.bf16.mxu0 0
      %4784 = vmatmul.mubr.bf16.gmra.mrb[0].mxu0 %v4650
      %v4785 = vpop.f32.mrb[0].mxu0
      %v4786 = vadd.f32 %v4589, %v4785
      %v4787 = vpop.f32.mrb[0].mxu0
      %v4788 = vpop.f32.mrb[0].mxu0
      %v4789 = vadd.f32 %v4589, %v4788
      %v4790 = vpop.f32.mrb[0].mxu0
      %4791 = vmatprep.mubr.bf16.mxu0 0
      %4792 = vmatmul.mubr.bf16.gmra.mrb[0].mxu0 %v4653
      %v4793 = vpop.f32.mrb[0].mxu0
      %v4794 = vadd.f32 %v4589, %v4793
      %v4795 = vpop.f32.mrb[0].mxu0
      %v4796 = vpop.f32.mrb[0].mxu0
      %v4797 = vadd.f32 %v4589, %v4796
      %v4798 = vpop.f32.mrb[0].mxu0
      %4799 = vmatprep.mubr.bf16.mxu0 0
      %4800 = vmatmul.mubr.bf16.gmra.mrb[0].mxu0 %v4656
      %v4801 = vpop.f32.mrb[0].mxu0
      %v4802 = vadd.f32 %v4589, %v4801
      %v4803 = vpop.f32.mrb[0].mxu0
      %v4804 = vpop.f32.mrb[0].mxu0
      %v4805 = vadd.f32 %v4589, %v4804
      %v4806 = vpop.f32.mrb[0].mxu0
      %4807 = vmatprep.mubr.bf16.mxu0 0
      %4808 = vmatmul.mubr.bf16.gmra.mrb[0].mxu0 %v4659
      %v4809 = vpop.f32.mrb[0].mxu0
      %v4810 = vadd.f32 %v4589, %v4809
      %v4811 = vpop.f32.mrb[0].mxu0
      %v4812 = vpop.f32.mrb[0].mxu0
      %v4813 = vadd.f32 %v4589, %v4812
      %v4814 = vpop.f32.mrb[0].mxu0
      %4815 = vmatprep.mubr.bf16.mxu0 0
      %4816 = vmatmul.mubr.bf16.gmra.mrb[0].mxu0 %v4662
      %v4817 = vpop.f32.mrb[0].mxu0
      %v4818 = vadd.f32 %v4589, %v4817
      %v4819 = vpop.f32.mrb[0].mxu0
      %v4820 = vpop.f32.mrb[0].mxu0
      %v4821 = vadd.f32 %v4589, %v4820
      %v4822 = vpop.f32.mrb[0].mxu0
      %4823 = vmatprep.mubr.bf16.mxu0 0
      %4824 = vmatmul.mubr.bf16.gmra.mrb[0].mxu0 %v4665
      %v4825 = vpop.f32.mrb[0].mxu0
      %v4826 = vadd.f32 %v4589, %v4825
      %v4827 = vpop.f32.mrb[0].mxu0
      %v4828 = vpop.f32.mrb[0].mxu0
      %v4829 = vadd.f32 %v4589, %v4828
      %v4830 = vpop.f32.mrb[0].mxu0
      %4831 = vdwg.mxu0
      %4864 = vrot.lane.b32.xlu0 %v4706, 8
      %v4865 = vpop.permute.xlu0 %4864
      %4866 = vrot.lane.b32.xlu0 %v4709, 8
      %v4867 = vpop.permute.xlu0 %4866
      %4868 = vrot.lane.b32.xlu0 %v4714, 8
      %v4869 = vpop.permute.xlu0 %4868
      %4870 = vrot.lane.b32.xlu0 %v4717, 8
      %v4871 = vpop.permute.xlu0 %4870
      %4872 = vrot.lane.b32.xlu0 %v4722, 8
      %v4873 = vpop.permute.xlu0 %4872
      %4874 = vrot.lane.b32.xlu0 %v4725, 8
      %v4875 = vpop.permute.xlu0 %4874
      %4876 = vrot.lane.b32.xlu0 %v4730, 8
      %v4877 = vpop.permute.xlu0 %4876
      %4878 = vrot.lane.b32.xlu0 %v4733, 8
      %v4879 = vpop.permute.xlu0 %4878
      %4880 = vrot.lane.b32.xlu0 %v4738, 8
      %v4881 = vpop.permute.xlu0 %4880
      %4882 = vrot.lane.b32.xlu0 %v4741, 8
      %v4883 = vpop.permute.xlu0 %4882
      %4884 = vrot.lane.b32.xlu0 %v4746, 8
      %v4885 = vpop.permute.xlu0 %4884
      %4886 = vrot.lane.b32.xlu0 %v4749, 8
      %v4887 = vpop.permute.xlu0 %4886
      %4888 = vrot.lane.b32.xlu0 %v4754, 8
      %v4889 = vpop.permute.xlu0 %4888
      %4890 = vrot.lane.b32.xlu0 %v4757, 8
      %v4891 = vpop.permute.xlu0 %4890
      %4892 = vrot.lane.b32.xlu0 %v4762, 8
      %v4893 = vpop.permute.xlu0 %4892
      %4894 = vrot.lane.b32.xlu0 %v4765, 8
      %v4895 = vpop.permute.xlu0 %4894
      %4896 = vrot.lane.b32.xlu0 %v4770, 8
      %v4897 = vpop.permute.xlu0 %4896
      %4898 = vrot.lane.b32.xlu0 %v4773, 8
      %v4899 = vpop.permute.xlu0 %4898
      %4900 = vrot.lane.b32.xlu0 %v4778, 8
      %v4901 = vpop.permute.xlu0 %4900
      %4902 = vrot.lane.b32.xlu0 %v4781, 8
      %v4903 = vpop.permute.xlu0 %4902
      %4904 = vrot.lane.b32.xlu0 %v4786, 8
      %v4905 = vpop.permute.xlu0 %4904
      %4906 = vrot.lane.b32.xlu0 %v4789, 8
      %v4907 = vpop.permute.xlu0 %4906
      %4908 = vrot.lane.b32.xlu0 %v4794, 8
      %v4909 = vpop.permute.xlu0 %4908
      %4910 = vrot.lane.b32.xlu0 %v4797, 8
      %v4911 = vpop.permute.xlu0 %4910
      %4912 = vrot.lane.b32.xlu0 %v4802, 8
      %v4913 = vpop.permute.xlu0 %4912
      %4914 = vrot.lane.b32.xlu0 %v4805, 8
      %v4915 = vpop.permute.xlu0 %4914
      %4916 = vrot.lane.b32.xlu0 %v4810, 8
      %v4917 = vpop.permute.xlu0 %4916
      %4918 = vrot.lane.b32.xlu0 %v4813, 8
      %v4919 = vpop.permute.xlu0 %4918
      %4920 = vrot.lane.b32.xlu0 %v4818, 8
      %v4921 = vpop.permute.xlu0 %4920
      %4922 = vrot.lane.b32.xlu0 %v4821, 8
      %v4923 = vpop.permute.xlu0 %4922
      %4924 = vrot.lane.b32.xlu0 %v4826, 8
      %v4925 = vpop.permute.xlu0 %4924
      %4926 = vrot.lane.b32.xlu0 %v4829, 8
      %v4927 = vpop.permute.xlu0 %4926
      %4960 = vst.msk [vmem:[%s478 + $0x1] sm:$0xff] %vm1104, %v4865
      %4961 = vst.msk [vmem:[%s478 + $0x9] sm:$0xff] %vm1104, %v4867
      %4962 = vst.msk [vmem:[%s478 + $0x19] sm:$0xff] %vm1104, %v4869
      %4963 = vst.msk [vmem:[%s478 + $0x21] sm:$0xff] %vm1104, %v4871
      %4964 = vst.msk [vmem:[%s478 + $0x31] sm:$0xff] %vm1104, %v4873
      %4965 = vst.msk [vmem:[%s478 + $0x39] sm:$0xff] %vm1104, %v4875
      %4966 = vst.msk [vmem:[%s478 + $0x49] sm:$0xff] %vm1104, %v4877
      %4967 = vst.msk [vmem:[%s478 + $0x51] sm:$0xff] %vm1104, %v4879
      %4968 = vst.msk [vmem:[%s478 + $0x61] sm:$0xff] %vm1104, %v4881
      %4969 = vst.msk [vmem:[%s478 + $0x69] sm:$0xff] %vm1104, %v4883
      %4970 = vst.msk [vmem:[%s478 + $0x79] sm:$0xff] %vm1104, %v4885
      %4971 = vst.msk [vmem:[%s478 + $0x81] sm:$0xff] %vm1104, %v4887
      %4972 = vst.msk [vmem:[%s478 + $0x91] sm:$0xff] %vm1104, %v4889
      %4973 = vst.msk [vmem:[%s478 + $0x99] sm:$0xff] %vm1104, %v4891
      %4974 = vst.msk [vmem:[%s478 + $0xa9] sm:$0xff] %vm1104, %v4893
      %4975 = vst.msk [vmem:[%s478 + $0xb1] sm:$0xff] %vm1104, %v4895
      %4976 = vst.msk [vmem:[%s478 + $0xc1] sm:$0xff] %vm1104, %v4897
      %4977 = vst.msk [vmem:[%s478 + $0xc9] sm:$0xff] %vm1104, %v4899
      %4978 = vst.msk [vmem:[%s478 + $0xd9] sm:$0xff] %vm1104, %v4901
      %4979 = vst.msk [vmem:[%s478 + $0xe1] sm:$0xff] %vm1104, %v4903
      %4980 = vst.msk [vmem:[%s478 + $0xf1] sm:$0xff] %vm1104, %v4905
      %4981 = vst.msk [vmem:[%s478 + $0xf9] sm:$0xff] %vm1104, %v4907
      %4982 = vst.msk [vmem:[%s478 + $0x109] sm:$0xff] %vm1104, %v4909
      %4983 = vst.msk [vmem:[%s478 + $0x111] sm:$0xff] %vm1104, %v4911
      %4984 = vst.msk [vmem:[%s478 + $0x121] sm:$0xff] %vm1104, %v4913
      %4985 = vst.msk [vmem:[%s478 + $0x129] sm:$0xff] %vm1104, %v4915
      %4986 = vst.msk [vmem:[%s478 + $0x139] sm:$0xff] %vm1104, %v4917
      %4987 = vst.msk [vmem:[%s478 + $0x141] sm:$0xff] %vm1104, %v4919
      %4988 = vst.msk [vmem:[%s478 + $0x151] sm:$0xff] %vm1104, %v4921
      %4989 = vst.msk [vmem:[%s478 + $0x159] sm:$0xff] %vm1104, %v4923
      %4990 = vst.msk [vmem:[%s478 + $0x169] sm:$0xff] %vm1104, %v4925
      %4991 = vst.msk [vmem:[%s478 + $0x171] sm:$0xff] %vm1104, %v4927
      %v4992 = vld [vmem:[%s478 + $0x1] sm:$0xff]
      %v4993 = vld [vmem:[%s478 + $0x9] sm:$0xff]
      %v4994 = vld [vmem:[%s478 + $0x19] sm:$0xff]
      %v4995 = vld [vmem:[%s478 + $0x21] sm:$0xff]
      %v4996 = vld [vmem:[%s478 + $0x31] sm:$0xff]
      %v4997 = vld [vmem:[%s478 + $0x39] sm:$0xff]
      %v4998 = vld [vmem:[%s478 + $0x49] sm:$0xff]
      %v4999 = vld [vmem:[%s478 + $0x51] sm:$0xff]
      %v5000 = vld [vmem:[%s478 + $0x61] sm:$0xff]
      %v5001 = vld [vmem:[%s478 + $0x69] sm:$0xff]
      %v5002 = vld [vmem:[%s478 + $0x79] sm:$0xff]
      %v5003 = vld [vmem:[%s478 + $0x81] sm:$0xff]
      %v5004 = vld [vmem:[%s478 + $0x91] sm:$0xff]
      %v5005 = vld [vmem:[%s478 + $0x99] sm:$0xff]
      %v5006 = vld [vmem:[%s478 + $0xa9] sm:$0xff]
      %v5007 = vld [vmem:[%s478 + $0xb1] sm:$0xff]
      %v5008 = vld [vmem:[%s478 + $0xc1] sm:$0xff]
      %v5009 = vld [vmem:[%s478 + $0xc9] sm:$0xff]
      %v5010 = vld [vmem:[%s478 + $0xd9] sm:$0xff]
      %v5011 = vld [vmem:[%s478 + $0xe1] sm:$0xff]
      %v5012 = vld [vmem:[%s478 + $0xf1] sm:$0xff]
      %v5013 = vld [vmem:[%s478 + $0xf9] sm:$0xff]
      %v5014 = vld [vmem:[%s478 + $0x109] sm:$0xff]
      %v5015 = vld [vmem:[%s478 + $0x111] sm:$0xff]
      %v5016 = vld [vmem:[%s478 + $0x121] sm:$0xff]
      %v5017 = vld [vmem:[%s478 + $0x129] sm:$0xff]
      %v5018 = vld [vmem:[%s478 + $0x139] sm:$0xff]
      %v5019 = vld [vmem:[%s478 + $0x141] sm:$0xff]
      %v5020 = vld [vmem:[%s478 + $0x151] sm:$0xff]
      %v5021 = vld [vmem:[%s478 + $0x159] sm:$0xff]
      %v5022 = vld [vmem:[%s478 + $0x169] sm:$0xff]
      %v5023 = vld [vmem:[%s478 + $0x171] sm:$0xff]
      %5024 = vst.msk [vmem:[%s332] sm:$0xff] %vm334, %v4992
      %5025 = vst.msk [vmem:[%s332 + $0x8] sm:$0xff] %vm334, %v4993
      %5026 = vst.msk [vmem:[%s332 + $0x10] sm:$0xff] %vm334, %v4994
      %5027 = vst.msk [vmem:[%s332 + $0x18] sm:$0xff] %vm334, %v4995
      %5028 = vst.msk [vmem:[%s332 + $0x20] sm:$0xff] %vm334, %v4996
      %5029 = vst.msk [vmem:[%s332 + $0x28] sm:$0xff] %vm334, %v4997
      %5030 = vst.msk [vmem:[%s332 + $0x30] sm:$0xff] %vm334, %v4998
      %5031 = vst.msk [vmem:[%s332 + $0x38] sm:$0xff] %vm334, %v4999
      %5032 = vst.msk [vmem:[%s332 + $0x40] sm:$0xff] %vm334, %v5000
      %5033 = vst.msk [vmem:[%s332 + $0x48] sm:$0xff] %vm334, %v5001
      %5034 = vst.msk [vmem:[%s332 + $0x50] sm:$0xff] %vm334, %v5002
      %5035 = vst.msk [vmem:[%s332 + $0x58] sm:$0xff] %vm334, %v5003
      %5036 = vst.msk [vmem:[%s332 + $0x60] sm:$0xff] %vm334, %v5004
      %5037 = vst.msk [vmem:[%s332 + $0x68] sm:$0xff] %vm334, %v5005
      %5038 = vst.msk [vmem:[%s332 + $0x70] sm:$0xff] %vm334, %v5006
      %5039 = vst.msk [vmem:[%s332 + $0x78] sm:$0xff] %vm334, %v5007
      %5040 = vst.msk [vmem:[%s332 + $0x80] sm:$0xff] %vm334, %v5008
      %5041 = vst.msk [vmem:[%s332 + $0x88] sm:$0xff] %vm334, %v5009
      %5042 = vst.msk [vmem:[%s332 + $0x90] sm:$0xff] %vm334, %v5010
      %5043 = vst.msk [vmem:[%s332 + $0x98] sm:$0xff] %vm334, %v5011
      %5044 = vst.msk [vmem:[%s332 + $0xa0] sm:$0xff] %vm334, %v5012
      %5045 = vst.msk [vmem:[%s332 + $0xa8] sm:$0xff] %vm334, %v5013
      %5046 = vst.msk [vmem:[%s332 + $0xb0] sm:$0xff] %vm334, %v5014
      %5047 = vst.msk [vmem:[%s332 + $0xb8] sm:$0xff] %vm334, %v5015
      %5048 = vst.msk [vmem:[%s332 + $0xc0] sm:$0xff] %vm334, %v5016
      %5049 = vst.msk [vmem:[%s332 + $0xc8] sm:$0xff] %vm334, %v5017
      %5050 = vst.msk [vmem:[%s332 + $0xd0] sm:$0xff] %vm334, %v5018
      %5051 = vst.msk [vmem:[%s332 + $0xd8] sm:$0xff] %vm334, %v5019
      %5052 = vst.msk [vmem:[%s332 + $0xe0] sm:$0xff] %vm334, %v5020
      %5053 = vst.msk [vmem:[%s332 + $0xe8] sm:$0xff] %vm334, %v5021
      %5054 = vst.msk [vmem:[%s332 + $0xf0] sm:$0xff] %vm334, %v5022
      %5055 = vst.msk [vmem:[%s332 + $0xf8] sm:$0xff] %vm334, %v5023
      %p5056 = scmp.lt.s32.totalorder %s20, 1
      %s5057 = scalar_select %p5056, %s20, 1
      %s5058 = smul.addr %s5057, 32
      %s5059 = smul.addr %s5058, 8
      %s5060 = scalar_lea.vmem %s9, %s5059
      // Predicated region
      $region57: #{tpu_custom_call.1} parent=55 // pred_check
        %p5061 = pneg %p232
      $region58: #{tpu_custom_call.1} parent=55 // pred_check_branch
        %5063 = sbr.rel (%p5061) target = $region60
      $region59: #{tpu_custom_call.1} parent=55 // pred_region
        _
      $region60: #{tpu_custom_call.1} parent=55 // pred_fallthru
        _
    $region56: #{tpu_custom_call.1} parent=5 // pred_fallthru
      _
    %p5064 = scmp.le.s32.totalorder 2, %s15
    // Predicated region
    $region61: #{tpu_custom_call.1} parent=5 // pred_check
      %p5065 = pneg %p5064
    $region62: #{tpu_custom_call.1} parent=5 // pred_check_branch
      %5067 = sbr.rel (%p5065) target = $region64
    $region63: #{tpu_custom_call.1} parent=5 // pred_region
      %s5068 = ssub.s32 %s15, 2
      // Predicated region
      $region65: #{tpu_custom_call.1} parent=63 // pred_check
        %p5069 = pneg %p238
      $region66: #{tpu_custom_call.1} parent=63 // pred_check_branch
        %5071 = sbr.rel (%p5069) target = $region68
      $region67: #{tpu_custom_call.1} parent=63 // pred_region
        %p5072 = scmp.lt.s32.totalorder %s21, 1
        %s5073 = scalar_select %p5072, %s21, 1
        %s5074 = smul.addr %s5073, 32
        %s5075 = smul.addr %s5074, 8
        %s5076 = scalar_lea.vmem %s9, %s5075
      $region68: #{tpu_custom_call.1} parent=63 // pred_fallthru
        _
    $region64: #{tpu_custom_call.1} parent=5 // pred_fallthru
      _
  $region6: #{tpu_custom_call.1} parent=0 // loop_footer
    %s19 = sadd.s32 1, %s15
  $region7: #{tpu_custom_call.1} parent=0 // loop_footer_branch
    %14 = sbr.rel target = $region3
  $region8: #{tpu_custom_call.1} parent=0 // loop_exit
    _

</llo_original>
